<compile_context>
chip_gen: v7x
topology: tpu7x:2x2x1
jax: 0.10.0
libtpu: 0.0.40
codegen_flags: <defaults>
</compile_context>

<pallas_src>
import functools

import jax
import jax.numpy as jnp
from jax import lax
from jax.experimental import pallas as pl
from jax.experimental.pallas import tpu as pltpu

EPS = 1e-5


def _round_up(x, m):
    return ((x + m - 1) // m) * m


# ----------------------------------------------------------------------------
# Fused DoubleRes kernel
# ----------------------------------------------------------------------------
def _make_double_res_kernel(*, stride, has_down, H1, W1, cin_p, c_p, hp2):
    """Returns a kernel computing both BasicBlocks for one image.

    Ref order: x, w1, b1, w2, b2, [wd, bd], w3, b3, w4, b4, out, h1, r1, h2.
    Weights are bf16 with channels padded to (cin_p, c_p); biases are f32.
    """
    P2 = H1 * W1

    def kernel(*refs):
        x_ref, w1_ref, b1_ref, w2_ref, b2_ref = refs[:5]
        idx = 5
        if has_down:
            wd_ref, bd_ref = refs[5], refs[6]
            idx = 7
        w3_ref, b3_ref, w4_ref, b4_ref = refs[idx:idx + 4]
        out_ref = refs[idx + 4]
        h1_ref, r1_ref, h2_ref = refs[idx + 5:idx + 8]

        # Halo-padded scratch buffers: the border ring must be zero (conv pad=1).
        h1_ref[...] = jnp.zeros_like(h1_ref)
        r1_ref[...] = jnp.zeros_like(r1_ref)
        h2_ref[...] = jnp.zeros_like(h2_ref)

        def conv3x3_s1(src_ref, w_ref):
            """3x3 / stride-1 conv over a halo-padded VMEM scratch.

            Builds the (P2, 9*c_p) lane-dense LHS from 9 shifted VMEM slices and
            does ONE bf16 MXU matmul with f32 accumulation.
            (At the test shapes every reshape here is tile-exact; for generic
            widths Mosaic relayouts, which stays correct.)
            """
            cols = []
            for ky in range(3):
                for kx in range(3):
                    t = src_ref[ky:ky + H1, kx:kx + W1, :]
                    cols.append(t.reshape(P2, c_p).astype(jnp.bfloat16))
            taps = jnp.concatenate(cols, axis=-1)                 # (P2, 9*c_p)
            return jnp.dot(taps, w_ref[...], preferred_element_type=jnp.float32)

        # ---- block 1, conv1 (stride s) directly from the HBM-delivered tile ----
        if stride == 2:
            # x_ref holds 4 spatial phases of the padded image, stacked on rows:
            # phase p=(ey*2+ex) occupies rows [p*hp2, (p+1)*hp2) and equals
            # xp[ey::2, ex::2].  Tap (ky,kx) of a stride-2 conv is then a plain
            # contiguous slice of phase (ky%2, kx%2).
            def x_tap(ky, kx):
                ph = (ky % 2) * 2 + (kx % 2)
                r0 = ph * hp2 + ky // 2
                return x_ref[0, r0:r0 + H1, kx // 2:kx // 2 + W1, :]
            sc_x = x_ref[0, 3 * hp2:3 * hp2 + H1, 0:W1, :]        # x[2i, 2j]
        else:
            def x_tap(ky, kx):
                return x_ref[0, ky:ky + H1, kx:kx + W1, :]
            sc_x = x_ref[0, 1:1 + H1, 1:1 + W1, :]                # x itself

        taps1 = jnp.concatenate(
            [x_tap(ky, kx).reshape(P2, cin_p).astype(jnp.bfloat16)
             for ky in range(3) for kx in range(3)], axis=-1)     # (P2, 9*cin_p)
        h1 = jnp.dot(taps1, w1_ref[...], preferred_element_type=jnp.float32)
        h1 = jnp.maximum(h1 + b1_ref[...], 0.0)
        h1_ref[1:1 + H1, 1:1 + W1, :] = h1.reshape(H1, W1, c_p)

        # ---- block 1, conv2 + shortcut + ReLU ----
        y1 = conv3x3_s1(h1_ref, w2_ref) + b2_ref[...]
        if has_down:
            sc = jnp.dot(sc_x.reshape(P2, cin_p).astype(jnp.bfloat16), wd_ref[...],
                         preferred_element_type=jnp.float32) + bd_ref[...]
        else:
            sc = sc_x.reshape(P2, c_p).astype(jnp.float32)
        r1 = jnp.maximum(y1 + sc, 0.0)
        r1_ref[1:1 + H1, 1:1 + W1, :] = r1.reshape(H1, W1, c_p)

        # ---- block 2, conv1 + ReLU ----
        h2 = jnp.maximum(conv3x3_s1(r1_ref, w3_ref) + b3_ref[...], 0.0)
        h2_ref[1:1 + H1, 1:1 + W1, :] = h2.reshape(H1, W1, c_p)

        # ---- block 2, conv2 + identity shortcut + ReLU ----
        y2 = conv3x3_s1(h2_ref, w4_ref) + b4_ref[...]
        out_ref[0] = jnp.maximum(y2 + r1, 0.0)

    return kernel


# ----------------------------------------------------------------------------
# Wrapper: BN folding, channel padding, phase decomposition, pallas_call
# ----------------------------------------------------------------------------
def fold_bn(w_hwio, gamma, beta, mean, var):
    """Fold eval-mode BN into conv weight/bias (kept in f32)."""
    scale = gamma / jnp.sqrt(var + EPS)
    return w_hwio * scale[None, None, None, :], beta - mean * scale


def _prep3x3(w_f32, b_f32, cin, cout, cin_p, cout_p):
    """Zero-pad channels to lane-dense widths, flatten taps, cast weight to bf16."""
    w = jnp.zeros((3, 3, cin_p, cout_p), jnp.float32).at[:, :, :cin, :cout].set(w_f32)
    w = w.reshape(9 * cin_p, cout_p).astype(jnp.bfloat16)
    b = jnp.zeros((1, cout_p), jnp.float32).at[0, :cout].set(b_f32)
    return w, b


def _prep1x1(w_f32, b_f32, cin, cout, cin_p, cout_p):
    w = jnp.zeros((cin_p, cout_p), jnp.float32).at[:cin, :cout].set(w_f32[0, 0])
    b = jnp.zeros((1, cout_p), jnp.float32).at[0, :cout].set(b_f32)
    return w.astype(jnp.bfloat16), b


@functools.partial(jax.jit, static_argnames=("stride",))
def double_res_forward(x_nchw, params, stride):
    if stride not in (1, 2):
        raise NotImplementedError("BasicBlock stride must be 1 or 2")
    N, cin, H, W = x_nchw.shape
    p1, p2 = params["res1"], params["res2"]
    cout = p1["w1"].shape[3]                       # planes
    cin_p = _round_up(cin, 128)                    # lane-dense channel widths
    c_p = _round_up(cout, 128)
    has_down = (stride != 1) or (cin != cout)
    H1 = (H - 1) // stride + 1
    W1 = (W - 1) // stride + 1
    P2 = H1 * W1

    # ---- activations: NCHW -> NHWC, spatial pad 1, channel pad, bf16 ----
    x = jnp.transpose(x_nchw, (0, 2, 3, 1))
    xp = jnp.pad(x, ((0, 0), (1, 1), (1, 1), (0, cin_p - cin)))
    if stride == 2:
        Hp, Wp = H + 2, W + 2
        Hpe, Wpe = _round_up(Hp, 2), _round_up(Wp, 2)
        xp = jnp.pad(xp, ((0, 0), (0, Hpe - Hp), (0, Wpe - Wp), (0, 0)))
        hp2, wp2 = Hpe // 2, Wpe // 2
        # 4-phase decomposition (same total bytes as xp; no im2col duplication).
        x_in = jnp.concatenate(
            [xp[:, ey::2, ex::2, :] for ey in (0, 1) for ex in (0, 1)], axis=1)
        x_in = x_in.astype(jnp.bfloat16)            # (N, 4*hp2, wp2, cin_p)
        x_spec = pl.BlockSpec((1, 4 * hp2, wp2, cin_p), lambda n: (n, 0, 0, 0))
    else:
        hp2 = 0
        x_in = xp.astype(jnp.bfloat16)              # (N, H+2, W+2, cin_p)
        x_spec = pl.BlockSpec((1, H + 2, W + 2, cin_p), lambda n: (n, 0, 0, 0))

    # ---- weights: fold BN (f32), pad channels, flatten taps, cast to bf16 ----
    w1, b1 = _prep3x3(*fold_bn(p1["w1"], p1["g1"], p1["beta1"], p1["m1"], p1["v1"]),
                      cin, cout, cin_p, c_p)
    w2, b2 = _prep3x3(*fold_bn(p1["w2"], p1["g2"], p1["beta2"], p1["m2"], p1["v2"]),
                      cout, cout, c_p, c_p)
    w3, b3 = _prep3x3(*fold_bn(p2["w1"], p2["g1"], p2["beta1"], p2["m1"], p2["v1"]),
                      cout, cout, c_p, c_p)
    w4, b4 = _prep3x3(*fold_bn(p2["w2"], p2["g2"], p2["beta2"], p2["m2"], p2["v2"]),
                      cout, cout, c_p, c_p)

    def mat_spec(rows):
        return pl.BlockSpec((rows, c_p), lambda n: (0, 0))

    bias_spec = pl.BlockSpec((1, c_p), lambda n: (0, 0))

    args = [x_in, w1, b1, w2, b2]
    in_specs = [x_spec, mat_spec(9 * cin_p), bias_spec, mat_spec(9 * c_p), bias_spec]
    if has_down:
        wd, bd = _prep1x1(*fold_bn(p1["wd"], p1["gd"], p1["betad"], p1["md"], p1["vd"]),
                          cin, cout, cin_p, c_p)
        args += [wd, bd]
        in_specs += [mat_spec(cin_p), bias_spec]
    args += [w3, b3, w4, b4]
    in_specs += [mat_spec(9 * c_p), bias_spec, mat_spec(9 * c_p), bias_spec]

    kernel = _make_double_res_kernel(stride=stride, has_down=has_down,
                                     H1=H1, W1=W1, cin_p=cin_p, c_p=c_p, hp2=hp2)

    out = pl.pallas_call(
        kernel,
        out_shape=jax.ShapeDtypeStruct((N, P2, c_p), jnp.float32),
        grid=(N,),
        in_specs=in_specs,
        out_specs=pl.BlockSpec((1, P2, c_p), lambda n: (n, 0, 0)),  # lane-dense output
        scratch_shapes=[pltpu.VMEM((H1 + 2, W1 + 2, c_p), jnp.float32)
                        for _ in range(3)],
        compiler_params=pltpu.CompilerParams(dimension_semantics=("parallel",)),
    )(*args)

    out = out.reshape(N, H1, W1, c_p)[..., :cout]
    return jnp.transpose(out, (0, 3, 1, 2))          # NHWC -> NCHW


# ----------------------------------------------------------------------------
# Deterministic parameter init (synthetic, matches BasicBlock shapes)
# ----------------------------------------------------------------------------
def init_block_params(key, cin, cout, stride):
    ks = jax.random.split(key, 16)

    def bn(k0, k1, k2, k3, c):
        return (
            1.0 + 0.1 * jax.random.normal(k0, (c,), jnp.float32),     # gamma
            0.1 * jax.random.normal(k1, (c,), jnp.float32),           # beta
            0.1 * jax.random.normal(k2, (c,), jnp.float32),           # running_mean
            jax.random.uniform(k3, (c,), jnp.float32, 0.5, 1.5),      # running_var
        )

    p = {}
    p["w1"] = 0.1 * jax.random.normal(ks[0], (3, 3, cin, cout), jnp.float32)
    p["g1"], p["beta1"], p["m1"], p["v1"] = bn(ks[1], ks[2], ks[3], ks[4], cout)
    p["w2"] = 0.1 * jax.random.normal(ks[5], (3, 3, cout, cout), jnp.float32)
    p["g2"], p["beta2"], p["m2"], p["v2"] = bn(ks[6], ks[7], ks[8], ks[9], cout)
    if stride != 1 or cin != cout:
        p["wd"] = 0.1 * jax.random.normal(ks[10], (1, 1, cin, cout), jnp.float32)
        p["gd"], p["betad"], p["md"], p["vd"] = bn(ks[11], ks[12], ks[13], ks[14], cout)
    return p


# ----------------------------------------------------------------------------
# Pure-JAX f32 reference (for correctness check)
# ----------------------------------------------------------------------------
def _conv_ref(x, w, stride):
    return lax.conv_general_dilated(
        x, w, window_strides=(stride, stride),
        padding=((1, 1), (1, 1)) if w.shape[0] == 3 else ((0, 0), (0, 0)),
        dimension_numbers=("NHWC", "HWIO", "NHWC"),
    )


def _bn_ref(x, g, b, m, v):
    return (x - m) / jnp.sqrt(v + EPS) * g + b


def _block_ref(x, p, stride):
    cin, cout = p["w1"].shape[2], p["w1"].shape[3]
    h = jnp.maximum(_bn_ref(_conv_ref(x, p["w1"], stride),
                            p["g1"], p["beta1"], p["m1"], p["v1"]), 0.0)
    h2 = _bn_ref(_conv_ref(h, p["w2"], 1), p["g2"], p["beta2"], p["m2"], p["v2"])
    if stride != 1 or cin != cout:
        sc = _bn_ref(_conv_ref(x, p["wd"], stride), p["gd"], p["betad"], p["md"], p["vd"])
    else:
        sc = x
    return jnp.maximum(h2 + sc, 0.0)


def double_res_ref(x_nchw, params, stride):
    x = jnp.transpose(x_nchw, (0, 2, 3, 1))
    out = _block_ref(x, params["res1"], stride)
    out = _block_ref(out, params["res2"], 1)
    return jnp.transpose(out, (0, 3, 1, 2))


# ----------------------------------------------------------------------------
if __name__ == "__main__":
    key = jax.random.PRNGKey(0)
    kx, k1, k2 = jax.random.split(key, 3)

    N, inplanes, planes, H, W, stride = 2, 4, 8, 16, 16, 2
    x = jax.random.normal(kx, (N, inplanes, H, W), jnp.float32)  # NCHW like PyTorch

    params = {
        "res1": init_block_params(k1, inplanes, planes, stride),
        "res2": init_block_params(k2, planes, planes, 1),
    }

    out = double_res_forward(x, params, stride)
    out = jax.block_until_ready(out)

    ref = double_res_ref(x, params, stride)
    assert out.shape == (N, planes, H // stride, W // stride), out.shape
    # The kernel quantizes activations/weights to bf16 for the MXU (f32
    # accumulation, f32 bias/residual adds); tolerance is sized for bf16 input
    # rounding vs. the exact f32 reference.
    assert jnp.allclose(out, ref, atol=3e-2, rtol=3e-2), float(jnp.max(jnp.abs(out - ref)))

    print("KERNEL_OK")
</pallas_src>

<mosaic_0001>
module attributes {stable_mosaic.version = 11 : i64} {
  func.func @kernel(%arg0: i32, %arg1: memref<1x36x9x128xbf16, #tpu.memory_space<vmem>>, %arg2: memref<1152x128xbf16, #tpu.memory_space<vmem>>, %arg3: memref<1x128xf32, #tpu.memory_space<vmem>>, %arg4: memref<1152x128xbf16, #tpu.memory_space<vmem>>, %arg5: memref<1x128xf32, #tpu.memory_space<vmem>>, %arg6: memref<128x128xbf16, #tpu.memory_space<vmem>>, %arg7: memref<1x128xf32, #tpu.memory_space<vmem>>, %arg8: memref<1152x128xbf16, #tpu.memory_space<vmem>>, %arg9: memref<1x128xf32, #tpu.memory_space<vmem>>, %arg10: memref<1152x128xbf16, #tpu.memory_space<vmem>>, %arg11: memref<1x128xf32, #tpu.memory_space<vmem>>, %arg12: memref<1x64x128xf32, #tpu.memory_space<vmem>>, %arg13: memref<10x10x128xf32, #tpu.memory_space<vmem>>, %arg14: memref<10x10x128xf32, #tpu.memory_space<vmem>>, %arg15: memref<10x10x128xf32, #tpu.memory_space<vmem>>) attributes {dimension_semantics = [#tpu.dimension_semantics<parallel>], iteration_bounds = array<i64: 2>, scalar_prefetch = 0 : i64, scratch_operands = 3 : i64, tpu.core_type = #tpu.core_type<tc>, window_params = [{transform_indices = @transform_0, window_bounds = array<i64: 1, 36, 9, 128>}, {pipeline_mode = #tpu.pipeline_mode<synchronous>, transform_indices = @transform_1, window_bounds = array<i64: 1152, 128>}, {pipeline_mode = #tpu.pipeline_mode<synchronous>, transform_indices = @transform_2, window_bounds = array<i64: 1, 128>}, {pipeline_mode = #tpu.pipeline_mode<synchronous>, transform_indices = @transform_3, window_bounds = array<i64: 1152, 128>}, {pipeline_mode = #tpu.pipeline_mode<synchronous>, transform_indices = @transform_4, window_bounds = array<i64: 1, 128>}, {pipeline_mode = #tpu.pipeline_mode<synchronous>, transform_indices = @transform_5, window_bounds = array<i64: 128, 128>}, {pipeline_mode = #tpu.pipeline_mode<synchronous>, transform_indices = @transform_6, window_bounds = array<i64: 1, 128>}, {pipeline_mode = #tpu.pipeline_mode<synchronous>, transform_indices = @transform_7, window_bounds = array<i64: 1152, 128>}, {pipeline_mode = #tpu.pipeline_mode<synchronous>, transform_indices = @transform_8, window_bounds = array<i64: 1, 128>}, {pipeline_mode = #tpu.pipeline_mode<synchronous>, transform_indices = @transform_9, window_bounds = array<i64: 1152, 128>}, {pipeline_mode = #tpu.pipeline_mode<synchronous>, transform_indices = @transform_10, window_bounds = array<i64: 1, 128>}, {transform_indices = @transform_11, window_bounds = array<i64: 1, 64, 128>}]} {
    %cst = arith.constant 0.000000e+00 : f32
    %0 = vector.broadcast %cst : f32 to vector<10x10x128xf32>
    %c0 = arith.constant 0 : index
    %c0_0 = arith.constant 0 : index
    %c0_1 = arith.constant 0 : index
    %1 = vector.load %arg13[%c0, %c0_0, %c0_1] : memref<10x10x128xf32, #tpu.memory_space<vmem>>, vector<10x10x128xf32>
    tpu.vector_store %arg13[%c0, %c0_0, %c0_1], %0 {strides = array<i32>} : memref<10x10x128xf32, #tpu.memory_space<vmem>>, vector<10x10x128xf32>,
    %cst_2 = arith.constant 0.000000e+00 : f32
    %2 = vector.broadcast %cst_2 : f32 to vector<10x10x128xf32>
    %c0_3 = arith.constant 0 : index
    %c0_4 = arith.constant 0 : index
    %c0_5 = arith.constant 0 : index
    %3 = vector.load %arg14[%c0_3, %c0_4, %c0_5] : memref<10x10x128xf32, #tpu.memory_space<vmem>>, vector<10x10x128xf32>
    tpu.vector_store %arg14[%c0_3, %c0_4, %c0_5], %2 {strides = array<i32>} : memref<10x10x128xf32, #tpu.memory_space<vmem>>, vector<10x10x128xf32>,
    %cst_6 = arith.constant 0.000000e+00 : f32
    %4 = vector.broadcast %cst_6 : f32 to vector<10x10x128xf32>
    %c0_7 = arith.constant 0 : index
    %c0_8 = arith.constant 0 : index
    %c0_9 = arith.constant 0 : index
    %5 = vector.load %arg15[%c0_7, %c0_8, %c0_9] : memref<10x10x128xf32, #tpu.memory_space<vmem>>, vector<10x10x128xf32>
    tpu.vector_store %arg15[%c0_7, %c0_8, %c0_9], %4 {strides = array<i32>} : memref<10x10x128xf32, #tpu.memory_space<vmem>>, vector<10x10x128xf32>,
    %c0_10 = arith.constant 0 : index
    %c27 = arith.constant 27 : index
    %c0_11 = arith.constant 0 : index
    %c0_12 = arith.constant 0 : index
    %6 = vector.load %arg1[%c0_10, %c27, %c0_11, %c0_12] : memref<1x36x9x128xbf16, #tpu.memory_space<vmem>>, vector<1x8x8x128xbf16>
    %7 = vector.shape_cast %6 : vector<1x8x8x128xbf16> to vector<8x8x128xbf16>
    %c0_13 = arith.constant 0 : index
    %c0_14 = arith.constant 0 : index
    %c0_15 = arith.constant 0 : index
    %c0_16 = arith.constant 0 : index
    %8 = vector.load %arg1[%c0_13, %c0_14, %c0_15, %c0_16] : memref<1x36x9x128xbf16, #tpu.memory_space<vmem>>, vector<1x8x8x128xbf16>
    %9 = vector.shape_cast %8 : vector<1x8x8x128xbf16> to vector<8x8x128xbf16>
    %10 = vector.shape_cast %9 : vector<8x8x128xbf16> to vector<64x128xbf16>
    %c0_17 = arith.constant 0 : index
    %c9 = arith.constant 9 : index
    %c0_18 = arith.constant 0 : index
    %c0_19 = arith.constant 0 : index
    %11 = vector.load %arg1[%c0_17, %c9, %c0_18, %c0_19] : memref<1x36x9x128xbf16, #tpu.memory_space<vmem>>, vector<1x8x8x128xbf16>
    %12 = vector.shape_cast %11 : vector<1x8x8x128xbf16> to vector<8x8x128xbf16>
    %13 = vector.shape_cast %12 : vector<8x8x128xbf16> to vector<64x128xbf16>
    %c0_20 = arith.constant 0 : index
    %c0_21 = arith.constant 0 : index
    %c1 = arith.constant 1 : index
    %c0_22 = arith.constant 0 : index
    %14 = vector.load %arg1[%c0_20, %c0_21, %c1, %c0_22] : memref<1x36x9x128xbf16, #tpu.memory_space<vmem>>, vector<1x8x8x128xbf16>
    %15 = vector.shape_cast %14 : vector<1x8x8x128xbf16> to vector<8x8x128xbf16>
    %16 = vector.shape_cast %15 : vector<8x8x128xbf16> to vector<64x128xbf16>
    %c0_23 = arith.constant 0 : index
    %c18 = arith.constant 18 : index
    %c0_24 = arith.constant 0 : index
    %c0_25 = arith.constant 0 : index
    %17 = vector.load %arg1[%c0_23, %c18, %c0_24, %c0_25] : memref<1x36x9x128xbf16, #tpu.memory_space<vmem>>, vector<1x8x8x128xbf16>
    %18 = vector.shape_cast %17 : vector<1x8x8x128xbf16> to vector<8x8x128xbf16>
    %19 = vector.shape_cast %18 : vector<8x8x128xbf16> to vector<64x128xbf16>
    %c0_26 = arith.constant 0 : index
    %c27_27 = arith.constant 27 : index
    %c0_28 = arith.constant 0 : index
    %c0_29 = arith.constant 0 : index
    %20 = vector.load %arg1[%c0_26, %c27_27, %c0_28, %c0_29] : memref<1x36x9x128xbf16, #tpu.memory_space<vmem>>, vector<1x8x8x128xbf16>
    %21 = vector.shape_cast %20 : vector<1x8x8x128xbf16> to vector<8x8x128xbf16>
    %22 = vector.shape_cast %21 : vector<8x8x128xbf16> to vector<64x128xbf16>
    %c0_30 = arith.constant 0 : index
    %c18_31 = arith.constant 18 : index
    %c1_32 = arith.constant 1 : index
    %c0_33 = arith.constant 0 : index
    %23 = vector.load %arg1[%c0_30, %c18_31, %c1_32, %c0_33] : memref<1x36x9x128xbf16, #tpu.memory_space<vmem>>, vector<1x8x8x128xbf16>
    %24 = vector.shape_cast %23 : vector<1x8x8x128xbf16> to vector<8x8x128xbf16>
    %25 = vector.shape_cast %24 : vector<8x8x128xbf16> to vector<64x128xbf16>
    %c0_34 = arith.constant 0 : index
    %c1_35 = arith.constant 1 : index
    %c0_36 = arith.constant 0 : index
    %c0_37 = arith.constant 0 : index
    %26 = vector.load %arg1[%c0_34, %c1_35, %c0_36, %c0_37] : memref<1x36x9x128xbf16, #tpu.memory_space<vmem>>, vector<1x8x8x128xbf16>
    %27 = vector.shape_cast %26 : vector<1x8x8x128xbf16> to vector<8x8x128xbf16>
    %28 = vector.shape_cast %27 : vector<8x8x128xbf16> to vector<64x128xbf16>
    %c0_38 = arith.constant 0 : index
    %c10 = arith.constant 10 : index
    %c0_39 = arith.constant 0 : index
    %c0_40 = arith.constant 0 : index
    %29 = vector.load %arg1[%c0_38, %c10, %c0_39, %c0_40] : memref<1x36x9x128xbf16, #tpu.memory_space<vmem>>, vector<1x8x8x128xbf16>
    %30 = vector.shape_cast %29 : vector<1x8x8x128xbf16> to vector<8x8x128xbf16>
    %31 = vector.shape_cast %30 : vector<8x8x128xbf16> to vector<64x128xbf16>
    %c0_41 = arith.constant 0 : index
    %c1_42 = arith.constant 1 : index
    %c1_43 = arith.constant 1 : index
    %c0_44 = arith.constant 0 : index
    %32 = vector.load %arg1[%c0_41, %c1_42, %c1_43, %c0_44] : memref<1x36x9x128xbf16, #tpu.memory_space<vmem>>, vector<1x8x8x128xbf16>
    %33 = vector.shape_cast %32 : vector<1x8x8x128xbf16> to vector<8x8x128xbf16>
    %34 = vector.shape_cast %33 : vector<8x8x128xbf16> to vector<64x128xbf16>
    %35 = tpu.concatenate %10, %13, %16, %19, %22, %25, %28, %31, %34 in 1 : vector<64x128xbf16>, vector<64x128xbf16>, vector<64x128xbf16>, vector<64x128xbf16>, vector<64x128xbf16>, vector<64x128xbf16>, vector<64x128xbf16>, vector<64x128xbf16>, vector<64x128xbf16> -> vector<64x1152xbf16>
    %c0_45 = arith.constant 0 : index
    %c0_46 = arith.constant 0 : index
    %36 = vector.load %arg2[%c0_45, %c0_46] : memref<1152x128xbf16, #tpu.memory_space<vmem>>, vector<1152x128xbf16>
    %cst_47 = arith.constant dense<0.000000e+00> : vector<64x128xf32>
    %37 = tpu.matmul %35, %36, %cst_47 {dimension_numbers = #tpu.dot_dimension_numbers<[1], [0], [0], [1], [0, 0, 1, 1], [], []>} : vector<64x1152xbf16>, vector<1152x128xbf16>, vector<64x128xf32> -> vector<64x128xf32>
    %c0_48 = arith.constant 0 : index
    %c0_49 = arith.constant 0 : index
    %38 = vector.load %arg3[%c0_48, %c0_49] : memref<1x128xf32, #tpu.memory_space<vmem>>, vector<1x128xf32>
    %39 = vector.broadcast %38 : vector<1x128xf32> to vector<64x128xf32>
    %40 = arith.addf %37, %39 : vector<64x128xf32>
    %cst_50 = arith.constant 0.000000e+00 : f32
    %41 = vector.broadcast %cst_50 : f32 to vector<64x128xf32>
    %42 = arith.maximumf %40, %41 : vector<64x128xf32>
    %43 = vector.shape_cast %42 : vector<64x128xf32> to vector<8x8x128xf32>
    %c1_51 = arith.constant 1 : index
    %c1_52 = arith.constant 1 : index
    %c0_53 = arith.constant 0 : index
    %44 = vector.load %arg13[%c1_51, %c1_52, %c0_53] : memref<10x10x128xf32, #tpu.memory_space<vmem>>, vector<8x8x128xf32>
    tpu.vector_store %arg13[%c1_51, %c1_52, %c0_53], %43 {strides = array<i32>} : memref<10x10x128xf32, #tpu.memory_space<vmem>>, vector<8x8x128xf32>,
    %c0_54 = arith.constant 0 : index
    %c0_55 = arith.constant 0 : index
    %c0_56 = arith.constant 0 : index
    %45 = vector.load %arg13[%c0_54, %c0_55, %c0_56] : memref<10x10x128xf32, #tpu.memory_space<vmem>>, vector<8x8x128xf32>
    %46 = vector.shape_cast %45 : vector<8x8x128xf32> to vector<64x128xf32>
    %47 = arith.truncf %46 : vector<64x128xf32> to vector<64x128xbf16>
    %c0_57 = arith.constant 0 : index
    %c1_58 = arith.constant 1 : index
    %c0_59 = arith.constant 0 : index
    %48 = vector.load %arg13[%c0_57, %c1_58, %c0_59] : memref<10x10x128xf32, #tpu.memory_space<vmem>>, vector<8x8x128xf32>
    %49 = vector.shape_cast %48 : vector<8x8x128xf32> to vector<64x128xf32>
    %50 = arith.truncf %49 : vector<64x128xf32> to vector<64x128xbf16>
    %c0_60 = arith.constant 0 : index
    %c2 = arith.constant 2 : index
    %c0_61 = arith.constant 0 : index
    %51 = vector.load %arg13[%c0_60, %c2, %c0_61] : memref<10x10x128xf32, #tpu.memory_space<vmem>>, vector<8x8x128xf32>
    %52 = vector.shape_cast %51 : vector<8x8x128xf32> to vector<64x128xf32>
    %53 = arith.truncf %52 : vector<64x128xf32> to vector<64x128xbf16>
    %c1_62 = arith.constant 1 : index
    %c0_63 = arith.constant 0 : index
    %c0_64 = arith.constant 0 : index
    %54 = vector.load %arg13[%c1_62, %c0_63, %c0_64] : memref<10x10x128xf32, #tpu.memory_space<vmem>>, vector<8x8x128xf32>
    %55 = vector.shape_cast %54 : vector<8x8x128xf32> to vector<64x128xf32>
    %56 = arith.truncf %55 : vector<64x128xf32> to vector<64x128xbf16>
    %c1_65 = arith.constant 1 : index
    %c1_66 = arith.constant 1 : index
    %c0_67 = arith.constant 0 : index
    %57 = vector.load %arg13[%c1_65, %c1_66, %c0_67] : memref<10x10x128xf32, #tpu.memory_space<vmem>>, vector<8x8x128xf32>
    %58 = vector.shape_cast %57 : vector<8x8x128xf32> to vector<64x128xf32>
    %59 = arith.truncf %58 : vector<64x128xf32> to vector<64x128xbf16>
    %c1_68 = arith.constant 1 : index
    %c2_69 = arith.constant 2 : index
    %c0_70 = arith.constant 0 : index
    %60 = vector.load %arg13[%c1_68, %c2_69, %c0_70] : memref<10x10x128xf32, #tpu.memory_space<vmem>>, vector<8x8x128xf32>
    %61 = vector.shape_cast %60 : vector<8x8x128xf32> to vector<64x128xf32>
    %62 = arith.truncf %61 : vector<64x128xf32> to vector<64x128xbf16>
    %c2_71 = arith.constant 2 : index
    %c0_72 = arith.constant 0 : index
    %c0_73 = arith.constant 0 : index
    %63 = vector.load %arg13[%c2_71, %c0_72, %c0_73] : memref<10x10x128xf32, #tpu.memory_space<vmem>>, vector<8x8x128xf32>
    %64 = vector.shape_cast %63 : vector<8x8x128xf32> to vector<64x128xf32>
    %65 = arith.truncf %64 : vector<64x128xf32> to vector<64x128xbf16>
    %c2_74 = arith.constant 2 : index
    %c1_75 = arith.constant 1 : index
    %c0_76 = arith.constant 0 : index
    %66 = vector.load %arg13[%c2_74, %c1_75, %c0_76] : memref<10x10x128xf32, #tpu.memory_space<vmem>>, vector<8x8x128xf32>
    %67 = vector.shape_cast %66 : vector<8x8x128xf32> to vector<64x128xf32>
    %68 = arith.truncf %67 : vector<64x128xf32> to vector<64x128xbf16>
    %c2_77 = arith.constant 2 : index
    %c2_78 = arith.constant 2 : index
    %c0_79 = arith.constant 0 : index
    %69 = vector.load %arg13[%c2_77, %c2_78, %c0_79] : memref<10x10x128xf32, #tpu.memory_space<vmem>>, vector<8x8x128xf32>
    %70 = vector.shape_cast %69 : vector<8x8x128xf32> to vector<64x128xf32>
    %71 = arith.truncf %70 : vector<64x128xf32> to vector<64x128xbf16>
    %72 = tpu.concatenate %47, %50, %53, %56, %59, %62, %65, %68, %71 in 1 : vector<64x128xbf16>, vector<64x128xbf16>, vector<64x128xbf16>, vector<64x128xbf16>, vector<64x128xbf16>, vector<64x128xbf16>, vector<64x128xbf16>, vector<64x128xbf16>, vector<64x128xbf16> -> vector<64x1152xbf16>
    %c0_80 = arith.constant 0 : index
    %c0_81 = arith.constant 0 : index
    %73 = vector.load %arg4[%c0_80, %c0_81] : memref<1152x128xbf16, #tpu.memory_space<vmem>>, vector<1152x128xbf16>
    %cst_82 = arith.constant dense<0.000000e+00> : vector<64x128xf32>
    %74 = tpu.matmul %72, %73, %cst_82 {dimension_numbers = #tpu.dot_dimension_numbers<[1], [0], [0], [1], [0, 0, 1, 1], [], []>} : vector<64x1152xbf16>, vector<1152x128xbf16>, vector<64x128xf32> -> vector<64x128xf32>
    %c0_83 = arith.constant 0 : index
    %c0_84 = arith.constant 0 : index
    %75 = vector.load %arg5[%c0_83, %c0_84] : memref<1x128xf32, #tpu.memory_space<vmem>>, vector<1x128xf32>
    %76 = vector.broadcast %75 : vector<1x128xf32> to vector<64x128xf32>
    %77 = arith.addf %74, %76 : vector<64x128xf32>
    %78 = vector.shape_cast %7 : vector<8x8x128xbf16> to vector<64x128xbf16>
    %c0_85 = arith.constant 0 : index
    %c0_86 = arith.constant 0 : index
    %79 = vector.load %arg6[%c0_85, %c0_86] : memref<128x128xbf16, #tpu.memory_space<vmem>>, vector<128x128xbf16>
    %cst_87 = arith.constant dense<0.000000e+00> : vector<64x128xf32>
    %80 = tpu.matmul %78, %79, %cst_87 {dimension_numbers = #tpu.dot_dimension_numbers<[1], [0], [0], [1], [0, 0, 1, 1], [], []>} : vector<64x128xbf16>, vector<128x128xbf16>, vector<64x128xf32> -> vector<64x128xf32>
    %c0_88 = arith.constant 0 : index
    %c0_89 = arith.constant 0 : index
    %81 = vector.load %arg7[%c0_88, %c0_89] : memref<1x128xf32, #tpu.memory_space<vmem>>, vector<1x128xf32>
    %82 = vector.broadcast %81 : vector<1x128xf32> to vector<64x128xf32>
    %83 = arith.addf %80, %82 : vector<64x128xf32>
    %84 = arith.addf %77, %83 : vector<64x128xf32>
    %cst_90 = arith.constant 0.000000e+00 : f32
    %85 = vector.broadcast %cst_90 : f32 to vector<64x128xf32>
    %86 = arith.maximumf %84, %85 : vector<64x128xf32>
    %87 = vector.shape_cast %86 : vector<64x128xf32> to vector<8x8x128xf32>
    %c1_91 = arith.constant 1 : index
    %c1_92 = arith.constant 1 : index
    %c0_93 = arith.constant 0 : index
    %88 = vector.load %arg14[%c1_91, %c1_92, %c0_93] : memref<10x10x128xf32, #tpu.memory_space<vmem>>, vector<8x8x128xf32>
    tpu.vector_store %arg14[%c1_91, %c1_92, %c0_93], %87 {strides = array<i32>} : memref<10x10x128xf32, #tpu.memory_space<vmem>>, vector<8x8x128xf32>,
    %c0_94 = arith.constant 0 : index
    %c0_95 = arith.constant 0 : index
    %c0_96 = arith.constant 0 : index
    %89 = vector.load %arg14[%c0_94, %c0_95, %c0_96] : memref<10x10x128xf32, #tpu.memory_space<vmem>>, vector<8x8x128xf32>
    %90 = vector.shape_cast %89 : vector<8x8x128xf32> to vector<64x128xf32>
    %91 = arith.truncf %90 : vector<64x128xf32> to vector<64x128xbf16>
    %c0_97 = arith.constant 0 : index
    %c1_98 = arith.constant 1 : index
    %c0_99 = arith.constant 0 : index
    %92 = vector.load %arg14[%c0_97, %c1_98, %c0_99] : memref<10x10x128xf32, #tpu.memory_space<vmem>>, vector<8x8x128xf32>
    %93 = vector.shape_cast %92 : vector<8x8x128xf32> to vector<64x128xf32>
    %94 = arith.truncf %93 : vector<64x128xf32> to vector<64x128xbf16>
    %c0_100 = arith.constant 0 : index
    %c2_101 = arith.constant 2 : index
    %c0_102 = arith.constant 0 : index
    %95 = vector.load %arg14[%c0_100, %c2_101, %c0_102] : memref<10x10x128xf32, #tpu.memory_space<vmem>>, vector<8x8x128xf32>
    %96 = vector.shape_cast %95 : vector<8x8x128xf32> to vector<64x128xf32>
    %97 = arith.truncf %96 : vector<64x128xf32> to vector<64x128xbf16>
    %c1_103 = arith.constant 1 : index
    %c0_104 = arith.constant 0 : index
    %c0_105 = arith.constant 0 : index
    %98 = vector.load %arg14[%c1_103, %c0_104, %c0_105] : memref<10x10x128xf32, #tpu.memory_space<vmem>>, vector<8x8x128xf32>
    %99 = vector.shape_cast %98 : vector<8x8x128xf32> to vector<64x128xf32>
    %100 = arith.truncf %99 : vector<64x128xf32> to vector<64x128xbf16>
    %c1_106 = arith.constant 1 : index
    %c1_107 = arith.constant 1 : index
    %c0_108 = arith.constant 0 : index
    %101 = vector.load %arg14[%c1_106, %c1_107, %c0_108] : memref<10x10x128xf32, #tpu.memory_space<vmem>>, vector<8x8x128xf32>
    %102 = vector.shape_cast %101 : vector<8x8x128xf32> to vector<64x128xf32>
    %103 = arith.truncf %102 : vector<64x128xf32> to vector<64x128xbf16>
    %c1_109 = arith.constant 1 : index
    %c2_110 = arith.constant 2 : index
    %c0_111 = arith.constant 0 : index
    %104 = vector.load %arg14[%c1_109, %c2_110, %c0_111] : memref<10x10x128xf32, #tpu.memory_space<vmem>>, vector<8x8x128xf32>
    %105 = vector.shape_cast %104 : vector<8x8x128xf32> to vector<64x128xf32>
    %106 = arith.truncf %105 : vector<64x128xf32> to vector<64x128xbf16>
    %c2_112 = arith.constant 2 : index
    %c0_113 = arith.constant 0 : index
    %c0_114 = arith.constant 0 : index
    %107 = vector.load %arg14[%c2_112, %c0_113, %c0_114] : memref<10x10x128xf32, #tpu.memory_space<vmem>>, vector<8x8x128xf32>
    %108 = vector.shape_cast %107 : vector<8x8x128xf32> to vector<64x128xf32>
    %109 = arith.truncf %108 : vector<64x128xf32> to vector<64x128xbf16>
    %c2_115 = arith.constant 2 : index
    %c1_116 = arith.constant 1 : index
    %c0_117 = arith.constant 0 : index
    %110 = vector.load %arg14[%c2_115, %c1_116, %c0_117] : memref<10x10x128xf32, #tpu.memory_space<vmem>>, vector<8x8x128xf32>
    %111 = vector.shape_cast %110 : vector<8x8x128xf32> to vector<64x128xf32>
    %112 = arith.truncf %111 : vector<64x128xf32> to vector<64x128xbf16>
    %c2_118 = arith.constant 2 : index
    %c2_119 = arith.constant 2 : index
    %c0_120 = arith.constant 0 : index
    %113 = vector.load %arg14[%c2_118, %c2_119, %c0_120] : memref<10x10x128xf32, #tpu.memory_space<vmem>>, vector<8x8x128xf32>
    %114 = vector.shape_cast %113 : vector<8x8x128xf32> to vector<64x128xf32>
    %115 = arith.truncf %114 : vector<64x128xf32> to vector<64x128xbf16>
    %116 = tpu.concatenate %91, %94, %97, %100, %103, %106, %109, %112, %115 in 1 : vector<64x128xbf16>, vector<64x128xbf16>, vector<64x128xbf16>, vector<64x128xbf16>, vector<64x128xbf16>, vector<64x128xbf16>, vector<64x128xbf16>, vector<64x128xbf16>, vector<64x128xbf16> -> vector<64x1152xbf16>
    %c0_121 = arith.constant 0 : index
    %c0_122 = arith.constant 0 : index
    %117 = vector.load %arg8[%c0_121, %c0_122] : memref<1152x128xbf16, #tpu.memory_space<vmem>>, vector<1152x128xbf16>
    %cst_123 = arith.constant dense<0.000000e+00> : vector<64x128xf32>
    %118 = tpu.matmul %116, %117, %cst_123 {dimension_numbers = #tpu.dot_dimension_numbers<[1], [0], [0], [1], [0, 0, 1, 1], [], []>} : vector<64x1152xbf16>, vector<1152x128xbf16>, vector<64x128xf32> -> vector<64x128xf32>
    %c0_124 = arith.constant 0 : index
    %c0_125 = arith.constant 0 : index
    %119 = vector.load %arg9[%c0_124, %c0_125] : memref<1x128xf32, #tpu.memory_space<vmem>>, vector<1x128xf32>
    %120 = vector.broadcast %119 : vector<1x128xf32> to vector<64x128xf32>
    %121 = arith.addf %118, %120 : vector<64x128xf32>
    %cst_126 = arith.constant 0.000000e+00 : f32
    %122 = vector.broadcast %cst_126 : f32 to vector<64x128xf32>
    %123 = arith.maximumf %121, %122 : vector<64x128xf32>
    %124 = vector.shape_cast %123 : vector<64x128xf32> to vector<8x8x128xf32>
    %c1_127 = arith.constant 1 : index
    %c1_128 = arith.constant 1 : index
    %c0_129 = arith.constant 0 : index
    %125 = vector.load %arg15[%c1_127, %c1_128, %c0_129] : memref<10x10x128xf32, #tpu.memory_space<vmem>>, vector<8x8x128xf32>
    tpu.vector_store %arg15[%c1_127, %c1_128, %c0_129], %124 {strides = array<i32>} : memref<10x10x128xf32, #tpu.memory_space<vmem>>, vector<8x8x128xf32>,
    %c0_130 = arith.constant 0 : index
    %c0_131 = arith.constant 0 : index
    %c0_132 = arith.constant 0 : index
    %126 = vector.load %arg15[%c0_130, %c0_131, %c0_132] : memref<10x10x128xf32, #tpu.memory_space<vmem>>, vector<8x8x128xf32>
    %127 = vector.shape_cast %126 : vector<8x8x128xf32> to vector<64x128xf32>
    %128 = arith.truncf %127 : vector<64x128xf32> to vector<64x128xbf16>
    %c0_133 = arith.constant 0 : index
    %c1_134 = arith.constant 1 : index
    %c0_135 = arith.constant 0 : index
    %129 = vector.load %arg15[%c0_133, %c1_134, %c0_135] : memref<10x10x128xf32, #tpu.memory_space<vmem>>, vector<8x8x128xf32>
    %130 = vector.shape_cast %129 : vector<8x8x128xf32> to vector<64x128xf32>
    %131 = arith.truncf %130 : vector<64x128xf32> to vector<64x128xbf16>
    %c0_136 = arith.constant 0 : index
    %c2_137 = arith.constant 2 : index
    %c0_138 = arith.constant 0 : index
    %132 = vector.load %arg15[%c0_136, %c2_137, %c0_138] : memref<10x10x128xf32, #tpu.memory_space<vmem>>, vector<8x8x128xf32>
    %133 = vector.shape_cast %132 : vector<8x8x128xf32> to vector<64x128xf32>
    %134 = arith.truncf %133 : vector<64x128xf32> to vector<64x128xbf16>
    %c1_139 = arith.constant 1 : index
    %c0_140 = arith.constant 0 : index
    %c0_141 = arith.constant 0 : index
    %135 = vector.load %arg15[%c1_139, %c0_140, %c0_141] : memref<10x10x128xf32, #tpu.memory_space<vmem>>, vector<8x8x128xf32>
    %136 = vector.shape_cast %135 : vector<8x8x128xf32> to vector<64x128xf32>
    %137 = arith.truncf %136 : vector<64x128xf32> to vector<64x128xbf16>
    %c1_142 = arith.constant 1 : index
    %c1_143 = arith.constant 1 : index
    %c0_144 = arith.constant 0 : index
    %138 = vector.load %arg15[%c1_142, %c1_143, %c0_144] : memref<10x10x128xf32, #tpu.memory_space<vmem>>, vector<8x8x128xf32>
    %139 = vector.shape_cast %138 : vector<8x8x128xf32> to vector<64x128xf32>
    %140 = arith.truncf %139 : vector<64x128xf32> to vector<64x128xbf16>
    %c1_145 = arith.constant 1 : index
    %c2_146 = arith.constant 2 : index
    %c0_147 = arith.constant 0 : index
    %141 = vector.load %arg15[%c1_145, %c2_146, %c0_147] : memref<10x10x128xf32, #tpu.memory_space<vmem>>, vector<8x8x128xf32>
    %142 = vector.shape_cast %141 : vector<8x8x128xf32> to vector<64x128xf32>
    %143 = arith.truncf %142 : vector<64x128xf32> to vector<64x128xbf16>
    %c2_148 = arith.constant 2 : index
    %c0_149 = arith.constant 0 : index
    %c0_150 = arith.constant 0 : index
    %144 = vector.load %arg15[%c2_148, %c0_149, %c0_150] : memref<10x10x128xf32, #tpu.memory_space<vmem>>, vector<8x8x128xf32>
    %145 = vector.shape_cast %144 : vector<8x8x128xf32> to vector<64x128xf32>
    %146 = arith.truncf %145 : vector<64x128xf32> to vector<64x128xbf16>
    %c2_151 = arith.constant 2 : index
    %c1_152 = arith.constant 1 : index
    %c0_153 = arith.constant 0 : index
    %147 = vector.load %arg15[%c2_151, %c1_152, %c0_153] : memref<10x10x128xf32, #tpu.memory_space<vmem>>, vector<8x8x128xf32>
    %148 = vector.shape_cast %147 : vector<8x8x128xf32> to vector<64x128xf32>
    %149 = arith.truncf %148 : vector<64x128xf32> to vector<64x128xbf16>
    %c2_154 = arith.constant 2 : index
    %c2_155 = arith.constant 2 : index
    %c0_156 = arith.constant 0 : index
    %150 = vector.load %arg15[%c2_154, %c2_155, %c0_156] : memref<10x10x128xf32, #tpu.memory_space<vmem>>, vector<8x8x128xf32>
    %151 = vector.shape_cast %150 : vector<8x8x128xf32> to vector<64x128xf32>
    %152 = arith.truncf %151 : vector<64x128xf32> to vector<64x128xbf16>
    %153 = tpu.concatenate %128, %131, %134, %137, %140, %143, %146, %149, %152 in 1 : vector<64x128xbf16>, vector<64x128xbf16>, vector<64x128xbf16>, vector<64x128xbf16>, vector<64x128xbf16>, vector<64x128xbf16>, vector<64x128xbf16>, vector<64x128xbf16>, vector<64x128xbf16> -> vector<64x1152xbf16>
    %c0_157 = arith.constant 0 : index
    %c0_158 = arith.constant 0 : index
    %154 = vector.load %arg10[%c0_157, %c0_158] : memref<1152x128xbf16, #tpu.memory_space<vmem>>, vector<1152x128xbf16>
    %cst_159 = arith.constant dense<0.000000e+00> : vector<64x128xf32>
    %155 = tpu.matmul %153, %154, %cst_159 {dimension_numbers = #tpu.dot_dimension_numbers<[1], [0], [0], [1], [0, 0, 1, 1], [], []>} : vector<64x1152xbf16>, vector<1152x128xbf16>, vector<64x128xf32> -> vector<64x128xf32>
    %c0_160 = arith.constant 0 : index
    %c0_161 = arith.constant 0 : index
    %156 = vector.load %arg11[%c0_160, %c0_161] : memref<1x128xf32, #tpu.memory_space<vmem>>, vector<1x128xf32>
    %157 = vector.broadcast %156 : vector<1x128xf32> to vector<64x128xf32>
    %158 = arith.addf %155, %157 : vector<64x128xf32>
    %159 = arith.addf %158, %86 : vector<64x128xf32>
    %cst_162 = arith.constant 0.000000e+00 : f32
    %160 = vector.broadcast %cst_162 : f32 to vector<64x128xf32>
    %161 = arith.maximumf %159, %160 : vector<64x128xf32>
    %c0_163 = arith.constant 0 : index
    %c0_164 = arith.constant 0 : index
    %c0_165 = arith.constant 0 : index
    %162 = vector.load %arg12[%c0_163, %c0_164, %c0_165] : memref<1x64x128xf32, #tpu.memory_space<vmem>>, vector<1x64x128xf32>
    %163 = vector.shape_cast %162 : vector<1x64x128xf32> to vector<64x128xf32>
    %164 = vector.shape_cast %161 : vector<64x128xf32> to vector<1x64x128xf32>
    tpu.vector_store %arg12[%c0_163, %c0_164, %c0_165], %164 {strides = array<i32>} : memref<1x64x128xf32, #tpu.memory_space<vmem>>, vector<1x64x128xf32>,
    return
  }
  func.func @transform_0(%arg0: i32) -> (i32, i32, i32, i32) {
    %c0_i32 = arith.constant 0 : i32
    %c0_i32_0 = arith.constant 0 : i32
    %c0_i32_1 = arith.constant 0 : i32
    %c0_i32_2 = arith.constant 0 : i32
    return %arg0, %c0_i32, %c0_i32_0, %c0_i32_1 : i32, i32, i32, i32
  }
  func.func @transform_1(%arg0: i32) -> (i32, i32) {
    %c0_i32 = arith.constant 0 : i32
    %c0_i32_0 = arith.constant 0 : i32
    %c0_i32_1 = arith.constant 0 : i32
    return %c0_i32, %c0_i32_0 : i32, i32
  }
  func.func @transform_2(%arg0: i32) -> (i32, i32) {
    %c0_i32 = arith.constant 0 : i32
    %c0_i32_0 = arith.constant 0 : i32
    %c0_i32_1 = arith.constant 0 : i32
    return %c0_i32, %c0_i32_0 : i32, i32
  }
  func.func @transform_3(%arg0: i32) -> (i32, i32) {
    %c0_i32 = arith.constant 0 : i32
    %c0_i32_0 = arith.constant 0 : i32
    %c0_i32_1 = arith.constant 0 : i32
    return %c0_i32, %c0_i32_0 : i32, i32
  }
  func.func @transform_4(%arg0: i32) -> (i32, i32) {
    %c0_i32 = arith.constant 0 : i32
    %c0_i32_0 = arith.constant 0 : i32
    %c0_i32_1 = arith.constant 0 : i32
    return %c0_i32, %c0_i32_0 : i32, i32
  }
  func.func @transform_5(%arg0: i32) -> (i32, i32) {
    %c0_i32 = arith.constant 0 : i32
    %c0_i32_0 = arith.constant 0 : i32
    %c0_i32_1 = arith.constant 0 : i32
    return %c0_i32, %c0_i32_0 : i32, i32
  }
  func.func @transform_6(%arg0: i32) -> (i32, i32) {
    %c0_i32 = arith.constant 0 : i32
    %c0_i32_0 = arith.constant 0 : i32
    %c0_i32_1 = arith.constant 0 : i32
    return %c0_i32, %c0_i32_0 : i32, i32
  }
  func.func @transform_7(%arg0: i32) -> (i32, i32) {
    %c0_i32 = arith.constant 0 : i32
    %c0_i32_0 = arith.constant 0 : i32
    %c0_i32_1 = arith.constant 0 : i32
    return %c0_i32, %c0_i32_0 : i32, i32
  }
  func.func @transform_8(%arg0: i32) -> (i32, i32) {
    %c0_i32 = arith.constant 0 : i32
    %c0_i32_0 = arith.constant 0 : i32
    %c0_i32_1 = arith.constant 0 : i32
    return %c0_i32, %c0_i32_0 : i32, i32
  }
  func.func @transform_9(%arg0: i32) -> (i32, i32) {
    %c0_i32 = arith.constant 0 : i32
    %c0_i32_0 = arith.constant 0 : i32
    %c0_i32_1 = arith.constant 0 : i32
    return %c0_i32, %c0_i32_0 : i32, i32
  }
  func.func @transform_10(%arg0: i32) -> (i32, i32) {
    %c0_i32 = arith.constant 0 : i32
    %c0_i32_0 = arith.constant 0 : i32
    %c0_i32_1 = arith.constant 0 : i32
    return %c0_i32, %c0_i32_0 : i32, i32
  }
  func.func @transform_11(%arg0: i32) -> (i32, i32, i32) {
    %c0_i32 = arith.constant 0 : i32
    %c0_i32_0 = arith.constant 0 : i32
    %c0_i32_1 = arith.constant 0 : i32
    return %arg0, %c0_i32, %c0_i32_0 : i32, i32, i32
  }
}

</mosaic_0001>

<llo_original>
// kernel: double_res_forward.1
$region0: #{double_res_forward.1}
  #allocation0 [shape = 'u32[]', space=smem, size = 0x4, offset = 0x4, fixed_abs, tag = 'smem constant byte address 0x4 - core index']
  #allocation1 [shape = 'u32[144,128]{1,0:T(1,128)}', space=vmem, size = 0x12000, scoped, tag = 'internal scratch']
  #allocation2 [shape = 'f32[10,10,128]{2,1,0:T(8,128)}', space=vmem, size = 0x14000, scoped, tag = 'scratch operand']
  #allocation3 [shape = 'f32[10,10,128]{2,1,0:T(8,128)}', space=vmem, size = 0x14000, scoped, tag = 'scratch operand']
  #allocation4 [shape = 'f32[10,10,128]{2,1,0:T(8,128)}', space=vmem, size = 0x14000, scoped, tag = 'scratch operand']
  %s0 = inlined_call_operand.vmem [shape: bf16[2,36,9,128], index: 0, kind: input, shape index: {}]
  %s1 = inlined_call_operand.vmem [shape: bf16[1152,128], index: 1, kind: input, shape index: {}]
  %s2 = inlined_call_operand.vmem [shape: f32[1,128], index: 2, kind: input, shape index: {}]
  %s3 = inlined_call_operand.vmem [shape: bf16[1152,128], index: 3, kind: input, shape index: {}]
  %s4 = inlined_call_operand.vmem [shape: f32[1,128], index: 4, kind: input, shape index: {}]
  %s5 = inlined_call_operand.vmem [shape: bf16[128,128], index: 5, kind: input, shape index: {}]
  %s6 = inlined_call_operand.vmem [shape: f32[1,128], index: 6, kind: input, shape index: {}]
  %s7 = inlined_call_operand.vmem [shape: bf16[1152,128], index: 7, kind: input, shape index: {}]
  %s8 = inlined_call_operand.vmem [shape: f32[1,128], index: 8, kind: input, shape index: {}]
  %s9 = inlined_call_operand.vmem [shape: bf16[1152,128], index: 9, kind: input, shape index: {}]
  %s10 = inlined_call_operand.vmem [shape: f32[1,128], index: 10, kind: input, shape index: {}]
  %s11 = inlined_call_operand.vmem [shape: f32[2,64,128], index: 11, kind: output, shape index: {}]
  %s12 = sld [smem:[#allocation0]]
  $region77: #{double_res_forward.1} parent=0
    _
  %s14 = ssub.s32 1, %s12
  %s15 = scalar_select 0, %s14, %s12
  loop: start=0, step=1, limit=4
  $region2: #{double_res_forward.1} parent=0 // loop_pre_header
    _
  $region3: #{double_res_forward.1} parent=0 // loop_header
    %s17 = sphi 0, %s21
    %p18 = scmp.ge.s32.totalorder %s17, 4
    %s27 = sphi 0, %s29
    %s30 = sphi 0, %s27
    %s31 = sphi 0, %s30
    %s47 = sphi 0, %s31
    %s51 = sphi 0, %s51
    %s53 = sphi 0, %s51
    %s54 = sphi 0, %s53
    %s68 = sphi 0, %s54
    %s72 = sphi 0, %s72
    %s74 = sphi 0, %s72
    %s75 = sphi 0, %s74
    %s89 = sphi 0, %s75
    %s93 = sphi 0, %s93
    %s95 = sphi 0, %s93
    %s96 = sphi 0, %s95
    %s110 = sphi 0, %s96
    %s114 = sphi 0, %s114
    %s116 = sphi 0, %s114
    %s117 = sphi 0, %s116
    %s131 = sphi 0, %s117
    %s135 = sphi 0, %s135
    %s137 = sphi 0, %s135
    %s138 = sphi 0, %s137
    %s152 = sphi 0, %s138
    %s156 = sphi 0, %s156
    %s158 = sphi 0, %s156
    %s159 = sphi 0, %s158
    %s173 = sphi 0, %s159
    %s177 = sphi 0, %s177
    %s179 = sphi 0, %s177
    %s180 = sphi 0, %s179
    %s194 = sphi 0, %s180
    %s198 = sphi 0, %s198
    %s200 = sphi 0, %s198
    %s201 = sphi 0, %s200
    %s215 = sphi 0, %s201
    %s219 = sphi 0, %s219
    %s221 = sphi 0, %s219
    %s222 = sphi 0, %s221
    %s236 = sphi 0, %s222
    %s240 = sphi 0, %s240
    %s242 = sphi 0, %s240
    %s243 = sphi 0, %s242
    %s257 = sphi 0, %s243
    %s263 = sphi 0, %s265
    %s266 = sphi 0, %s263
    %s267 = sphi 0, %s266
    %s283 = sphi 0, %s267
  $region4: #{double_res_forward.1} parent=0 // loop_header_branch
    %20 = sbr.rel (%p18) target = $region8
  $region5: #{double_res_forward.1} parent=0 // loop_body
    %s22 = ssub.s32 %s17, 1
    %s23 = ssub.s32 %s17, 2
    %s24 = sadd.s32 %s17, 1
    %s25 = ssub.s32 %s17, %s24
    %p26 = scmp.eq.s32.totalorder %s25, 0
    %s28 = sadd.s32 %s27, 1
    %s29 = scalar_select %p26, %s27, %s28
    %p32 = pneg %p26
    %p33 = scmp.eq.s32.totalorder %s17, 1
    %p34 = por %p32, %p33
    %p35 = scmp.ne.s32.totalorder %s27, %s30
    %p36 = scmp.eq.s32.totalorder %s17, 0
    %p37 = por %p35, %p36
    %p38 = scmp.ne.s32.totalorder %s27, %s30
    %p39 = scmp.eq.s32.totalorder %s22, 1
    %p40 = por %p38, %p39
    %p41 = scmp.ne.s32.totalorder %s30, %s31
    %p42 = scmp.eq.s32.totalorder %s22, 0
    %p43 = por %p41, %p42
    %p44 = scmp.ne.s32.totalorder %s30, %s31
    %p45 = scmp.eq.s32.totalorder %s23, 1
    %p46 = por %p44, %p45
    %p48 = scmp.ne.s32.totalorder %s31, %s47
    %p49 = scmp.eq.s32.totalorder %s23, 0
    %p50 = por %p48, %p49
    %s52 = sadd.s32 %s51, 1
    %p55 = scmp.eq.s32.totalorder %s17, 1
    %p56 = scmp.ne.s32.totalorder %s51, %s53
    %p57 = scmp.eq.s32.totalorder %s17, 0
    %p58 = por %p56, %p57
    %p59 = scmp.ne.s32.totalorder %s51, %s53
    %p60 = scmp.eq.s32.totalorder %s22, 1
    %p61 = por %p59, %p60
    %p62 = scmp.ne.s32.totalorder %s53, %s54
    %p63 = scmp.eq.s32.totalorder %s22, 0
    %p64 = por %p62, %p63
    %p65 = scmp.ne.s32.totalorder %s53, %s54
    %p66 = scmp.eq.s32.totalorder %s23, 1
    %p67 = por %p65, %p66
    %p69 = scmp.ne.s32.totalorder %s54, %s68
    %p70 = scmp.eq.s32.totalorder %s23, 0
    %p71 = por %p69, %p70
    %s73 = sadd.s32 %s72, 1
    %p76 = scmp.eq.s32.totalorder %s17, 1
    %p77 = scmp.ne.s32.totalorder %s72, %s74
    %p78 = scmp.eq.s32.totalorder %s17, 0
    %p79 = por %p77, %p78
    %p80 = scmp.ne.s32.totalorder %s72, %s74
    %p81 = scmp.eq.s32.totalorder %s22, 1
    %p82 = por %p80, %p81
    %p83 = scmp.ne.s32.totalorder %s74, %s75
    %p84 = scmp.eq.s32.totalorder %s22, 0
    %p85 = por %p83, %p84
    %p86 = scmp.ne.s32.totalorder %s74, %s75
    %p87 = scmp.eq.s32.totalorder %s23, 1
    %p88 = por %p86, %p87
    %p90 = scmp.ne.s32.totalorder %s75, %s89
    %p91 = scmp.eq.s32.totalorder %s23, 0
    %p92 = por %p90, %p91
    %s94 = sadd.s32 %s93, 1
    %p97 = scmp.eq.s32.totalorder %s17, 1
    %p98 = scmp.ne.s32.totalorder %s93, %s95
    %p99 = scmp.eq.s32.totalorder %s17, 0
    %p100 = por %p98, %p99
    %p101 = scmp.ne.s32.totalorder %s93, %s95
    %p102 = scmp.eq.s32.totalorder %s22, 1
    %p103 = por %p101, %p102
    %p104 = scmp.ne.s32.totalorder %s95, %s96
    %p105 = scmp.eq.s32.totalorder %s22, 0
    %p106 = por %p104, %p105
    %p107 = scmp.ne.s32.totalorder %s95, %s96
    %p108 = scmp.eq.s32.totalorder %s23, 1
    %p109 = por %p107, %p108
    %p111 = scmp.ne.s32.totalorder %s96, %s110
    %p112 = scmp.eq.s32.totalorder %s23, 0
    %p113 = por %p111, %p112
    %s115 = sadd.s32 %s114, 1
    %p118 = scmp.eq.s32.totalorder %s17, 1
    %p119 = scmp.ne.s32.totalorder %s114, %s116
    %p120 = scmp.eq.s32.totalorder %s17, 0
    %p121 = por %p119, %p120
    %p122 = scmp.ne.s32.totalorder %s114, %s116
    %p123 = scmp.eq.s32.totalorder %s22, 1
    %p124 = por %p122, %p123
    %p125 = scmp.ne.s32.totalorder %s116, %s117
    %p126 = scmp.eq.s32.totalorder %s22, 0
    %p127 = por %p125, %p126
    %p128 = scmp.ne.s32.totalorder %s116, %s117
    %p129 = scmp.eq.s32.totalorder %s23, 1
    %p130 = por %p128, %p129
    %p132 = scmp.ne.s32.totalorder %s117, %s131
    %p133 = scmp.eq.s32.totalorder %s23, 0
    %p134 = por %p132, %p133
    %s136 = sadd.s32 %s135, 1
    %p139 = scmp.eq.s32.totalorder %s17, 1
    %p140 = scmp.ne.s32.totalorder %s135, %s137
    %p141 = scmp.eq.s32.totalorder %s17, 0
    %p142 = por %p140, %p141
    %p143 = scmp.ne.s32.totalorder %s135, %s137
    %p144 = scmp.eq.s32.totalorder %s22, 1
    %p145 = por %p143, %p144
    %p146 = scmp.ne.s32.totalorder %s137, %s138
    %p147 = scmp.eq.s32.totalorder %s22, 0
    %p148 = por %p146, %p147
    %p149 = scmp.ne.s32.totalorder %s137, %s138
    %p150 = scmp.eq.s32.totalorder %s23, 1
    %p151 = por %p149, %p150
    %p153 = scmp.ne.s32.totalorder %s138, %s152
    %p154 = scmp.eq.s32.totalorder %s23, 0
    %p155 = por %p153, %p154
    %s157 = sadd.s32 %s156, 1
    %p160 = scmp.eq.s32.totalorder %s17, 1
    %p161 = scmp.ne.s32.totalorder %s156, %s158
    %p162 = scmp.eq.s32.totalorder %s17, 0
    %p163 = por %p161, %p162
    %p164 = scmp.ne.s32.totalorder %s156, %s158
    %p165 = scmp.eq.s32.totalorder %s22, 1
    %p166 = por %p164, %p165
    %p167 = scmp.ne.s32.totalorder %s158, %s159
    %p168 = scmp.eq.s32.totalorder %s22, 0
    %p169 = por %p167, %p168
    %p170 = scmp.ne.s32.totalorder %s158, %s159
    %p171 = scmp.eq.s32.totalorder %s23, 1
    %p172 = por %p170, %p171
    %p174 = scmp.ne.s32.totalorder %s159, %s173
    %p175 = scmp.eq.s32.totalorder %s23, 0
    %p176 = por %p174, %p175
    %s178 = sadd.s32 %s177, 1
    %p181 = scmp.eq.s32.totalorder %s17, 1
    %p182 = scmp.ne.s32.totalorder %s177, %s179
    %p183 = scmp.eq.s32.totalorder %s17, 0
    %p184 = por %p182, %p183
    %p185 = scmp.ne.s32.totalorder %s177, %s179
    %p186 = scmp.eq.s32.totalorder %s22, 1
    %p187 = por %p185, %p186
    %p188 = scmp.ne.s32.totalorder %s179, %s180
    %p189 = scmp.eq.s32.totalorder %s22, 0
    %p190 = por %p188, %p189
    %p191 = scmp.ne.s32.totalorder %s179, %s180
    %p192 = scmp.eq.s32.totalorder %s23, 1
    %p193 = por %p191, %p192
    %p195 = scmp.ne.s32.totalorder %s180, %s194
    %p196 = scmp.eq.s32.totalorder %s23, 0
    %p197 = por %p195, %p196
    %s199 = sadd.s32 %s198, 1
    %p202 = scmp.eq.s32.totalorder %s17, 1
    %p203 = scmp.ne.s32.totalorder %s198, %s200
    %p204 = scmp.eq.s32.totalorder %s17, 0
    %p205 = por %p203, %p204
    %p206 = scmp.ne.s32.totalorder %s198, %s200
    %p207 = scmp.eq.s32.totalorder %s22, 1
    %p208 = por %p206, %p207
    %p209 = scmp.ne.s32.totalorder %s200, %s201
    %p210 = scmp.eq.s32.totalorder %s22, 0
    %p211 = por %p209, %p210
    %p212 = scmp.ne.s32.totalorder %s200, %s201
    %p213 = scmp.eq.s32.totalorder %s23, 1
    %p214 = por %p212, %p213
    %p216 = scmp.ne.s32.totalorder %s201, %s215
    %p217 = scmp.eq.s32.totalorder %s23, 0
    %p218 = por %p216, %p217
    %s220 = sadd.s32 %s219, 1
    %p223 = scmp.eq.s32.totalorder %s17, 1
    %p224 = scmp.ne.s32.totalorder %s219, %s221
    %p225 = scmp.eq.s32.totalorder %s17, 0
    %p226 = por %p224, %p225
    %p227 = scmp.ne.s32.totalorder %s219, %s221
    %p228 = scmp.eq.s32.totalorder %s22, 1
    %p229 = por %p227, %p228
    %p230 = scmp.ne.s32.totalorder %s221, %s222
    %p231 = scmp.eq.s32.totalorder %s22, 0
    %p232 = por %p230, %p231
    %p233 = scmp.ne.s32.totalorder %s221, %s222
    %p234 = scmp.eq.s32.totalorder %s23, 1
    %p235 = por %p233, %p234
    %p237 = scmp.ne.s32.totalorder %s222, %s236
    %p238 = scmp.eq.s32.totalorder %s23, 0
    %p239 = por %p237, %p238
    %s241 = sadd.s32 %s240, 1
    %p244 = scmp.eq.s32.totalorder %s17, 1
    %p245 = scmp.ne.s32.totalorder %s240, %s242
    %p246 = scmp.eq.s32.totalorder %s17, 0
    %p247 = por %p245, %p246
    %p248 = scmp.ne.s32.totalorder %s240, %s242
    %p249 = scmp.eq.s32.totalorder %s22, 1
    %p250 = por %p248, %p249
    %p251 = scmp.ne.s32.totalorder %s242, %s243
    %p252 = scmp.eq.s32.totalorder %s22, 0
    %p253 = por %p251, %p252
    %p254 = scmp.ne.s32.totalorder %s242, %s243
    %p255 = scmp.eq.s32.totalorder %s23, 1
    %p256 = por %p254, %p255
    %p258 = scmp.ne.s32.totalorder %s243, %s257
    %p259 = scmp.eq.s32.totalorder %s23, 0
    %p260 = por %p258, %p259
    %s261 = ssub.s32 %s17, %s24
    %p262 = scmp.eq.s32.totalorder %s261, 0
    %s264 = sadd.s32 %s263, 1
    %s265 = scalar_select %p262, %s263, %s264
    %p268 = pneg %p262
    %p269 = scmp.eq.s32.totalorder %s17, 1
    %p270 = por %p268, %p269
    %p271 = scmp.ne.s32.totalorder %s263, %s266
    %p272 = scmp.eq.s32.totalorder %s17, 0
    %p273 = por %p271, %p272
    %p274 = scmp.ne.s32.totalorder %s263, %s266
    %p275 = scmp.eq.s32.totalorder %s22, 1
    %p276 = por %p274, %p275
    %p277 = scmp.ne.s32.totalorder %s266, %s267
    %p278 = scmp.eq.s32.totalorder %s22, 0
    %p279 = por %p277, %p278
    %p280 = scmp.ne.s32.totalorder %s266, %s267
    %p281 = scmp.eq.s32.totalorder %s23, 1
    %p282 = por %p280, %p281
    %p284 = scmp.ne.s32.totalorder %s267, %s283
    %p285 = scmp.eq.s32.totalorder %s23, 0
    %p286 = por %p284, %p285
    %p287 = scmp.le.s32.totalorder 1, %s17
    %p288 = scmp.lt.s32.totalorder %s17, 3
    %p289 = pnand %p287, %p288
    %p290 = pneg %p289
    // Predicated region
    $region9: #{double_res_forward.1} parent=5 // pred_check
      _
    $region10: #{double_res_forward.1} parent=5 // pred_check_branch
      %292 = sbr.rel (%p289) target = $region12
    $region11: #{double_res_forward.1} parent=5 // pred_region
      %s293 = ssub.s32 %s17, 1
      // Predicated region
      $region13: #{double_res_forward.1} parent=11 // pred_check
        %p294 = pneg %p64
      $region14: #{double_res_forward.1} parent=11 // pred_check_branch
        %296 = sbr.rel (%p294) target = $region16
      $region15: #{double_res_forward.1} parent=11 // pred_region
        _
      $region16: #{double_res_forward.1} parent=11 // pred_fallthru
        _
      // Predicated region
      $region17: #{double_res_forward.1} parent=11 // pred_check
        %p297 = pneg %p85
      $region18: #{double_res_forward.1} parent=11 // pred_check_branch
        %299 = sbr.rel (%p297) target = $region20
      $region19: #{double_res_forward.1} parent=11 // pred_region
        _
      $region20: #{double_res_forward.1} parent=11 // pred_fallthru
        _
      // Predicated region
      $region21: #{double_res_forward.1} parent=11 // pred_check
        %p300 = pneg %p106
      $region22: #{double_res_forward.1} parent=11 // pred_check_branch
        %302 = sbr.rel (%p300) target = $region24
      $region23: #{double_res_forward.1} parent=11 // pred_region
        _
      $region24: #{double_res_forward.1} parent=11 // pred_fallthru
        _
      // Predicated region
      $region25: #{double_res_forward.1} parent=11 // pred_check
        %p303 = pneg %p127
      $region26: #{double_res_forward.1} parent=11 // pred_check_branch
        %305 = sbr.rel (%p303) target = $region28
      $region27: #{double_res_forward.1} parent=11 // pred_region
        _
      $region28: #{double_res_forward.1} parent=11 // pred_fallthru
        _
      // Predicated region
      $region29: #{double_res_forward.1} parent=11 // pred_check
        %p306 = pneg %p148
      $region30: #{double_res_forward.1} parent=11 // pred_check_branch
        %308 = sbr.rel (%p306) target = $region32
      $region31: #{double_res_forward.1} parent=11 // pred_region
        _
      $region32: #{double_res_forward.1} parent=11 // pred_fallthru
        _
      // Predicated region
      $region33: #{double_res_forward.1} parent=11 // pred_check
        %p309 = pneg %p169
      $region34: #{double_res_forward.1} parent=11 // pred_check_branch
        %311 = sbr.rel (%p309) target = $region36
      $region35: #{double_res_forward.1} parent=11 // pred_region
        _
      $region36: #{double_res_forward.1} parent=11 // pred_fallthru
        _
      // Predicated region
      $region37: #{double_res_forward.1} parent=11 // pred_check
        %p312 = pneg %p190
      $region38: #{double_res_forward.1} parent=11 // pred_check_branch
        %314 = sbr.rel (%p312) target = $region40
      $region39: #{double_res_forward.1} parent=11 // pred_region
        _
      $region40: #{double_res_forward.1} parent=11 // pred_fallthru
        _
      // Predicated region
      $region41: #{double_res_forward.1} parent=11 // pred_check
        %p315 = pneg %p211
      $region42: #{double_res_forward.1} parent=11 // pred_check_branch
        %317 = sbr.rel (%p315) target = $region44
      $region43: #{double_res_forward.1} parent=11 // pred_region
        _
      $region44: #{double_res_forward.1} parent=11 // pred_fallthru
        _
      // Predicated region
      $region45: #{double_res_forward.1} parent=11 // pred_check
        %p318 = pneg %p232
      $region46: #{double_res_forward.1} parent=11 // pred_check_branch
        %320 = sbr.rel (%p318) target = $region48
      $region47: #{double_res_forward.1} parent=11 // pred_region
        _
      $region48: #{double_res_forward.1} parent=11 // pred_fallthru
        _
      // Predicated region
      $region49: #{double_res_forward.1} parent=11 // pred_check
        %p321 = pneg %p253
      $region50: #{double_res_forward.1} parent=11 // pred_check_branch
        %323 = sbr.rel (%p321) target = $region52
      $region51: #{double_res_forward.1} parent=11 // pred_region
        _
      $region52: #{double_res_forward.1} parent=11 // pred_fallthru
        _
    $region12: #{double_res_forward.1} parent=5 // pred_fallthru
      _
    %p324 = scmp.lt.s32.totalorder %s17, 2
    // Predicated region
    $region53: #{double_res_forward.1} parent=5 // pred_check
      %p325 = pneg %p324
    $region54: #{double_res_forward.1} parent=5 // pred_check_branch
      %327 = sbr.rel (%p325) target = $region56
    $region55: #{double_res_forward.1} parent=5 // pred_region
      // Predicated region
      $region57: #{double_res_forward.1} parent=55 // pred_check
        %p328 = pneg %p37
      $region58: #{double_res_forward.1} parent=55 // pred_check_branch
        %330 = sbr.rel (%p328) target = $region60
      $region59: #{double_res_forward.1} parent=55 // pred_region
        %p331 = scmp.lt.s32.totalorder %s17, 1
        %s332 = scalar_select %p331, %s17, 1
        %s333 = smul.addr %s332, 72
        %s334 = smul.addr %s333, 4
        %s335 = scalar_lea.vmem %s0, %s334
      $region60: #{double_res_forward.1} parent=55 // pred_fallthru
        _
    $region56: #{double_res_forward.1} parent=5 // pred_fallthru
      _
    %p336 = scmp.le.s32.totalorder 1, %s17
    %p337 = scmp.lt.s32.totalorder %s17, 3
    %p338 = pnand %p336, %p337
    %p339 = pneg %p338
    // Predicated region
    $region61: #{double_res_forward.1} parent=5 // pred_check
      _
    $region62: #{double_res_forward.1} parent=5 // pred_check_branch
      %341 = sbr.rel (%p338) target = $region64
    $region63: #{double_res_forward.1} parent=5 // pred_region
      %s342 = ssub.s32 %s17, 1
      %p343 = scmp.lt.s32.totalorder %s22, 1
      %s344 = scalar_select %p343, %s22, 1
      %s345 = smul.addr %s344, 72
      %s346 = smul.addr %s345, 4
      %s347 = scalar_lea.vmem %s0, %s346
      %p348 = pneg %p43
      %p349 = pneg %p40
      %p350 = pneg %p64
      %p351 = pneg %p61
      %p352 = pneg %p85
      %p353 = pneg %p82
      %p354 = pneg %p106
      %p355 = pneg %p103
      %p356 = pneg %p127
      %p357 = pneg %p124
      %p358 = pneg %p148
      %p359 = pneg %p145
      %p360 = pneg %p169
      %p361 = pneg %p166
      %p362 = pneg %p190
      %p363 = pneg %p187
      %p364 = pneg %p211
      %p365 = pneg %p208
      %p366 = pneg %p232
      %p367 = pneg %p229
      %p368 = pneg %p253
      %p369 = pneg %p250
      %p370 = pneg %p279
      %p371 = pneg %p276
      %p372 = scmp.lt.s32.totalorder %s22, 1
      %s373 = scalar_select %p372, %s22, 1
      %s374 = smul.addr %s373, 8
      %s375 = smul.addr %s374, 8
      %s376 = scalar_lea.vmem %s11, %s375
      %p377 = scmp.lt.s32.totalorder %s22, 1
      %s378 = scalar_select %p377, %s22, 1
      %s379 = smul.addr %s378, 72
      %s380 = smul.addr %s379, 4
      %s381 = scalar_lea.vmem %s0, %s380
      %p382 = scmp.lt.s32.totalorder %s22, 1
      %s383 = scalar_select %p382, %s22, 1
      %s384 = smul.addr %s383, 8
      %s385 = smul.addr %s384, 8
      %s386 = scalar_lea.vmem %s11, %s385
      %388 = vst [vmem:[#allocation2] sm:$0xff] 0.0
      %389 = vst [vmem:[#allocation2 + $0x8] sm:$0x3] 0.0
      %390 = vst [vmem:[#allocation2 + $0x10] sm:$0xff] 0.0
      %391 = vst [vmem:[#allocation2 + $0x18] sm:$0x3] 0.0
      %392 = vst [vmem:[#allocation2 + $0x20] sm:$0xff] 0.0
      %393 = vst [vmem:[#allocation2 + $0x28] sm:$0x3] 0.0
      %394 = vst [vmem:[#allocation2 + $0x30] sm:$0xff] 0.0
      %395 = vst [vmem:[#allocation2 + $0x38] sm:$0x3] 0.0
      %396 = vst [vmem:[#allocation2 + $0x40] sm:$0xff] 0.0
      %397 = vst [vmem:[#allocation2 + $0x48] sm:$0x3] 0.0
      %398 = vst [vmem:[#allocation2 + $0x50] sm:$0xff] 0.0
      %399 = vst [vmem:[#allocation2 + $0x58] sm:$0x3] 0.0
      %400 = vst [vmem:[#allocation2 + $0x60] sm:$0xff] 0.0
      %401 = vst [vmem:[#allocation2 + $0x68] sm:$0x3] 0.0
      %402 = vst [vmem:[#allocation2 + $0x70] sm:$0xff] 0.0
      %403 = vst [vmem:[#allocation2 + $0x78] sm:$0x3] 0.0
      %404 = vst [vmem:[#allocation2 + $0x80] sm:$0xff] 0.0
      %405 = vst [vmem:[#allocation2 + $0x88] sm:$0x3] 0.0
      %406 = vst [vmem:[#allocation2 + $0x90] sm:$0xff] 0.0
      %407 = vst [vmem:[#allocation2 + $0x98] sm:$0x3] 0.0
      %408 = vst [vmem:[#allocation3] sm:$0xff] 0.0
      %409 = vst [vmem:[#allocation3 + $0x8] sm:$0x3] 0.0
      %410 = vst [vmem:[#allocation3 + $0x10] sm:$0xff] 0.0
      %411 = vst [vmem:[#allocation3 + $0x18] sm:$0x3] 0.0
      %412 = vst [vmem:[#allocation3 + $0x20] sm:$0xff] 0.0
      %413 = vst [vmem:[#allocation3 + $0x28] sm:$0x3] 0.0
      %414 = vst [vmem:[#allocation3 + $0x30] sm:$0xff] 0.0
      %415 = vst [vmem:[#allocation3 + $0x38] sm:$0x3] 0.0
      %416 = vst [vmem:[#allocation3 + $0x40] sm:$0xff] 0.0
      %417 = vst [vmem:[#allocation3 + $0x48] sm:$0x3] 0.0
      %418 = vst [vmem:[#allocation3 + $0x50] sm:$0xff] 0.0
      %419 = vst [vmem:[#allocation3 + $0x58] sm:$0x3] 0.0
      %420 = vst [vmem:[#allocation3 + $0x60] sm:$0xff] 0.0
      %421 = vst [vmem:[#allocation3 + $0x68] sm:$0x3] 0.0
      %422 = vst [vmem:[#allocation3 + $0x70] sm:$0xff] 0.0
      %423 = vst [vmem:[#allocation3 + $0x78] sm:$0x3] 0.0
      %424 = vst [vmem:[#allocation3 + $0x80] sm:$0xff] 0.0
      %425 = vst [vmem:[#allocation3 + $0x88] sm:$0x3] 0.0
      %426 = vst [vmem:[#allocation3 + $0x90] sm:$0xff] 0.0
      %427 = vst [vmem:[#allocation3 + $0x98] sm:$0x3] 0.0
      %428 = vst [vmem:[#allocation4] sm:$0xff] 0.0
      %429 = vst [vmem:[#allocation4 + $0x8] sm:$0x3] 0.0
      %430 = vst [vmem:[#allocation4 + $0x10] sm:$0xff] 0.0
      %431 = vst [vmem:[#allocation4 + $0x18] sm:$0x3] 0.0
      %432 = vst [vmem:[#allocation4 + $0x20] sm:$0xff] 0.0
      %433 = vst [vmem:[#allocation4 + $0x28] sm:$0x3] 0.0
      %434 = vst [vmem:[#allocation4 + $0x30] sm:$0xff] 0.0
      %435 = vst [vmem:[#allocation4 + $0x38] sm:$0x3] 0.0
      %436 = vst [vmem:[#allocation4 + $0x40] sm:$0xff] 0.0
      %437 = vst [vmem:[#allocation4 + $0x48] sm:$0x3] 0.0
      %438 = vst [vmem:[#allocation4 + $0x50] sm:$0xff] 0.0
      %439 = vst [vmem:[#allocation4 + $0x58] sm:$0x3] 0.0
      %440 = vst [vmem:[#allocation4 + $0x60] sm:$0xff] 0.0
      %441 = vst [vmem:[#allocation4 + $0x68] sm:$0x3] 0.0
      %442 = vst [vmem:[#allocation4 + $0x70] sm:$0xff] 0.0
      %443 = vst [vmem:[#allocation4 + $0x78] sm:$0x3] 0.0
      %444 = vst [vmem:[#allocation4 + $0x80] sm:$0xff] 0.0
      %445 = vst [vmem:[#allocation4 + $0x88] sm:$0x3] 0.0
      %446 = vst [vmem:[#allocation4 + $0x90] sm:$0xff] 0.0
      %447 = vst [vmem:[#allocation4 + $0x98] sm:$0x3] 0.0
      %s448 = scalar_lea.vmem %s381, 216
      %v449 = vld [vmem:[%s448] sm:$0xf]
      %v450 = vld [vmem:[%s448 + $0x8] sm:$0xf]
      %v451 = vld [vmem:[%s448 + $0x10] sm:$0xf]
      %v452 = vld [vmem:[%s448 + $0x18] sm:$0xf]
      %v453 = vld [vmem:[%s448 + $0x20] sm:$0xf]
      %v454 = vld [vmem:[%s448 + $0x28] sm:$0xf]
      %v455 = vld [vmem:[%s448 + $0x30] sm:$0xf]
      %v456 = vld [vmem:[%s448 + $0x38] sm:$0xf]
      %v457 = vld [vmem:[%s381] sm:$0xf]
      %v458 = vld [vmem:[%s381 + $0x8] sm:$0xf]
      %v459 = vld [vmem:[%s381 + $0x10] sm:$0xf]
      %v460 = vld [vmem:[%s381 + $0x18] sm:$0xf]
      %v461 = vld [vmem:[%s381 + $0x20] sm:$0xf]
      %v462 = vld [vmem:[%s381 + $0x28] sm:$0xf]
      %v463 = vld [vmem:[%s381 + $0x30] sm:$0xf]
      %v464 = vld [vmem:[%s381 + $0x38] sm:$0xf]
      %s465 = scalar_lea.vmem %s381, 72
      %v466 = vld [vmem:[%s465] sm:$0xf]
      %v467 = vld [vmem:[%s465 + $0x8] sm:$0xf]
      %v468 = vld [vmem:[%s465 + $0x10] sm:$0xf]
      %v469 = vld [vmem:[%s465 + $0x18] sm:$0xf]
      %v470 = vld [vmem:[%s465 + $0x20] sm:$0xf]
      %v471 = vld [vmem:[%s465 + $0x28] sm:$0xf]
      %v472 = vld [vmem:[%s465 + $0x30] sm:$0xf]
      %v473 = vld [vmem:[%s465 + $0x38] sm:$0xf]
      %v474 = vld [vmem:[%s381 + $0x4] sm:$0x1]
      %v475 = vld [vmem:[%s381 + $0xc] sm:$0x1]
      %v476 = vld [vmem:[%s381 + $0x14] sm:$0x1]
      %v477 = vld [vmem:[%s381 + $0x1c] sm:$0x1]
      %v478 = vld [vmem:[%s381 + $0x24] sm:$0x1]
      %v479 = vld [vmem:[%s381 + $0x2c] sm:$0x1]
      %v480 = vld [vmem:[%s381 + $0x34] sm:$0x1]
      %v481 = vld [vmem:[%s381 + $0x3c] sm:$0x1]
      %vm482 = vsmask.f32 3328
      %vm483 = vsmask.f32 7440
      %vm484 = vmor %vm482, %vm483
      %v486 = vshrl.u32 %v457, 16
      %v488 = vrot.slane %v486, 4
      %v489 = vshll.u32 %v457, 16
      %v491 = vrot.slane %v489, 5
      %v492 = vor.u32 %v488, %v491
      %v493 = vrot.slane %v492, 4
      %v495 = vshll.u32 %v474, 16
      %v497 = vrot.slane %v495, 5
      %v498 = vsel %vm484, %v493, %v497
      %v500 = vshrl.u32 %v458, 16
      %v502 = vrot.slane %v500, 4
      %v503 = vshll.u32 %v458, 16
      %v505 = vrot.slane %v503, 5
      %v506 = vor.u32 %v502, %v505
      %v507 = vrot.slane %v506, 4
      %v509 = vshll.u32 %v475, 16
      %v511 = vrot.slane %v509, 5
      %v512 = vsel %vm484, %v507, %v511
      %v514 = vshrl.u32 %v459, 16
      %v516 = vrot.slane %v514, 4
      %v517 = vshll.u32 %v459, 16
      %v519 = vrot.slane %v517, 5
      %v520 = vor.u32 %v516, %v519
      %v521 = vrot.slane %v520, 4
      %v523 = vshll.u32 %v476, 16
      %v525 = vrot.slane %v523, 5
      %v526 = vsel %vm484, %v521, %v525
      %v528 = vshrl.u32 %v460, 16
      %v530 = vrot.slane %v528, 4
      %v531 = vshll.u32 %v460, 16
      %v533 = vrot.slane %v531, 5
      %v534 = vor.u32 %v530, %v533
      %v535 = vrot.slane %v534, 4
      %v537 = vshll.u32 %v477, 16
      %v539 = vrot.slane %v537, 5
      %v540 = vsel %vm484, %v535, %v539
      %v542 = vshrl.u32 %v461, 16
      %v544 = vrot.slane %v542, 4
      %v545 = vshll.u32 %v461, 16
      %v547 = vrot.slane %v545, 5
      %v548 = vor.u32 %v544, %v547
      %v549 = vrot.slane %v548, 4
      %v551 = vshll.u32 %v478, 16
      %v553 = vrot.slane %v551, 5
      %v554 = vsel %vm484, %v549, %v553
      %v556 = vshrl.u32 %v462, 16
      %v558 = vrot.slane %v556, 4
      %v559 = vshll.u32 %v462, 16
      %v561 = vrot.slane %v559, 5
      %v562 = vor.u32 %v558, %v561
      %v563 = vrot.slane %v562, 4
      %v565 = vshll.u32 %v479, 16
      %v567 = vrot.slane %v565, 5
      %v568 = vsel %vm484, %v563, %v567
      %v570 = vshrl.u32 %v463, 16
      %v572 = vrot.slane %v570, 4
      %v573 = vshll.u32 %v463, 16
      %v575 = vrot.slane %v573, 5
      %v576 = vor.u32 %v572, %v575
      %v577 = vrot.slane %v576, 4
      %v579 = vshll.u32 %v480, 16
      %v581 = vrot.slane %v579, 5
      %v582 = vsel %vm484, %v577, %v581
      %v584 = vshrl.u32 %v464, 16
      %v586 = vrot.slane %v584, 4
      %v587 = vshll.u32 %v464, 16
      %v589 = vrot.slane %v587, 5
      %v590 = vor.u32 %v586, %v589
      %v591 = vrot.slane %v590, 4
      %v593 = vshll.u32 %v481, 16
      %v595 = vrot.slane %v593, 5
      %v596 = vsel %vm484, %v591, %v595
      %s597 = scalar_lea.vmem %s381, 144
      %v598 = vld [vmem:[%s597] sm:$0xf]
      %v599 = vld [vmem:[%s597 + $0x8] sm:$0xf]
      %v600 = vld [vmem:[%s597 + $0x10] sm:$0xf]
      %v601 = vld [vmem:[%s597 + $0x18] sm:$0xf]
      %v602 = vld [vmem:[%s597 + $0x20] sm:$0xf]
      %v603 = vld [vmem:[%s597 + $0x28] sm:$0xf]
      %v604 = vld [vmem:[%s597 + $0x30] sm:$0xf]
      %v605 = vld [vmem:[%s597 + $0x38] sm:$0xf]
      %v606 = vld [vmem:[%s597 + $0x4] sm:$0x1]
      %v607 = vld [vmem:[%s597 + $0xc] sm:$0x1]
      %v608 = vld [vmem:[%s597 + $0x14] sm:$0x1]
      %v609 = vld [vmem:[%s597 + $0x1c] sm:$0x1]
      %v610 = vld [vmem:[%s597 + $0x24] sm:$0x1]
      %v611 = vld [vmem:[%s597 + $0x2c] sm:$0x1]
      %v612 = vld [vmem:[%s597 + $0x34] sm:$0x1]
      %v613 = vld [vmem:[%s597 + $0x3c] sm:$0x1]
      %v615 = vshrl.u32 %v598, 16
      %v617 = vrot.slane %v615, 4
      %v618 = vshll.u32 %v598, 16
      %v620 = vrot.slane %v618, 5
      %v621 = vor.u32 %v617, %v620
      %v622 = vrot.slane %v621, 4
      %v624 = vshll.u32 %v606, 16
      %v626 = vrot.slane %v624, 5
      %v627 = vsel %vm484, %v622, %v626
      %v629 = vshrl.u32 %v599, 16
      %v631 = vrot.slane %v629, 4
      %v632 = vshll.u32 %v599, 16
      %v634 = vrot.slane %v632, 5
      %v635 = vor.u32 %v631, %v634
      %v636 = vrot.slane %v635, 4
      %v638 = vshll.u32 %v607, 16
      %v640 = vrot.slane %v638, 5
      %v641 = vsel %vm484, %v636, %v640
      %v643 = vshrl.u32 %v600, 16
      %v645 = vrot.slane %v643, 4
      %v646 = vshll.u32 %v600, 16
      %v648 = vrot.slane %v646, 5
      %v649 = vor.u32 %v645, %v648
      %v650 = vrot.slane %v649, 4
      %v652 = vshll.u32 %v608, 16
      %v654 = vrot.slane %v652, 5
      %v655 = vsel %vm484, %v650, %v654
      %v657 = vshrl.u32 %v601, 16
      %v659 = vrot.slane %v657, 4
      %v660 = vshll.u32 %v601, 16
      %v662 = vrot.slane %v660, 5
      %v663 = vor.u32 %v659, %v662
      %v664 = vrot.slane %v663, 4
      %v666 = vshll.u32 %v609, 16
      %v668 = vrot.slane %v666, 5
      %v669 = vsel %vm484, %v664, %v668
      %v671 = vshrl.u32 %v602, 16
      %v673 = vrot.slane %v671, 4
      %v674 = vshll.u32 %v602, 16
      %v676 = vrot.slane %v674, 5
      %v677 = vor.u32 %v673, %v676
      %v678 = vrot.slane %v677, 4
      %v680 = vshll.u32 %v610, 16
      %v682 = vrot.slane %v680, 5
      %v683 = vsel %vm484, %v678, %v682
      %v685 = vshrl.u32 %v603, 16
      %v687 = vrot.slane %v685, 4
      %v688 = vshll.u32 %v603, 16
      %v690 = vrot.slane %v688, 5
      %v691 = vor.u32 %v687, %v690
      %v692 = vrot.slane %v691, 4
      %v694 = vshll.u32 %v611, 16
      %v696 = vrot.slane %v694, 5
      %v697 = vsel %vm484, %v692, %v696
      %v699 = vshrl.u32 %v604, 16
      %v701 = vrot.slane %v699, 4
      %v702 = vshll.u32 %v604, 16
      %v704 = vrot.slane %v702, 5
      %v705 = vor.u32 %v701, %v704
      %v706 = vrot.slane %v705, 4
      %v708 = vshll.u32 %v612, 16
      %v710 = vrot.slane %v708, 5
      %v711 = vsel %vm484, %v706, %v710
      %v713 = vshrl.u32 %v605, 16
      %v715 = vrot.slane %v713, 4
      %v716 = vshll.u32 %v605, 16
      %v718 = vrot.slane %v716, 5
      %v719 = vor.u32 %v715, %v718
      %v720 = vrot.slane %v719, 4
      %v722 = vshll.u32 %v613, 16
      %v724 = vrot.slane %v722, 5
      %v725 = vsel %vm484, %v720, %v724
      %s726 = scalar_lea.vmem %s381, 8
      %v727 = vld [vmem:[%s726] sm:$0xf]
      %v728 = vld [vmem:[%s726 + $0x8] sm:$0xf]
      %v729 = vld [vmem:[%s726 + $0x10] sm:$0xf]
      %v730 = vld [vmem:[%s726 + $0x18] sm:$0xf]
      %v731 = vld [vmem:[%s726 + $0x20] sm:$0xf]
      %v732 = vld [vmem:[%s726 + $0x28] sm:$0xf]
      %v733 = vld [vmem:[%s726 + $0x30] sm:$0xf]
      %v734 = vld [vmem:[%s726 + $0x38] sm:$0xf]
      %s735 = scalar_lea.vmem %s381, 80
      %v736 = vld [vmem:[%s735] sm:$0xf]
      %v737 = vld [vmem:[%s735 + $0x8] sm:$0xf]
      %v738 = vld [vmem:[%s735 + $0x10] sm:$0xf]
      %v739 = vld [vmem:[%s735 + $0x18] sm:$0xf]
      %v740 = vld [vmem:[%s735 + $0x20] sm:$0xf]
      %v741 = vld [vmem:[%s735 + $0x28] sm:$0xf]
      %v742 = vld [vmem:[%s735 + $0x30] sm:$0xf]
      %v743 = vld [vmem:[%s735 + $0x38] sm:$0xf]
      %v744 = vld [vmem:[%s726 + $0x4] sm:$0x1]
      %v745 = vld [vmem:[%s726 + $0xc] sm:$0x1]
      %v746 = vld [vmem:[%s726 + $0x14] sm:$0x1]
      %v747 = vld [vmem:[%s726 + $0x1c] sm:$0x1]
      %v748 = vld [vmem:[%s726 + $0x24] sm:$0x1]
      %v749 = vld [vmem:[%s726 + $0x2c] sm:$0x1]
      %v750 = vld [vmem:[%s726 + $0x34] sm:$0x1]
      %v751 = vld [vmem:[%s726 + $0x3c] sm:$0x1]
      %v753 = vshrl.u32 %v727, 16
      %v755 = vrot.slane %v753, 4
      %v756 = vshll.u32 %v727, 16
      %v758 = vrot.slane %v756, 5
      %v759 = vor.u32 %v755, %v758
      %v760 = vrot.slane %v759, 4
      %v762 = vshll.u32 %v744, 16
      %v764 = vrot.slane %v762, 5
      %v765 = vsel %vm484, %v760, %v764
      %v767 = vshrl.u32 %v728, 16
      %v769 = vrot.slane %v767, 4
      %v770 = vshll.u32 %v728, 16
      %v772 = vrot.slane %v770, 5
      %v773 = vor.u32 %v769, %v772
      %v774 = vrot.slane %v773, 4
      %v776 = vshll.u32 %v745, 16
      %v778 = vrot.slane %v776, 5
      %v779 = vsel %vm484, %v774, %v778
      %v781 = vshrl.u32 %v729, 16
      %v783 = vrot.slane %v781, 4
      %v784 = vshll.u32 %v729, 16
      %v786 = vrot.slane %v784, 5
      %v787 = vor.u32 %v783, %v786
      %v788 = vrot.slane %v787, 4
      %v790 = vshll.u32 %v746, 16
      %v792 = vrot.slane %v790, 5
      %v793 = vsel %vm484, %v788, %v792
      %v795 = vshrl.u32 %v730, 16
      %v797 = vrot.slane %v795, 4
      %v798 = vshll.u32 %v730, 16
      %v800 = vrot.slane %v798, 5
      %v801 = vor.u32 %v797, %v800
      %v802 = vrot.slane %v801, 4
      %v804 = vshll.u32 %v747, 16
      %v806 = vrot.slane %v804, 5
      %v807 = vsel %vm484, %v802, %v806
      %v809 = vshrl.u32 %v731, 16
      %v811 = vrot.slane %v809, 4
      %v812 = vshll.u32 %v731, 16
      %v814 = vrot.slane %v812, 5
      %v815 = vor.u32 %v811, %v814
      %v816 = vrot.slane %v815, 4
      %v818 = vshll.u32 %v748, 16
      %v820 = vrot.slane %v818, 5
      %v821 = vsel %vm484, %v816, %v820
      %v823 = vshrl.u32 %v732, 16
      %v825 = vrot.slane %v823, 4
      %v826 = vshll.u32 %v732, 16
      %v828 = vrot.slane %v826, 5
      %v829 = vor.u32 %v825, %v828
      %v830 = vrot.slane %v829, 4
      %v832 = vshll.u32 %v749, 16
      %v834 = vrot.slane %v832, 5
      %v835 = vsel %vm484, %v830, %v834
      %v837 = vshrl.u32 %v733, 16
      %v839 = vrot.slane %v837, 4
      %v840 = vshll.u32 %v733, 16
      %v842 = vrot.slane %v840, 5
      %v843 = vor.u32 %v839, %v842
      %v844 = vrot.slane %v843, 4
      %v846 = vshll.u32 %v750, 16
      %v848 = vrot.slane %v846, 5
      %v849 = vsel %vm484, %v844, %v848
      %v851 = vshrl.u32 %v734, 16
      %v853 = vrot.slane %v851, 4
      %v854 = vshll.u32 %v734, 16
      %v856 = vrot.slane %v854, 5
      %v857 = vor.u32 %v853, %v856
      %v858 = vrot.slane %v857, 4
      %v860 = vshll.u32 %v751, 16
      %v862 = vrot.slane %v860, 5
      %v863 = vsel %vm484, %v858, %v862
      %v872 = vunpack.c.l.b16 %v457
      %v873 = vunpack.c.l.b16 %v458
      %v874 = vunpack.c.l.b16 %v459
      %v875 = vunpack.c.l.b16 %v460
      %v876 = vunpack.c.l.b16 %v461
      %v877 = vunpack.c.l.b16 %v462
      %v878 = vunpack.c.l.b16 %v463
      %v879 = vunpack.c.l.b16 %v464
      %v880 = vpack.c.b16 %v873, %v872
      %v881 = vpack.c.b16 %v875, %v874
      %v882 = vpack.c.b16 %v877, %v876
      %v883 = vpack.c.b16 %v879, %v878
      %v896 = vunpack.c.l.b16 %v466
      %v897 = vunpack.c.l.b16 %v467
      %v898 = vunpack.c.l.b16 %v468
      %v899 = vunpack.c.l.b16 %v469
      %v900 = vunpack.c.l.b16 %v470
      %v901 = vunpack.c.l.b16 %v471
      %v902 = vunpack.c.l.b16 %v472
      %v903 = vunpack.c.l.b16 %v473
      %v904 = vpack.c.b16 %v897, %v896
      %v905 = vpack.c.b16 %v899, %v898
      %v906 = vpack.c.b16 %v901, %v900
      %v907 = vpack.c.b16 %v903, %v902
      %v912 = vunpack.c.l.b16 %v498
      %v913 = vunpack.c.l.b16 %v512
      %v914 = vunpack.c.l.b16 %v526
      %v915 = vunpack.c.l.b16 %v540
      %v916 = vunpack.c.l.b16 %v554
      %v917 = vunpack.c.l.b16 %v568
      %v918 = vunpack.c.l.b16 %v582
      %v919 = vunpack.c.l.b16 %v596
      %v920 = vpack.c.b16 %v913, %v912
      %v921 = vpack.c.b16 %v915, %v914
      %v922 = vpack.c.b16 %v917, %v916
      %v923 = vpack.c.b16 %v919, %v918
      %v936 = vunpack.c.l.b16 %v598
      %v937 = vunpack.c.l.b16 %v599
      %v938 = vunpack.c.l.b16 %v600
      %v939 = vunpack.c.l.b16 %v601
      %v940 = vunpack.c.l.b16 %v602
      %v941 = vunpack.c.l.b16 %v603
      %v942 = vunpack.c.l.b16 %v604
      %v943 = vunpack.c.l.b16 %v605
      %v944 = vpack.c.b16 %v937, %v936
      %v945 = vpack.c.b16 %v939, %v938
      %v946 = vpack.c.b16 %v941, %v940
      %v947 = vpack.c.b16 %v943, %v942
      %v960 = vunpack.c.l.b16 %v449
      %v961 = vunpack.c.l.b16 %v450
      %v962 = vunpack.c.l.b16 %v451
      %v963 = vunpack.c.l.b16 %v452
      %v964 = vunpack.c.l.b16 %v453
      %v965 = vunpack.c.l.b16 %v454
      %v966 = vunpack.c.l.b16 %v455
      %v967 = vunpack.c.l.b16 %v456
      %v968 = vpack.c.b16 %v961, %v960
      %v969 = vpack.c.b16 %v963, %v962
      %v970 = vpack.c.b16 %v965, %v964
      %v971 = vpack.c.b16 %v967, %v966
      %v976 = vunpack.c.l.b16 %v627
      %v977 = vunpack.c.l.b16 %v641
      %v978 = vunpack.c.l.b16 %v655
      %v979 = vunpack.c.l.b16 %v669
      %v980 = vunpack.c.l.b16 %v683
      %v981 = vunpack.c.l.b16 %v697
      %v982 = vunpack.c.l.b16 %v711
      %v983 = vunpack.c.l.b16 %v725
      %v984 = vpack.c.b16 %v977, %v976
      %v985 = vpack.c.b16 %v979, %v978
      %v986 = vpack.c.b16 %v981, %v980
      %v987 = vpack.c.b16 %v983, %v982
      %v1000 = vunpack.c.l.b16 %v727
      %v1001 = vunpack.c.l.b16 %v728
      %v1002 = vunpack.c.l.b16 %v729
      %v1003 = vunpack.c.l.b16 %v730
      %v1004 = vunpack.c.l.b16 %v731
      %v1005 = vunpack.c.l.b16 %v732
      %v1006 = vunpack.c.l.b16 %v733
      %v1007 = vunpack.c.l.b16 %v734
      %v1008 = vpack.c.b16 %v1001, %v1000
      %v1009 = vpack.c.b16 %v1003, %v1002
      %v1010 = vpack.c.b16 %v1005, %v1004
      %v1011 = vpack.c.b16 %v1007, %v1006
      %v1024 = vunpack.c.l.b16 %v736
      %v1025 = vunpack.c.l.b16 %v737
      %v1026 = vunpack.c.l.b16 %v738
      %v1027 = vunpack.c.l.b16 %v739
      %v1028 = vunpack.c.l.b16 %v740
      %v1029 = vunpack.c.l.b16 %v741
      %v1030 = vunpack.c.l.b16 %v742
      %v1031 = vunpack.c.l.b16 %v743
      %v1032 = vpack.c.b16 %v1025, %v1024
      %v1033 = vpack.c.b16 %v1027, %v1026
      %v1034 = vpack.c.b16 %v1029, %v1028
      %v1035 = vpack.c.b16 %v1031, %v1030
      %v1040 = vunpack.c.l.b16 %v765
      %v1041 = vunpack.c.l.b16 %v779
      %v1042 = vunpack.c.l.b16 %v793
      %v1043 = vunpack.c.l.b16 %v807
      %v1044 = vunpack.c.l.b16 %v821
      %v1045 = vunpack.c.l.b16 %v835
      %v1046 = vunpack.c.l.b16 %v849
      %v1047 = vunpack.c.l.b16 %v863
      %v1048 = vpack.c.b16 %v1041, %v1040
      %v1049 = vpack.c.b16 %v1043, %v1042
      %v1050 = vpack.c.b16 %v1045, %v1044
      %v1051 = vpack.c.b16 %v1047, %v1046
      %v1056 = vld [vmem:[%s1] sm:$0xf]
      %v1057 = vld [vmem:[%s1 + $0x4] sm:$0xf]
      %v1058 = vld [vmem:[%s1 + $0x8] sm:$0xf]
      %v1059 = vld [vmem:[%s1 + $0xc] sm:$0xf]
      %v1060 = vld [vmem:[%s1 + $0x10] sm:$0xf]
      %v1061 = vld [vmem:[%s1 + $0x14] sm:$0xf]
      %v1062 = vld [vmem:[%s1 + $0x18] sm:$0xf]
      %v1063 = vld [vmem:[%s1 + $0x1c] sm:$0xf]
      %v1064 = vld [vmem:[%s1 + $0x20] sm:$0xf]
      %v1065 = vld [vmem:[%s1 + $0x24] sm:$0xf]
      %v1066 = vld [vmem:[%s1 + $0x28] sm:$0xf]
      %v1067 = vld [vmem:[%s1 + $0x2c] sm:$0xf]
      %v1068 = vld [vmem:[%s1 + $0x30] sm:$0xf]
      %v1069 = vld [vmem:[%s1 + $0x34] sm:$0xf]
      %v1070 = vld [vmem:[%s1 + $0x38] sm:$0xf]
      %v1071 = vld [vmem:[%s1 + $0x3c] sm:$0xf]
      %v1072 = vld [vmem:[%s1 + $0x40] sm:$0xf]
      %v1073 = vld [vmem:[%s1 + $0x44] sm:$0xf]
      %v1074 = vld [vmem:[%s1 + $0x48] sm:$0xf]
      %v1075 = vld [vmem:[%s1 + $0x4c] sm:$0xf]
      %v1076 = vld [vmem:[%s1 + $0x50] sm:$0xf]
      %v1077 = vld [vmem:[%s1 + $0x54] sm:$0xf]
      %v1078 = vld [vmem:[%s1 + $0x58] sm:$0xf]
      %v1079 = vld [vmem:[%s1 + $0x5c] sm:$0xf]
      %v1080 = vld [vmem:[%s1 + $0x60] sm:$0xf]
      %v1081 = vld [vmem:[%s1 + $0x64] sm:$0xf]
      %v1082 = vld [vmem:[%s1 + $0x68] sm:$0xf]
      %v1083 = vld [vmem:[%s1 + $0x6c] sm:$0xf]
      %v1084 = vld [vmem:[%s1 + $0x70] sm:$0xf]
      %v1085 = vld [vmem:[%s1 + $0x74] sm:$0xf]
      %v1086 = vld [vmem:[%s1 + $0x78] sm:$0xf]
      %v1087 = vld [vmem:[%s1 + $0x7c] sm:$0xf]
      %v1088 = vld [vmem:[%s1 + $0x80] sm:$0xf]
      %v1089 = vld [vmem:[%s1 + $0x84] sm:$0xf]
      %v1090 = vld [vmem:[%s1 + $0x88] sm:$0xf]
      %v1091 = vld [vmem:[%s1 + $0x8c] sm:$0xf]
      %v1092 = vld [vmem:[%s1 + $0x90] sm:$0xf]
      %v1093 = vld [vmem:[%s1 + $0x94] sm:$0xf]
      %v1094 = vld [vmem:[%s1 + $0x98] sm:$0xf]
      %v1095 = vld [vmem:[%s1 + $0x9c] sm:$0xf]
      %v1096 = vld [vmem:[%s1 + $0xa0] sm:$0xf]
      %v1097 = vld [vmem:[%s1 + $0xa4] sm:$0xf]
      %v1098 = vld [vmem:[%s1 + $0xa8] sm:$0xf]
      %v1099 = vld [vmem:[%s1 + $0xac] sm:$0xf]
      %v1100 = vld [vmem:[%s1 + $0xb0] sm:$0xf]
      %v1101 = vld [vmem:[%s1 + $0xb4] sm:$0xf]
      %v1102 = vld [vmem:[%s1 + $0xb8] sm:$0xf]
      %v1103 = vld [vmem:[%s1 + $0xbc] sm:$0xf]
      %v1104 = vld [vmem:[%s1 + $0xc0] sm:$0xf]
      %v1105 = vld [vmem:[%s1 + $0xc4] sm:$0xf]
      %v1106 = vld [vmem:[%s1 + $0xc8] sm:$0xf]
      %v1107 = vld [vmem:[%s1 + $0xcc] sm:$0xf]
      %v1108 = vld [vmem:[%s1 + $0xd0] sm:$0xf]
      %v1109 = vld [vmem:[%s1 + $0xd4] sm:$0xf]
      %v1110 = vld [vmem:[%s1 + $0xd8] sm:$0xf]
      %v1111 = vld [vmem:[%s1 + $0xdc] sm:$0xf]
      %v1112 = vld [vmem:[%s1 + $0xe0] sm:$0xf]
      %v1113 = vld [vmem:[%s1 + $0xe4] sm:$0xf]
      %v1114 = vld [vmem:[%s1 + $0xe8] sm:$0xf]
      %v1115 = vld [vmem:[%s1 + $0xec] sm:$0xf]
      %v1116 = vld [vmem:[%s1 + $0xf0] sm:$0xf]
      %v1117 = vld [vmem:[%s1 + $0xf4] sm:$0xf]
      %v1118 = vld [vmem:[%s1 + $0xf8] sm:$0xf]
      %v1119 = vld [vmem:[%s1 + $0xfc] sm:$0xf]
      %v1120 = vld [vmem:[%s1 + $0x100] sm:$0xf]
      %v1121 = vld [vmem:[%s1 + $0x104] sm:$0xf]
      %v1122 = vld [vmem:[%s1 + $0x108] sm:$0xf]
      %v1123 = vld [vmem:[%s1 + $0x10c] sm:$0xf]
      %v1124 = vld [vmem:[%s1 + $0x110] sm:$0xf]
      %v1125 = vld [vmem:[%s1 + $0x114] sm:$0xf]
      %v1126 = vld [vmem:[%s1 + $0x118] sm:$0xf]
      %v1127 = vld [vmem:[%s1 + $0x11c] sm:$0xf]
      %v1128 = vld [vmem:[%s1 + $0x120] sm:$0xf]
      %v1129 = vld [vmem:[%s1 + $0x124] sm:$0xf]
      %v1130 = vld [vmem:[%s1 + $0x128] sm:$0xf]
      %v1131 = vld [vmem:[%s1 + $0x12c] sm:$0xf]
      %v1132 = vld [vmem:[%s1 + $0x130] sm:$0xf]
      %v1133 = vld [vmem:[%s1 + $0x134] sm:$0xf]
      %v1134 = vld [vmem:[%s1 + $0x138] sm:$0xf]
      %v1135 = vld [vmem:[%s1 + $0x13c] sm:$0xf]
      %v1136 = vld [vmem:[%s1 + $0x140] sm:$0xf]
      %v1137 = vld [vmem:[%s1 + $0x144] sm:$0xf]
      %v1138 = vld [vmem:[%s1 + $0x148] sm:$0xf]
      %v1139 = vld [vmem:[%s1 + $0x14c] sm:$0xf]
      %v1140 = vld [vmem:[%s1 + $0x150] sm:$0xf]
      %v1141 = vld [vmem:[%s1 + $0x154] sm:$0xf]
      %v1142 = vld [vmem:[%s1 + $0x158] sm:$0xf]
      %v1143 = vld [vmem:[%s1 + $0x15c] sm:$0xf]
      %v1144 = vld [vmem:[%s1 + $0x160] sm:$0xf]
      %v1145 = vld [vmem:[%s1 + $0x164] sm:$0xf]
      %v1146 = vld [vmem:[%s1 + $0x168] sm:$0xf]
      %v1147 = vld [vmem:[%s1 + $0x16c] sm:$0xf]
      %v1148 = vld [vmem:[%s1 + $0x170] sm:$0xf]
      %v1149 = vld [vmem:[%s1 + $0x174] sm:$0xf]
      %v1150 = vld [vmem:[%s1 + $0x178] sm:$0xf]
      %v1151 = vld [vmem:[%s1 + $0x17c] sm:$0xf]
      %v1152 = vld [vmem:[%s1 + $0x180] sm:$0xf]
      %v1153 = vld [vmem:[%s1 + $0x184] sm:$0xf]
      %v1154 = vld [vmem:[%s1 + $0x188] sm:$0xf]
      %v1155 = vld [vmem:[%s1 + $0x18c] sm:$0xf]
      %v1156 = vld [vmem:[%s1 + $0x190] sm:$0xf]
      %v1157 = vld [vmem:[%s1 + $0x194] sm:$0xf]
      %v1158 = vld [vmem:[%s1 + $0x198] sm:$0xf]
      %v1159 = vld [vmem:[%s1 + $0x19c] sm:$0xf]
      %v1160 = vld [vmem:[%s1 + $0x1a0] sm:$0xf]
      %v1161 = vld [vmem:[%s1 + $0x1a4] sm:$0xf]
      %v1162 = vld [vmem:[%s1 + $0x1a8] sm:$0xf]
      %v1163 = vld [vmem:[%s1 + $0x1ac] sm:$0xf]
      %v1164 = vld [vmem:[%s1 + $0x1b0] sm:$0xf]
      %v1165 = vld [vmem:[%s1 + $0x1b4] sm:$0xf]
      %v1166 = vld [vmem:[%s1 + $0x1b8] sm:$0xf]
      %v1167 = vld [vmem:[%s1 + $0x1bc] sm:$0xf]
      %v1168 = vld [vmem:[%s1 + $0x1c0] sm:$0xf]
      %v1169 = vld [vmem:[%s1 + $0x1c4] sm:$0xf]
      %v1170 = vld [vmem:[%s1 + $0x1c8] sm:$0xf]
      %v1171 = vld [vmem:[%s1 + $0x1cc] sm:$0xf]
      %v1172 = vld [vmem:[%s1 + $0x1d0] sm:$0xf]
      %v1173 = vld [vmem:[%s1 + $0x1d4] sm:$0xf]
      %v1174 = vld [vmem:[%s1 + $0x1d8] sm:$0xf]
      %v1175 = vld [vmem:[%s1 + $0x1dc] sm:$0xf]
      %v1176 = vld [vmem:[%s1 + $0x1e0] sm:$0xf]
      %v1177 = vld [vmem:[%s1 + $0x1e4] sm:$0xf]
      %v1178 = vld [vmem:[%s1 + $0x1e8] sm:$0xf]
      %v1179 = vld [vmem:[%s1 + $0x1ec] sm:$0xf]
      %v1180 = vld [vmem:[%s1 + $0x1f0] sm:$0xf]
      %v1181 = vld [vmem:[%s1 + $0x1f4] sm:$0xf]
      %v1182 = vld [vmem:[%s1 + $0x1f8] sm:$0xf]
      %v1183 = vld [vmem:[%s1 + $0x1fc] sm:$0xf]
      %v1184 = vld [vmem:[%s1 + $0x200] sm:$0xf]
      %v1185 = vld [vmem:[%s1 + $0x204] sm:$0xf]
      %v1186 = vld [vmem:[%s1 + $0x208] sm:$0xf]
      %v1187 = vld [vmem:[%s1 + $0x20c] sm:$0xf]
      %v1188 = vld [vmem:[%s1 + $0x210] sm:$0xf]
      %v1189 = vld [vmem:[%s1 + $0x214] sm:$0xf]
      %v1190 = vld [vmem:[%s1 + $0x218] sm:$0xf]
      %v1191 = vld [vmem:[%s1 + $0x21c] sm:$0xf]
      %v1192 = vld [vmem:[%s1 + $0x220] sm:$0xf]
      %v1193 = vld [vmem:[%s1 + $0x224] sm:$0xf]
      %v1194 = vld [vmem:[%s1 + $0x228] sm:$0xf]
      %v1195 = vld [vmem:[%s1 + $0x22c] sm:$0xf]
      %v1196 = vld [vmem:[%s1 + $0x230] sm:$0xf]
      %v1197 = vld [vmem:[%s1 + $0x234] sm:$0xf]
      %v1198 = vld [vmem:[%s1 + $0x238] sm:$0xf]
      %v1199 = vld [vmem:[%s1 + $0x23c] sm:$0xf]
      %v1200 = vld [vmem:[%s2] sm:$0x1]
      %v1202 = vlaneseq
      %v1203 = vshrl.u32 %v1202, 7
      %v1204 = vsub.s32 0, %v1203
      %v1205 = vrot.slane %v1200, %v1204
      %v1351 = vunpack.c.l.b16 %v1056
      %v1352 = vunpack.c.l.b16 %v1057
      %v1353 = vunpack.c.l.b16 %v1058
      %v1354 = vunpack.c.l.b16 %v1059
      %v1355 = vunpack.c.l.b16 %v1060
      %v1356 = vunpack.c.l.b16 %v1061
      %v1357 = vunpack.c.l.b16 %v1062
      %v1358 = vunpack.c.l.b16 %v1063
      %v1359 = vunpack.c.l.b16 %v1064
      %v1360 = vunpack.c.l.b16 %v1065
      %v1361 = vunpack.c.l.b16 %v1066
      %v1362 = vunpack.c.l.b16 %v1067
      %v1363 = vunpack.c.l.b16 %v1068
      %v1364 = vunpack.c.l.b16 %v1069
      %v1365 = vunpack.c.l.b16 %v1070
      %v1366 = vunpack.c.l.b16 %v1071
      %v1367 = vunpack.c.l.b16 %v1072
      %v1368 = vunpack.c.l.b16 %v1073
      %v1369 = vunpack.c.l.b16 %v1074
      %v1370 = vunpack.c.l.b16 %v1075
      %v1371 = vunpack.c.l.b16 %v1076
      %v1372 = vunpack.c.l.b16 %v1077
      %v1373 = vunpack.c.l.b16 %v1078
      %v1374 = vunpack.c.l.b16 %v1079
      %v1375 = vunpack.c.l.b16 %v1080
      %v1376 = vunpack.c.l.b16 %v1081
      %v1377 = vunpack.c.l.b16 %v1082
      %v1378 = vunpack.c.l.b16 %v1083
      %v1379 = vunpack.c.l.b16 %v1084
      %v1380 = vunpack.c.l.b16 %v1085
      %v1381 = vunpack.c.l.b16 %v1086
      %v1382 = vunpack.c.l.b16 %v1087
      %v1383 = vunpack.c.l.b16 %v1088
      %v1384 = vunpack.c.l.b16 %v1089
      %v1385 = vunpack.c.l.b16 %v1090
      %v1386 = vunpack.c.l.b16 %v1091
      %v1387 = vunpack.c.l.b16 %v1092
      %v1388 = vunpack.c.l.b16 %v1093
      %v1389 = vunpack.c.l.b16 %v1094
      %v1390 = vunpack.c.l.b16 %v1095
      %v1391 = vunpack.c.l.b16 %v1096
      %v1392 = vunpack.c.l.b16 %v1097
      %v1393 = vunpack.c.l.b16 %v1098
      %v1394 = vunpack.c.l.b16 %v1099
      %v1395 = vunpack.c.l.b16 %v1100
      %v1396 = vunpack.c.l.b16 %v1101
      %v1397 = vunpack.c.l.b16 %v1102
      %v1398 = vunpack.c.l.b16 %v1103
      %v1399 = vunpack.c.l.b16 %v1104
      %v1400 = vunpack.c.l.b16 %v1105
      %v1401 = vunpack.c.l.b16 %v1106
      %v1402 = vunpack.c.l.b16 %v1107
      %v1403 = vunpack.c.l.b16 %v1108
      %v1404 = vunpack.c.l.b16 %v1109
      %v1405 = vunpack.c.l.b16 %v1110
      %v1406 = vunpack.c.l.b16 %v1111
      %v1407 = vunpack.c.l.b16 %v1112
      %v1408 = vunpack.c.l.b16 %v1113
      %v1409 = vunpack.c.l.b16 %v1114
      %v1410 = vunpack.c.l.b16 %v1115
      %v1411 = vunpack.c.l.b16 %v1116
      %v1412 = vunpack.c.l.b16 %v1117
      %v1413 = vunpack.c.l.b16 %v1118
      %v1414 = vunpack.c.l.b16 %v1119
      %v1415 = vunpack.c.l.b16 %v1120
      %v1416 = vunpack.c.l.b16 %v1121
      %v1417 = vunpack.c.l.b16 %v1122
      %v1418 = vunpack.c.l.b16 %v1123
      %v1419 = vunpack.c.l.b16 %v1124
      %v1420 = vunpack.c.l.b16 %v1125
      %v1421 = vunpack.c.l.b16 %v1126
      %v1422 = vunpack.c.l.b16 %v1127
      %v1423 = vunpack.c.l.b16 %v1128
      %v1424 = vunpack.c.l.b16 %v1129
      %v1425 = vunpack.c.l.b16 %v1130
      %v1426 = vunpack.c.l.b16 %v1131
      %v1427 = vunpack.c.l.b16 %v1132
      %v1428 = vunpack.c.l.b16 %v1133
      %v1429 = vunpack.c.l.b16 %v1134
      %v1430 = vunpack.c.l.b16 %v1135
      %v1431 = vunpack.c.l.b16 %v1136
      %v1432 = vunpack.c.l.b16 %v1137
      %v1433 = vunpack.c.l.b16 %v1138
      %v1434 = vunpack.c.l.b16 %v1139
      %v1435 = vunpack.c.l.b16 %v1140
      %v1436 = vunpack.c.l.b16 %v1141
      %v1437 = vunpack.c.l.b16 %v1142
      %v1438 = vunpack.c.l.b16 %v1143
      %v1439 = vunpack.c.l.b16 %v1144
      %v1440 = vunpack.c.l.b16 %v1145
      %v1441 = vunpack.c.l.b16 %v1146
      %v1442 = vunpack.c.l.b16 %v1147
      %v1443 = vunpack.c.l.b16 %v1148
      %v1444 = vunpack.c.l.b16 %v1149
      %v1445 = vunpack.c.l.b16 %v1150
      %v1446 = vunpack.c.l.b16 %v1151
      %v1447 = vunpack.c.l.b16 %v1152
      %v1448 = vunpack.c.l.b16 %v1153
      %v1449 = vunpack.c.l.b16 %v1154
      %v1450 = vunpack.c.l.b16 %v1155
      %v1451 = vunpack.c.l.b16 %v1156
      %v1452 = vunpack.c.l.b16 %v1157
      %v1453 = vunpack.c.l.b16 %v1158
      %v1454 = vunpack.c.l.b16 %v1159
      %v1455 = vunpack.c.l.b16 %v1160
      %v1456 = vunpack.c.l.b16 %v1161
      %v1457 = vunpack.c.l.b16 %v1162
      %v1458 = vunpack.c.l.b16 %v1163
      %v1459 = vunpack.c.l.b16 %v1164
      %v1460 = vunpack.c.l.b16 %v1165
      %v1461 = vunpack.c.l.b16 %v1166
      %v1462 = vunpack.c.l.b16 %v1167
      %v1463 = vunpack.c.l.b16 %v1168
      %v1464 = vunpack.c.l.b16 %v1169
      %v1465 = vunpack.c.l.b16 %v1170
      %v1466 = vunpack.c.l.b16 %v1171
      %v1467 = vunpack.c.l.b16 %v1172
      %v1468 = vunpack.c.l.b16 %v1173
      %v1469 = vunpack.c.l.b16 %v1174
      %v1470 = vunpack.c.l.b16 %v1175
      %v1471 = vunpack.c.l.b16 %v1176
      %v1472 = vunpack.c.l.b16 %v1177
      %v1473 = vunpack.c.l.b16 %v1178
      %v1474 = vunpack.c.l.b16 %v1179
      %v1475 = vunpack.c.l.b16 %v1180
      %v1476 = vunpack.c.l.b16 %v1181
      %v1477 = vunpack.c.l.b16 %v1182
      %v1478 = vunpack.c.l.b16 %v1183
      %v1479 = vunpack.c.l.b16 %v1184
      %v1480 = vunpack.c.l.b16 %v1185
      %v1481 = vunpack.c.l.b16 %v1186
      %v1482 = vunpack.c.l.b16 %v1187
      %v1483 = vunpack.c.l.b16 %v1188
      %v1484 = vunpack.c.l.b16 %v1189
      %v1485 = vunpack.c.l.b16 %v1190
      %v1486 = vunpack.c.l.b16 %v1191
      %v1487 = vunpack.c.l.b16 %v1192
      %v1488 = vunpack.c.l.b16 %v1193
      %v1489 = vunpack.c.l.b16 %v1194
      %v1490 = vunpack.c.l.b16 %v1195
      %v1491 = vunpack.c.l.b16 %v1196
      %v1492 = vunpack.c.l.b16 %v1197
      %v1493 = vunpack.c.l.b16 %v1198
      %v1494 = vunpack.c.l.b16 %v1199
      %v1495 = vpack.c.b16 %v1352, %v1351
      %v1496 = vpack.c.b16 %v1354, %v1353
      %v1497 = vpack.c.b16 %v1356, %v1355
      %v1498 = vpack.c.b16 %v1358, %v1357
      %v1499 = vpack.c.b16 %v1360, %v1359
      %v1500 = vpack.c.b16 %v1362, %v1361
      %v1501 = vpack.c.b16 %v1364, %v1363
      %v1502 = vpack.c.b16 %v1366, %v1365
      %v1503 = vpack.c.b16 %v1368, %v1367
      %v1504 = vpack.c.b16 %v1370, %v1369
      %v1505 = vpack.c.b16 %v1372, %v1371
      %v1506 = vpack.c.b16 %v1374, %v1373
      %v1507 = vpack.c.b16 %v1376, %v1375
      %v1508 = vpack.c.b16 %v1378, %v1377
      %v1509 = vpack.c.b16 %v1380, %v1379
      %v1510 = vpack.c.b16 %v1382, %v1381
      %v1511 = vpack.c.b16 %v1384, %v1383
      %v1512 = vpack.c.b16 %v1386, %v1385
      %v1513 = vpack.c.b16 %v1388, %v1387
      %v1514 = vpack.c.b16 %v1390, %v1389
      %v1515 = vpack.c.b16 %v1392, %v1391
      %v1516 = vpack.c.b16 %v1394, %v1393
      %v1517 = vpack.c.b16 %v1396, %v1395
      %v1518 = vpack.c.b16 %v1398, %v1397
      %v1519 = vpack.c.b16 %v1400, %v1399
      %v1520 = vpack.c.b16 %v1402, %v1401
      %v1521 = vpack.c.b16 %v1404, %v1403
      %v1522 = vpack.c.b16 %v1406, %v1405
      %v1523 = vpack.c.b16 %v1408, %v1407
      %v1524 = vpack.c.b16 %v1410, %v1409
      %v1525 = vpack.c.b16 %v1412, %v1411
      %v1526 = vpack.c.b16 %v1414, %v1413
      %v1527 = vpack.c.b16 %v1416, %v1415
      %v1528 = vpack.c.b16 %v1418, %v1417
      %v1529 = vpack.c.b16 %v1420, %v1419
      %v1530 = vpack.c.b16 %v1422, %v1421
      %v1531 = vpack.c.b16 %v1424, %v1423
      %v1532 = vpack.c.b16 %v1426, %v1425
      %v1533 = vpack.c.b16 %v1428, %v1427
      %v1534 = vpack.c.b16 %v1430, %v1429
      %v1535 = vpack.c.b16 %v1432, %v1431
      %v1536 = vpack.c.b16 %v1434, %v1433
      %v1537 = vpack.c.b16 %v1436, %v1435
      %v1538 = vpack.c.b16 %v1438, %v1437
      %v1539 = vpack.c.b16 %v1440, %v1439
      %v1540 = vpack.c.b16 %v1442, %v1441
      %v1541 = vpack.c.b16 %v1444, %v1443
      %v1542 = vpack.c.b16 %v1446, %v1445
      %v1543 = vpack.c.b16 %v1448, %v1447
      %v1544 = vpack.c.b16 %v1450, %v1449
      %v1545 = vpack.c.b16 %v1452, %v1451
      %v1546 = vpack.c.b16 %v1454, %v1453
      %v1547 = vpack.c.b16 %v1456, %v1455
      %v1548 = vpack.c.b16 %v1458, %v1457
      %v1549 = vpack.c.b16 %v1460, %v1459
      %v1550 = vpack.c.b16 %v1462, %v1461
      %v1551 = vpack.c.b16 %v1464, %v1463
      %v1552 = vpack.c.b16 %v1466, %v1465
      %v1553 = vpack.c.b16 %v1468, %v1467
      %v1554 = vpack.c.b16 %v1470, %v1469
      %v1555 = vpack.c.b16 %v1472, %v1471
      %v1556 = vpack.c.b16 %v1474, %v1473
      %v1557 = vpack.c.b16 %v1476, %v1475
      %v1558 = vpack.c.b16 %v1478, %v1477
      %v1559 = vpack.c.b16 %v1480, %v1479
      %v1560 = vpack.c.b16 %v1482, %v1481
      %v1561 = vpack.c.b16 %v1484, %v1483
      %v1562 = vpack.c.b16 %v1486, %v1485
      %v1563 = vpack.c.b16 %v1488, %v1487
      %v1564 = vpack.c.b16 %v1490, %v1489
      %v1565 = vpack.c.b16 %v1492, %v1491
      %v1566 = vpack.c.b16 %v1494, %v1493
      %1639 = vmatprep.subr.bf16.mxu0 0
      %1640 = vmatpush1.bf16.msra.mxu0 %v1495
      %1641 = vmatprep.subr.bf16.mxu0 0
      %1642 = vmatpush1.bf16.msra.mxu0 %v1496
      %1643 = vmatprep.subr.bf16.mxu0 0
      %1644 = vmatpush1.bf16.msra.mxu0 %v1497
      %1645 = vmatprep.subr.bf16.mxu0 0
      %1646 = vmatpush1.bf16.msra.mxu0 %v1498
      %1647 = vmatprep.subr.bf16.mxu0 0
      %1648 = vmatpush1.bf16.msra.mxu0 %v1499
      %1649 = vmatprep.subr.bf16.mxu0 0
      %1650 = vmatpush1.bf16.msra.mxu0 %v1500
      %1651 = vmatprep.subr.bf16.mxu0 0
      %1652 = vmatpush1.bf16.msra.mxu0 %v1501
      %1653 = vmatprep.subr.bf16.mxu0 0
      %1654 = vmatpush1.bf16.msra.mxu0 %v1502
      %1655 = vmatprep.subr.bf16.mxu0 0
      %1656 = vmatpush1.bf16.msra.mxu0 %v1503
      %1657 = vmatprep.subr.bf16.mxu0 0
      %1658 = vmatpush1.bf16.msra.mxu0 %v1504
      %1659 = vmatprep.subr.bf16.mxu0 0
      %1660 = vmatpush1.bf16.msra.mxu0 %v1505
      %1661 = vmatprep.subr.bf16.mxu0 0
      %1662 = vmatpush1.bf16.msra.mxu0 %v1506
      %1663 = vmatprep.subr.bf16.mxu0 0
      %1664 = vmatpush1.bf16.msra.mxu0 %v1507
      %1665 = vmatprep.subr.bf16.mxu0 0
      %1666 = vmatpush1.bf16.msra.mxu0 %v1508
      %1667 = vmatprep.subr.bf16.mxu0 0
      %1668 = vmatpush1.bf16.msra.mxu0 %v1509
      %1669 = vmatprep.subr.bf16.mxu0 0
      %1670 = vmatpush1.bf16.msra.mxu0 %v1510
      %1671 = vmatprep.mubr.bf16.mxu0 %v904
      %1672 = vmatmul.mubr.bf16.gmra.mrb[0].mxu0 %v880
      %v1673 = vpop.f32.mrb[0].mxu0
      %v1674 = vadd.f32 %v1205, %v1673
      %v1675 = vpop.f32.mrb[0].mxu0
      %v1676 = vpop.f32.mrb[0].mxu0
      %v1677 = vadd.f32 %v1205, %v1676
      %v1678 = vpop.f32.mrb[0].mxu0
      %1679 = vmatprep.mubr.bf16.mxu0 %v905
      %1680 = vmatmul.mubr.bf16.gmra.mrb[0].mxu0 %v881
      %v1681 = vpop.f32.mrb[0].mxu0
      %v1682 = vadd.f32 %v1205, %v1681
      %v1683 = vpop.f32.mrb[0].mxu0
      %v1684 = vpop.f32.mrb[0].mxu0
      %v1685 = vadd.f32 %v1205, %v1684
      %v1686 = vpop.f32.mrb[0].mxu0
      %1687 = vmatprep.mubr.bf16.mxu0 %v906
      %1688 = vmatmul.mubr.bf16.gmra.mrb[0].mxu0 %v882
      %v1689 = vpop.f32.mrb[0].mxu0
      %v1690 = vadd.f32 %v1205, %v1689
      %v1691 = vpop.f32.mrb[0].mxu0
      %v1692 = vpop.f32.mrb[0].mxu0
      %v1693 = vadd.f32 %v1205, %v1692
      %v1694 = vpop.f32.mrb[0].mxu0
      %1695 = vmatprep.mubr.bf16.mxu0 %v907
      %1696 = vmatmul.mubr.bf16.gmra.mrb[0].mxu0 %v883
      %v1697 = vpop.f32.mrb[0].mxu0
      %v1698 = vadd.f32 %v1205, %v1697
      %v1699 = vpop.f32.mrb[0].mxu0
      %v1700 = vpop.f32.mrb[0].mxu0
      %v1701 = vadd.f32 %v1205, %v1700
      %v1702 = vpop.f32.mrb[0].mxu0
      %1703 = vdwg.mxu0
      %1704 = vmatprep.subr.bf16.mxu0 0
      %1705 = vmatpush1.bf16.msra.mxu0 %v1511
      %1706 = vmatprep.subr.bf16.mxu0 0
      %1707 = vmatpush1.bf16.msra.mxu0 %v1512
      %1708 = vmatprep.subr.bf16.mxu0 0
      %1709 = vmatpush1.bf16.msra.mxu0 %v1513
      %1710 = vmatprep.subr.bf16.mxu0 0
      %1711 = vmatpush1.bf16.msra.mxu0 %v1514
      %1712 = vmatprep.subr.bf16.mxu0 0
      %1713 = vmatpush1.bf16.msra.mxu0 %v1515
      %1714 = vmatprep.subr.bf16.mxu0 0
      %1715 = vmatpush1.bf16.msra.mxu0 %v1516
      %1716 = vmatprep.subr.bf16.mxu0 0
      %1717 = vmatpush1.bf16.msra.mxu0 %v1517
      %1718 = vmatprep.subr.bf16.mxu0 0
      %1719 = vmatpush1.bf16.msra.mxu0 %v1518
      %1720 = vmatprep.subr.bf16.mxu0 0
      %1721 = vmatpush1.bf16.msra.mxu0 %v1519
      %1722 = vmatprep.subr.bf16.mxu0 0
      %1723 = vmatpush1.bf16.msra.mxu0 %v1520
      %1724 = vmatprep.subr.bf16.mxu0 0
      %1725 = vmatpush1.bf16.msra.mxu0 %v1521
      %1726 = vmatprep.subr.bf16.mxu0 0
      %1727 = vmatpush1.bf16.msra.mxu0 %v1522
      %1728 = vmatprep.subr.bf16.mxu0 0
      %1729 = vmatpush1.bf16.msra.mxu0 %v1523
      %1730 = vmatprep.subr.bf16.mxu0 0
      %1731 = vmatpush1.bf16.msra.mxu0 %v1524
      %1732 = vmatprep.subr.bf16.mxu0 0
      %1733 = vmatpush1.bf16.msra.mxu0 %v1525
      %1734 = vmatprep.subr.bf16.mxu0 0
      %1735 = vmatpush1.bf16.msra.mxu0 %v1526
      %1736 = vmatprep.mubr.bf16.mxu0 %v944
      %1737 = vmatmul.mubr.bf16.gmra.mrb[0].mxu0 %v920
      %v1738 = vpop.f32.mrb[0].mxu0
      %v1739 = vadd.f32 %v1674, %v1738
      %v1740 = vpop.f32.mrb[0].mxu0
      %v1741 = vpop.f32.mrb[0].mxu0
      %v1742 = vadd.f32 %v1677, %v1741
      %v1743 = vpop.f32.mrb[0].mxu0
      %1744 = vmatprep.mubr.bf16.mxu0 %v945
      %1745 = vmatmul.mubr.bf16.gmra.mrb[0].mxu0 %v921
      %v1746 = vpop.f32.mrb[0].mxu0
      %v1747 = vadd.f32 %v1682, %v1746
      %v1748 = vpop.f32.mrb[0].mxu0
      %v1749 = vpop.f32.mrb[0].mxu0
      %v1750 = vadd.f32 %v1685, %v1749
      %v1751 = vpop.f32.mrb[0].mxu0
      %1752 = vmatprep.mubr.bf16.mxu0 %v946
      %1753 = vmatmul.mubr.bf16.gmra.mrb[0].mxu0 %v922
      %v1754 = vpop.f32.mrb[0].mxu0
      %v1755 = vadd.f32 %v1690, %v1754
      %v1756 = vpop.f32.mrb[0].mxu0
      %v1757 = vpop.f32.mrb[0].mxu0
      %v1758 = vadd.f32 %v1693, %v1757
      %v1759 = vpop.f32.mrb[0].mxu0
      %1760 = vmatprep.mubr.bf16.mxu0 %v947
      %1761 = vmatmul.mubr.bf16.gmra.mrb[0].mxu0 %v923
      %v1762 = vpop.f32.mrb[0].mxu0
      %v1763 = vadd.f32 %v1698, %v1762
      %v1764 = vpop.f32.mrb[0].mxu0
      %v1765 = vpop.f32.mrb[0].mxu0
      %v1766 = vadd.f32 %v1701, %v1765
      %v1767 = vpop.f32.mrb[0].mxu0
      %1768 = vdwg.mxu0
      %1769 = vmatprep.subr.bf16.mxu0 0
      %1770 = vmatpush1.bf16.msra.mxu0 %v1527
      %1771 = vmatprep.subr.bf16.mxu0 0
      %1772 = vmatpush1.bf16.msra.mxu0 %v1528
      %1773 = vmatprep.subr.bf16.mxu0 0
      %1774 = vmatpush1.bf16.msra.mxu0 %v1529
      %1775 = vmatprep.subr.bf16.mxu0 0
      %1776 = vmatpush1.bf16.msra.mxu0 %v1530
      %1777 = vmatprep.subr.bf16.mxu0 0
      %1778 = vmatpush1.bf16.msra.mxu0 %v1531
      %1779 = vmatprep.subr.bf16.mxu0 0
      %1780 = vmatpush1.bf16.msra.mxu0 %v1532
      %1781 = vmatprep.subr.bf16.mxu0 0
      %1782 = vmatpush1.bf16.msra.mxu0 %v1533
      %1783 = vmatprep.subr.bf16.mxu0 0
      %1784 = vmatpush1.bf16.msra.mxu0 %v1534
      %1785 = vmatprep.subr.bf16.mxu0 0
      %1786 = vmatpush1.bf16.msra.mxu0 %v1535
      %1787 = vmatprep.subr.bf16.mxu0 0
      %1788 = vmatpush1.bf16.msra.mxu0 %v1536
      %1789 = vmatprep.subr.bf16.mxu0 0
      %1790 = vmatpush1.bf16.msra.mxu0 %v1537
      %1791 = vmatprep.subr.bf16.mxu0 0
      %1792 = vmatpush1.bf16.msra.mxu0 %v1538
      %1793 = vmatprep.subr.bf16.mxu0 0
      %1794 = vmatpush1.bf16.msra.mxu0 %v1539
      %1795 = vmatprep.subr.bf16.mxu0 0
      %1796 = vmatpush1.bf16.msra.mxu0 %v1540
      %1797 = vmatprep.subr.bf16.mxu0 0
      %1798 = vmatpush1.bf16.msra.mxu0 %v1541
      %1799 = vmatprep.subr.bf16.mxu0 0
      %1800 = vmatpush1.bf16.msra.mxu0 %v1542
      %1801 = vmatprep.mubr.bf16.mxu0 %v984
      %1802 = vmatmul.mubr.bf16.gmra.mrb[0].mxu0 %v968
      %v1803 = vpop.f32.mrb[0].mxu0
      %v1804 = vadd.f32 %v1739, %v1803
      %v1805 = vpop.f32.mrb[0].mxu0
      %v1806 = vpop.f32.mrb[0].mxu0
      %v1807 = vadd.f32 %v1742, %v1806
      %v1808 = vpop.f32.mrb[0].mxu0
      %1809 = vmatprep.mubr.bf16.mxu0 %v985
      %1810 = vmatmul.mubr.bf16.gmra.mrb[0].mxu0 %v969
      %v1811 = vpop.f32.mrb[0].mxu0
      %v1812 = vadd.f32 %v1747, %v1811
      %v1813 = vpop.f32.mrb[0].mxu0
      %v1814 = vpop.f32.mrb[0].mxu0
      %v1815 = vadd.f32 %v1750, %v1814
      %v1816 = vpop.f32.mrb[0].mxu0
      %1817 = vmatprep.mubr.bf16.mxu0 %v986
      %1818 = vmatmul.mubr.bf16.gmra.mrb[0].mxu0 %v970
      %v1819 = vpop.f32.mrb[0].mxu0
      %v1820 = vadd.f32 %v1755, %v1819
      %v1821 = vpop.f32.mrb[0].mxu0
      %v1822 = vpop.f32.mrb[0].mxu0
      %v1823 = vadd.f32 %v1758, %v1822
      %v1824 = vpop.f32.mrb[0].mxu0
      %1825 = vmatprep.mubr.bf16.mxu0 %v987
      %1826 = vmatmul.mubr.bf16.gmra.mrb[0].mxu0 %v971
      %v1827 = vpop.f32.mrb[0].mxu0
      %v1828 = vadd.f32 %v1763, %v1827
      %v1829 = vpop.f32.mrb[0].mxu0
      %v1830 = vpop.f32.mrb[0].mxu0
      %v1831 = vadd.f32 %v1766, %v1830
      %v1832 = vpop.f32.mrb[0].mxu0
      %1833 = vdwg.mxu0
      %1834 = vmatprep.subr.bf16.mxu0 0
      %1835 = vmatpush1.bf16.msra.mxu0 %v1543
      %1836 = vmatprep.subr.bf16.mxu0 0
      %1837 = vmatpush1.bf16.msra.mxu0 %v1544
      %1838 = vmatprep.subr.bf16.mxu0 0
      %1839 = vmatpush1.bf16.msra.mxu0 %v1545
      %1840 = vmatprep.subr.bf16.mxu0 0
      %1841 = vmatpush1.bf16.msra.mxu0 %v1546
      %1842 = vmatprep.subr.bf16.mxu0 0
      %1843 = vmatpush1.bf16.msra.mxu0 %v1547
      %1844 = vmatprep.subr.bf16.mxu0 0
      %1845 = vmatpush1.bf16.msra.mxu0 %v1548
      %1846 = vmatprep.subr.bf16.mxu0 0
      %1847 = vmatpush1.bf16.msra.mxu0 %v1549
      %1848 = vmatprep.subr.bf16.mxu0 0
      %1849 = vmatpush1.bf16.msra.mxu0 %v1550
      %1850 = vmatprep.subr.bf16.mxu0 0
      %1851 = vmatpush1.bf16.msra.mxu0 %v1551
      %1852 = vmatprep.subr.bf16.mxu0 0
      %1853 = vmatpush1.bf16.msra.mxu0 %v1552
      %1854 = vmatprep.subr.bf16.mxu0 0
      %1855 = vmatpush1.bf16.msra.mxu0 %v1553
      %1856 = vmatprep.subr.bf16.mxu0 0
      %1857 = vmatpush1.bf16.msra.mxu0 %v1554
      %1858 = vmatprep.subr.bf16.mxu0 0
      %1859 = vmatpush1.bf16.msra.mxu0 %v1555
      %1860 = vmatprep.subr.bf16.mxu0 0
      %1861 = vmatpush1.bf16.msra.mxu0 %v1556
      %1862 = vmatprep.subr.bf16.mxu0 0
      %1863 = vmatpush1.bf16.msra.mxu0 %v1557
      %1864 = vmatprep.subr.bf16.mxu0 0
      %1865 = vmatpush1.bf16.msra.mxu0 %v1558
      %1866 = vmatprep.mubr.bf16.mxu0 %v1032
      %1867 = vmatmul.mubr.bf16.gmra.mrb[0].mxu0 %v1008
      %v1868 = vpop.f32.mrb[0].mxu0
      %v1869 = vadd.f32 %v1804, %v1868
      %v1870 = vpop.f32.mrb[0].mxu0
      %v1871 = vpop.f32.mrb[0].mxu0
      %v1872 = vadd.f32 %v1807, %v1871
      %v1873 = vpop.f32.mrb[0].mxu0
      %1874 = vmatprep.mubr.bf16.mxu0 %v1033
      %1875 = vmatmul.mubr.bf16.gmra.mrb[0].mxu0 %v1009
      %v1876 = vpop.f32.mrb[0].mxu0
      %v1877 = vadd.f32 %v1812, %v1876
      %v1878 = vpop.f32.mrb[0].mxu0
      %v1879 = vpop.f32.mrb[0].mxu0
      %v1880 = vadd.f32 %v1815, %v1879
      %v1881 = vpop.f32.mrb[0].mxu0
      %1882 = vmatprep.mubr.bf16.mxu0 %v1034
      %1883 = vmatmul.mubr.bf16.gmra.mrb[0].mxu0 %v1010
      %v1884 = vpop.f32.mrb[0].mxu0
      %v1885 = vadd.f32 %v1820, %v1884
      %v1886 = vpop.f32.mrb[0].mxu0
      %v1887 = vpop.f32.mrb[0].mxu0
      %v1888 = vadd.f32 %v1823, %v1887
      %v1889 = vpop.f32.mrb[0].mxu0
      %1890 = vmatprep.mubr.bf16.mxu0 %v1035
      %1891 = vmatmul.mubr.bf16.gmra.mrb[0].mxu0 %v1011
      %v1892 = vpop.f32.mrb[0].mxu0
      %v1893 = vadd.f32 %v1828, %v1892
      %v1894 = vpop.f32.mrb[0].mxu0
      %v1895 = vpop.f32.mrb[0].mxu0
      %v1896 = vadd.f32 %v1831, %v1895
      %v1897 = vpop.f32.mrb[0].mxu0
      %1898 = vdwg.mxu0
      %1899 = vmatprep.subr.bf16.mxu0 0
      %1900 = vmatpush1.bf16.msra.mxu0 %v1559
      %1901 = vmatprep.subr.bf16.mxu0 0
      %1902 = vmatpush1.bf16.msra.mxu0 %v1560
      %1903 = vmatprep.subr.bf16.mxu0 0
      %1904 = vmatpush1.bf16.msra.mxu0 %v1561
      %1905 = vmatprep.subr.bf16.mxu0 0
      %1906 = vmatpush1.bf16.msra.mxu0 %v1562
      %1907 = vmatprep.subr.bf16.mxu0 0
      %1908 = vmatpush1.bf16.msra.mxu0 %v1563
      %1909 = vmatprep.subr.bf16.mxu0 0
      %1910 = vmatpush1.bf16.msra.mxu0 %v1564
      %1911 = vmatprep.subr.bf16.mxu0 0
      %1912 = vmatpush1.bf16.msra.mxu0 %v1565
      %1913 = vmatprep.subr.bf16.mxu0 0
      %1914 = vmatpush1.bf16.msra.mxu0 %v1566
      %1915 = vmatprep.subr.bf16.mxu0 0
      %1916 = vmatpush1.bf16.msra.mxu0 0
      %1917 = vmatprep.subr.bf16.mxu0 0
      %1918 = vmatpush1.bf16.msra.mxu0 0
      %1919 = vmatprep.subr.bf16.mxu0 0
      %1920 = vmatpush1.bf16.msra.mxu0 0
      %1921 = vmatprep.subr.bf16.mxu0 0
      %1922 = vmatpush1.bf16.msra.mxu0 0
      %1923 = vmatprep.subr.bf16.mxu0 0
      %1924 = vmatpush1.bf16.msra.mxu0 0
      %1925 = vmatprep.subr.bf16.mxu0 0
      %1926 = vmatpush1.bf16.msra.mxu0 0
      %1927 = vmatprep.subr.bf16.mxu0 0
      %1928 = vmatpush1.bf16.msra.mxu0 0
      %1929 = vmatprep.subr.bf16.mxu0 0
      %1930 = vmatpush1.bf16.msra.mxu0 0
      %1931 = vmatprep.mubr.bf16.mxu0 0
      %1932 = vmatmul.mubr.bf16.gmra.mrb[0].mxu0 %v1048
      %v1933 = vpop.f32.mrb[0].mxu0
      %v1934 = vadd.f32 %v1869, %v1933
      %v1935 = vpop.f32.mrb[0].mxu0
      %v1936 = vpop.f32.mrb[0].mxu0
      %v1937 = vadd.f32 %v1872, %v1936
      %v1938 = vpop.f32.mrb[0].mxu0
      %1939 = vmatprep.mubr.bf16.mxu0 0
      %1940 = vmatmul.mubr.bf16.gmra.mrb[0].mxu0 %v1049
      %v1941 = vpop.f32.mrb[0].mxu0
      %v1942 = vadd.f32 %v1877, %v1941
      %v1943 = vpop.f32.mrb[0].mxu0
      %v1944 = vpop.f32.mrb[0].mxu0
      %v1945 = vadd.f32 %v1880, %v1944
      %v1946 = vpop.f32.mrb[0].mxu0
      %1947 = vmatprep.mubr.bf16.mxu0 0
      %1948 = vmatmul.mubr.bf16.gmra.mrb[0].mxu0 %v1050
      %v1949 = vpop.f32.mrb[0].mxu0
      %v1950 = vadd.f32 %v1885, %v1949
      %v1951 = vpop.f32.mrb[0].mxu0
      %v1952 = vpop.f32.mrb[0].mxu0
      %v1953 = vadd.f32 %v1888, %v1952
      %v1954 = vpop.f32.mrb[0].mxu0
      %1955 = vmatprep.mubr.bf16.mxu0 0
      %1956 = vmatmul.mubr.bf16.gmra.mrb[0].mxu0 %v1051
      %v1957 = vpop.f32.mrb[0].mxu0
      %v1958 = vadd.f32 %v1893, %v1957
      %v1959 = vpop.f32.mrb[0].mxu0
      %v1960 = vpop.f32.mrb[0].mxu0
      %v1961 = vadd.f32 %v1896, %v1960
      %v1962 = vpop.f32.mrb[0].mxu0
      %1963 = vdwg.mxu0
      %v1964 = vmax.f32 %v1934, 0.0
      %v1965 = vmax.f32 %v1937, 0.0
      %v1966 = vmax.f32 %v1942, 0.0
      %v1967 = vmax.f32 %v1945, 0.0
      %v1968 = vmax.f32 %v1950, 0.0
      %v1969 = vmax.f32 %v1953, 0.0
      %v1970 = vmax.f32 %v1958, 0.0
      %v1971 = vmax.f32 %v1961, 0.0
      %s1972 = scalar_lea.vmem [#allocation2], 16
      %1973 = vst [vmem:[%s1972 + $0x1] sm:$0xff] %v1964
      %1974 = vst [vmem:[%s1972 + $0x11] sm:$0xff] %v1965
      %1975 = vst [vmem:[%s1972 + $0x21] sm:$0xff] %v1966
      %1976 = vst [vmem:[%s1972 + $0x31] sm:$0xff] %v1967
      %1977 = vst [vmem:[%s1972 + $0x41] sm:$0xff] %v1968
      %1978 = vst [vmem:[%s1972 + $0x51] sm:$0xff] %v1969
      %1979 = vst [vmem:[%s1972 + $0x61] sm:$0xff] %v1970
      %1980 = vst [vmem:[%s1972 + $0x71] sm:$0xff] %v1971
      %v1981 = vld [vmem:[#allocation2] sm:$0xff]
      %v1982 = vld [vmem:[#allocation2 + $0x10] sm:$0xff]
      %v1983 = vld [vmem:[#allocation2 + $0x20] sm:$0xff]
      %v1984 = vld [vmem:[#allocation2 + $0x30] sm:$0xff]
      %v1985 = vld [vmem:[#allocation2 + $0x40] sm:$0xff]
      %v1986 = vld [vmem:[#allocation2 + $0x50] sm:$0xff]
      %v1987 = vld [vmem:[#allocation2 + $0x60] sm:$0xff]
      %v1988 = vld [vmem:[#allocation2 + $0x70] sm:$0xff]
      %v1989 = vpack.c.bf16 %v1982, %v1981
      %v1990 = vpack.c.bf16 %v1984, %v1983
      %v1991 = vpack.c.bf16 %v1986, %v1985
      %v1992 = vpack.c.bf16 %v1988, %v1987
      %v1993 = vld [vmem:[#allocation2 + $0x1] sm:$0xff]
      %v1994 = vld [vmem:[#allocation2 + $0x11] sm:$0xff]
      %v1995 = vld [vmem:[#allocation2 + $0x21] sm:$0xff]
      %v1996 = vld [vmem:[#allocation2 + $0x31] sm:$0xff]
      %v1997 = vld [vmem:[#allocation2 + $0x41] sm:$0xff]
      %v1998 = vld [vmem:[#allocation2 + $0x51] sm:$0xff]
      %v1999 = vld [vmem:[#allocation2 + $0x61] sm:$0xff]
      %v2000 = vld [vmem:[#allocation2 + $0x71] sm:$0xff]
      %v2001 = vpack.c.bf16 %v1994, %v1993
      %v2002 = vpack.c.bf16 %v1996, %v1995
      %v2003 = vpack.c.bf16 %v1998, %v1997
      %v2004 = vpack.c.bf16 %v2000, %v1999
      %v2005 = vld [vmem:[#allocation2 + $0x2] sm:$0xff]
      %v2006 = vld [vmem:[#allocation2 + $0x12] sm:$0xff]
      %v2007 = vld [vmem:[#allocation2 + $0x22] sm:$0xff]
      %v2008 = vld [vmem:[#allocation2 + $0x32] sm:$0xff]
      %v2009 = vld [vmem:[#allocation2 + $0x42] sm:$0xff]
      %v2010 = vld [vmem:[#allocation2 + $0x52] sm:$0xff]
      %v2011 = vld [vmem:[#allocation2 + $0x62] sm:$0xff]
      %v2012 = vld [vmem:[#allocation2 + $0x72] sm:$0xff]
      %v2013 = vpack.c.bf16 %v2006, %v2005
      %v2014 = vpack.c.bf16 %v2008, %v2007
      %v2015 = vpack.c.bf16 %v2010, %v2009
      %v2016 = vpack.c.bf16 %v2012, %v2011
      %v2017 = vld [vmem:[%s1972] sm:$0xff]
      %v2018 = vld [vmem:[%s1972 + $0x10] sm:$0xff]
      %v2019 = vld [vmem:[%s1972 + $0x20] sm:$0xff]
      %v2020 = vld [vmem:[%s1972 + $0x30] sm:$0xff]
      %v2021 = vld [vmem:[%s1972 + $0x40] sm:$0xff]
      %v2022 = vld [vmem:[%s1972 + $0x50] sm:$0xff]
      %v2023 = vld [vmem:[%s1972 + $0x60] sm:$0xff]
      %v2024 = vld [vmem:[%s1972 + $0x70] sm:$0xff]
      %v2025 = vpack.c.bf16 %v2018, %v2017
      %v2026 = vpack.c.bf16 %v2020, %v2019
      %v2027 = vpack.c.bf16 %v2022, %v2021
      %v2028 = vpack.c.bf16 %v2024, %v2023
      %v2029 = vld [vmem:[%s1972 + $0x1] sm:$0xff]
      %v2030 = vld [vmem:[%s1972 + $0x11] sm:$0xff]
      %v2031 = vld [vmem:[%s1972 + $0x21] sm:$0xff]
      %v2032 = vld [vmem:[%s1972 + $0x31] sm:$0xff]
      %v2033 = vld [vmem:[%s1972 + $0x41] sm:$0xff]
      %v2034 = vld [vmem:[%s1972 + $0x51] sm:$0xff]
      %v2035 = vld [vmem:[%s1972 + $0x61] sm:$0xff]
      %v2036 = vld [vmem:[%s1972 + $0x71] sm:$0xff]
      %v2037 = vpack.c.bf16 %v2030, %v2029
      %v2038 = vpack.c.bf16 %v2032, %v2031
      %v2039 = vpack.c.bf16 %v2034, %v2033
      %v2040 = vpack.c.bf16 %v2036, %v2035
      %v2041 = vld [vmem:[%s1972 + $0x2] sm:$0xff]
      %v2042 = vld [vmem:[%s1972 + $0x12] sm:$0xff]
      %v2043 = vld [vmem:[%s1972 + $0x22] sm:$0xff]
      %v2044 = vld [vmem:[%s1972 + $0x32] sm:$0xff]
      %v2045 = vld [vmem:[%s1972 + $0x42] sm:$0xff]
      %v2046 = vld [vmem:[%s1972 + $0x52] sm:$0xff]
      %v2047 = vld [vmem:[%s1972 + $0x62] sm:$0xff]
      %v2048 = vld [vmem:[%s1972 + $0x72] sm:$0xff]
      %v2049 = vpack.c.bf16 %v2042, %v2041
      %v2050 = vpack.c.bf16 %v2044, %v2043
      %v2051 = vpack.c.bf16 %v2046, %v2045
      %v2052 = vpack.c.bf16 %v2048, %v2047
      %s2053 = scalar_lea.vmem [#allocation2], 32
      %v2054 = vld [vmem:[%s2053] sm:$0xff]
      %v2055 = vld [vmem:[%s2053 + $0x10] sm:$0xff]
      %v2056 = vld [vmem:[%s2053 + $0x20] sm:$0xff]
      %v2057 = vld [vmem:[%s2053 + $0x30] sm:$0xff]
      %v2058 = vld [vmem:[%s2053 + $0x40] sm:$0xff]
      %v2059 = vld [vmem:[%s2053 + $0x50] sm:$0xff]
      %v2060 = vld [vmem:[%s2053 + $0x60] sm:$0xff]
      %v2061 = vld [vmem:[%s2053 + $0x70] sm:$0xff]
      %v2062 = vpack.c.bf16 %v2055, %v2054
      %v2063 = vpack.c.bf16 %v2057, %v2056
      %v2064 = vpack.c.bf16 %v2059, %v2058
      %v2065 = vpack.c.bf16 %v2061, %v2060
      %v2066 = vld [vmem:[%s2053 + $0x1] sm:$0xff]
      %v2067 = vld [vmem:[%s2053 + $0x11] sm:$0xff]
      %v2068 = vld [vmem:[%s2053 + $0x21] sm:$0xff]
      %v2069 = vld [vmem:[%s2053 + $0x31] sm:$0xff]
      %v2070 = vld [vmem:[%s2053 + $0x41] sm:$0xff]
      %v2071 = vld [vmem:[%s2053 + $0x51] sm:$0xff]
      %v2072 = vld [vmem:[%s2053 + $0x61] sm:$0xff]
      %v2073 = vld [vmem:[%s2053 + $0x71] sm:$0xff]
      %v2074 = vpack.c.bf16 %v2067, %v2066
      %v2075 = vpack.c.bf16 %v2069, %v2068
      %v2076 = vpack.c.bf16 %v2071, %v2070
      %v2077 = vpack.c.bf16 %v2073, %v2072
      %v2078 = vld [vmem:[%s2053 + $0x2] sm:$0xff]
      %v2079 = vld [vmem:[%s2053 + $0x12] sm:$0xff]
      %v2080 = vld [vmem:[%s2053 + $0x22] sm:$0xff]
      %v2081 = vld [vmem:[%s2053 + $0x32] sm:$0xff]
      %v2082 = vld [vmem:[%s2053 + $0x42] sm:$0xff]
      %v2083 = vld [vmem:[%s2053 + $0x52] sm:$0xff]
      %v2084 = vld [vmem:[%s2053 + $0x62] sm:$0xff]
      %v2085 = vld [vmem:[%s2053 + $0x72] sm:$0xff]
      %v2086 = vpack.c.bf16 %v2079, %v2078
      %v2087 = vpack.c.bf16 %v2081, %v2080
      %v2088 = vpack.c.bf16 %v2083, %v2082
      %v2089 = vpack.c.bf16 %v2085, %v2084
      %v2090 = vld [vmem:[%s3] sm:$0xf]
      %v2091 = vld [vmem:[%s3 + $0x4] sm:$0xf]
      %v2092 = vld [vmem:[%s3 + $0x8] sm:$0xf]
      %v2093 = vld [vmem:[%s3 + $0xc] sm:$0xf]
      %v2094 = vld [vmem:[%s3 + $0x10] sm:$0xf]
      %v2095 = vld [vmem:[%s3 + $0x14] sm:$0xf]
      %v2096 = vld [vmem:[%s3 + $0x18] sm:$0xf]
      %v2097 = vld [vmem:[%s3 + $0x1c] sm:$0xf]
      %v2098 = vld [vmem:[%s3 + $0x20] sm:$0xf]
      %v2099 = vld [vmem:[%s3 + $0x24] sm:$0xf]
      %v2100 = vld [vmem:[%s3 + $0x28] sm:$0xf]
      %v2101 = vld [vmem:[%s3 + $0x2c] sm:$0xf]
      %v2102 = vld [vmem:[%s3 + $0x30] sm:$0xf]
      %v2103 = vld [vmem:[%s3 + $0x34] sm:$0xf]
      %v2104 = vld [vmem:[%s3 + $0x38] sm:$0xf]
      %v2105 = vld [vmem:[%s3 + $0x3c] sm:$0xf]
      %v2106 = vld [vmem:[%s3 + $0x40] sm:$0xf]
      %v2107 = vld [vmem:[%s3 + $0x44] sm:$0xf]
      %v2108 = vld [vmem:[%s3 + $0x48] sm:$0xf]
      %v2109 = vld [vmem:[%s3 + $0x4c] sm:$0xf]
      %v2110 = vld [vmem:[%s3 + $0x50] sm:$0xf]
      %v2111 = vld [vmem:[%s3 + $0x54] sm:$0xf]
      %v2112 = vld [vmem:[%s3 + $0x58] sm:$0xf]
      %v2113 = vld [vmem:[%s3 + $0x5c] sm:$0xf]
      %v2114 = vld [vmem:[%s3 + $0x60] sm:$0xf]
      %v2115 = vld [vmem:[%s3 + $0x64] sm:$0xf]
      %v2116 = vld [vmem:[%s3 + $0x68] sm:$0xf]
      %v2117 = vld [vmem:[%s3 + $0x6c] sm:$0xf]
      %v2118 = vld [vmem:[%s3 + $0x70] sm:$0xf]
      %v2119 = vld [vmem:[%s3 + $0x74] sm:$0xf]
      %v2120 = vld [vmem:[%s3 + $0x78] sm:$0xf]
      %v2121 = vld [vmem:[%s3 + $0x7c] sm:$0xf]
      %v2122 = vld [vmem:[%s3 + $0x80] sm:$0xf]
      %v2123 = vld [vmem:[%s3 + $0x84] sm:$0xf]
      %v2124 = vld [vmem:[%s3 + $0x88] sm:$0xf]
      %v2125 = vld [vmem:[%s3 + $0x8c] sm:$0xf]
      %v2126 = vld [vmem:[%s3 + $0x90] sm:$0xf]
      %v2127 = vld [vmem:[%s3 + $0x94] sm:$0xf]
      %v2128 = vld [vmem:[%s3 + $0x98] sm:$0xf]
      %v2129 = vld [vmem:[%s3 + $0x9c] sm:$0xf]
      %v2130 = vld [vmem:[%s3 + $0xa0] sm:$0xf]
      %v2131 = vld [vmem:[%s3 + $0xa4] sm:$0xf]
      %v2132 = vld [vmem:[%s3 + $0xa8] sm:$0xf]
      %v2133 = vld [vmem:[%s3 + $0xac] sm:$0xf]
      %v2134 = vld [vmem:[%s3 + $0xb0] sm:$0xf]
      %v2135 = vld [vmem:[%s3 + $0xb4] sm:$0xf]
      %v2136 = vld [vmem:[%s3 + $0xb8] sm:$0xf]
      %v2137 = vld [vmem:[%s3 + $0xbc] sm:$0xf]
      %v2138 = vld [vmem:[%s3 + $0xc0] sm:$0xf]
      %v2139 = vld [vmem:[%s3 + $0xc4] sm:$0xf]
      %v2140 = vld [vmem:[%s3 + $0xc8] sm:$0xf]
      %v2141 = vld [vmem:[%s3 + $0xcc] sm:$0xf]
      %v2142 = vld [vmem:[%s3 + $0xd0] sm:$0xf]
      %v2143 = vld [vmem:[%s3 + $0xd4] sm:$0xf]
      %v2144 = vld [vmem:[%s3 + $0xd8] sm:$0xf]
      %v2145 = vld [vmem:[%s3 + $0xdc] sm:$0xf]
      %v2146 = vld [vmem:[%s3 + $0xe0] sm:$0xf]
      %v2147 = vld [vmem:[%s3 + $0xe4] sm:$0xf]
      %v2148 = vld [vmem:[%s3 + $0xe8] sm:$0xf]
      %v2149 = vld [vmem:[%s3 + $0xec] sm:$0xf]
      %v2150 = vld [vmem:[%s3 + $0xf0] sm:$0xf]
      %v2151 = vld [vmem:[%s3 + $0xf4] sm:$0xf]
      %v2152 = vld [vmem:[%s3 + $0xf8] sm:$0xf]
      %v2153 = vld [vmem:[%s3 + $0xfc] sm:$0xf]
      %v2154 = vld [vmem:[%s3 + $0x100] sm:$0xf]
      %v2155 = vld [vmem:[%s3 + $0x104] sm:$0xf]
      %v2156 = vld [vmem:[%s3 + $0x108] sm:$0xf]
      %v2157 = vld [vmem:[%s3 + $0x10c] sm:$0xf]
      %v2158 = vld [vmem:[%s3 + $0x110] sm:$0xf]
      %v2159 = vld [vmem:[%s3 + $0x114] sm:$0xf]
      %v2160 = vld [vmem:[%s3 + $0x118] sm:$0xf]
      %v2161 = vld [vmem:[%s3 + $0x11c] sm:$0xf]
      %v2162 = vld [vmem:[%s3 + $0x120] sm:$0xf]
      %v2163 = vld [vmem:[%s3 + $0x124] sm:$0xf]
      %v2164 = vld [vmem:[%s3 + $0x128] sm:$0xf]
      %v2165 = vld [vmem:[%s3 + $0x12c] sm:$0xf]
      %v2166 = vld [vmem:[%s3 + $0x130] sm:$0xf]
      %v2167 = vld [vmem:[%s3 + $0x134] sm:$0xf]
      %v2168 = vld [vmem:[%s3 + $0x138] sm:$0xf]
      %v2169 = vld [vmem:[%s3 + $0x13c] sm:$0xf]
      %v2170 = vld [vmem:[%s3 + $0x140] sm:$0xf]
      %v2171 = vld [vmem:[%s3 + $0x144] sm:$0xf]
      %v2172 = vld [vmem:[%s3 + $0x148] sm:$0xf]
      %v2173 = vld [vmem:[%s3 + $0x14c] sm:$0xf]
      %v2174 = vld [vmem:[%s3 + $0x150] sm:$0xf]
      %v2175 = vld [vmem:[%s3 + $0x154] sm:$0xf]
      %v2176 = vld [vmem:[%s3 + $0x158] sm:$0xf]
      %v2177 = vld [vmem:[%s3 + $0x15c] sm:$0xf]
      %v2178 = vld [vmem:[%s3 + $0x160] sm:$0xf]
      %v2179 = vld [vmem:[%s3 + $0x164] sm:$0xf]
      %v2180 = vld [vmem:[%s3 + $0x168] sm:$0xf]
      %v2181 = vld [vmem:[%s3 + $0x16c] sm:$0xf]
      %v2182 = vld [vmem:[%s3 + $0x170] sm:$0xf]
      %v2183 = vld [vmem:[%s3 + $0x174] sm:$0xf]
      %v2184 = vld [vmem:[%s3 + $0x178] sm:$0xf]
      %v2185 = vld [vmem:[%s3 + $0x17c] sm:$0xf]
      %v2186 = vld [vmem:[%s3 + $0x180] sm:$0xf]
      %v2187 = vld [vmem:[%s3 + $0x184] sm:$0xf]
      %v2188 = vld [vmem:[%s3 + $0x188] sm:$0xf]
      %v2189 = vld [vmem:[%s3 + $0x18c] sm:$0xf]
      %v2190 = vld [vmem:[%s3 + $0x190] sm:$0xf]
      %v2191 = vld [vmem:[%s3 + $0x194] sm:$0xf]
      %v2192 = vld [vmem:[%s3 + $0x198] sm:$0xf]
      %v2193 = vld [vmem:[%s3 + $0x19c] sm:$0xf]
      %v2194 = vld [vmem:[%s3 + $0x1a0] sm:$0xf]
      %v2195 = vld [vmem:[%s3 + $0x1a4] sm:$0xf]
      %v2196 = vld [vmem:[%s3 + $0x1a8] sm:$0xf]
      %v2197 = vld [vmem:[%s3 + $0x1ac] sm:$0xf]
      %v2198 = vld [vmem:[%s3 + $0x1b0] sm:$0xf]
      %v2199 = vld [vmem:[%s3 + $0x1b4] sm:$0xf]
      %v2200 = vld [vmem:[%s3 + $0x1b8] sm:$0xf]
      %v2201 = vld [vmem:[%s3 + $0x1bc] sm:$0xf]
      %v2202 = vld [vmem:[%s3 + $0x1c0] sm:$0xf]
      %v2203 = vld [vmem:[%s3 + $0x1c4] sm:$0xf]
      %v2204 = vld [vmem:[%s3 + $0x1c8] sm:$0xf]
      %v2205 = vld [vmem:[%s3 + $0x1cc] sm:$0xf]
      %v2206 = vld [vmem:[%s3 + $0x1d0] sm:$0xf]
      %v2207 = vld [vmem:[%s3 + $0x1d4] sm:$0xf]
      %v2208 = vld [vmem:[%s3 + $0x1d8] sm:$0xf]
      %v2209 = vld [vmem:[%s3 + $0x1dc] sm:$0xf]
      %v2210 = vld [vmem:[%s3 + $0x1e0] sm:$0xf]
      %v2211 = vld [vmem:[%s3 + $0x1e4] sm:$0xf]
      %v2212 = vld [vmem:[%s3 + $0x1e8] sm:$0xf]
      %v2213 = vld [vmem:[%s3 + $0x1ec] sm:$0xf]
      %v2214 = vld [vmem:[%s3 + $0x1f0] sm:$0xf]
      %v2215 = vld [vmem:[%s3 + $0x1f4] sm:$0xf]
      %v2216 = vld [vmem:[%s3 + $0x1f8] sm:$0xf]
      %v2217 = vld [vmem:[%s3 + $0x1fc] sm:$0xf]
      %v2218 = vld [vmem:[%s3 + $0x200] sm:$0xf]
      %v2219 = vld [vmem:[%s3 + $0x204] sm:$0xf]
      %v2220 = vld [vmem:[%s3 + $0x208] sm:$0xf]
      %v2221 = vld [vmem:[%s3 + $0x20c] sm:$0xf]
      %v2222 = vld [vmem:[%s3 + $0x210] sm:$0xf]
      %v2223 = vld [vmem:[%s3 + $0x214] sm:$0xf]
      %v2224 = vld [vmem:[%s3 + $0x218] sm:$0xf]
      %v2225 = vld [vmem:[%s3 + $0x21c] sm:$0xf]
      %v2226 = vld [vmem:[%s3 + $0x220] sm:$0xf]
      %v2227 = vld [vmem:[%s3 + $0x224] sm:$0xf]
      %v2228 = vld [vmem:[%s3 + $0x228] sm:$0xf]
      %v2229 = vld [vmem:[%s3 + $0x22c] sm:$0xf]
      %v2230 = vld [vmem:[%s3 + $0x230] sm:$0xf]
      %v2231 = vld [vmem:[%s3 + $0x234] sm:$0xf]
      %v2232 = vld [vmem:[%s3 + $0x238] sm:$0xf]
      %v2233 = vld [vmem:[%s3 + $0x23c] sm:$0xf]
      %v2234 = vld [vmem:[%s4] sm:$0x1]
      %v2236 = vlaneseq
      %v2237 = vshrl.u32 %v2236, 7
      %v2238 = vsub.s32 0, %v2237
      %v2239 = vrot.slane %v2234, %v2238
      %v2385 = vunpack.c.l.b16 %v2090
      %v2386 = vunpack.c.l.b16 %v2091
      %v2387 = vunpack.c.l.b16 %v2092
      %v2388 = vunpack.c.l.b16 %v2093
      %v2389 = vunpack.c.l.b16 %v2094
      %v2390 = vunpack.c.l.b16 %v2095
      %v2391 = vunpack.c.l.b16 %v2096
      %v2392 = vunpack.c.l.b16 %v2097
      %v2393 = vunpack.c.l.b16 %v2098
      %v2394 = vunpack.c.l.b16 %v2099
      %v2395 = vunpack.c.l.b16 %v2100
      %v2396 = vunpack.c.l.b16 %v2101
      %v2397 = vunpack.c.l.b16 %v2102
      %v2398 = vunpack.c.l.b16 %v2103
      %v2399 = vunpack.c.l.b16 %v2104
      %v2400 = vunpack.c.l.b16 %v2105
      %v2401 = vunpack.c.l.b16 %v2106
      %v2402 = vunpack.c.l.b16 %v2107
      %v2403 = vunpack.c.l.b16 %v2108
      %v2404 = vunpack.c.l.b16 %v2109
      %v2405 = vunpack.c.l.b16 %v2110
      %v2406 = vunpack.c.l.b16 %v2111
      %v2407 = vunpack.c.l.b16 %v2112
      %v2408 = vunpack.c.l.b16 %v2113
      %v2409 = vunpack.c.l.b16 %v2114
      %v2410 = vunpack.c.l.b16 %v2115
      %v2411 = vunpack.c.l.b16 %v2116
      %v2412 = vunpack.c.l.b16 %v2117
      %v2413 = vunpack.c.l.b16 %v2118
      %v2414 = vunpack.c.l.b16 %v2119
      %v2415 = vunpack.c.l.b16 %v2120
      %v2416 = vunpack.c.l.b16 %v2121
      %v2417 = vunpack.c.l.b16 %v2122
      %v2418 = vunpack.c.l.b16 %v2123
      %v2419 = vunpack.c.l.b16 %v2124
      %v2420 = vunpack.c.l.b16 %v2125
      %v2421 = vunpack.c.l.b16 %v2126
      %v2422 = vunpack.c.l.b16 %v2127
      %v2423 = vunpack.c.l.b16 %v2128
      %v2424 = vunpack.c.l.b16 %v2129
      %v2425 = vunpack.c.l.b16 %v2130
      %v2426 = vunpack.c.l.b16 %v2131
      %v2427 = vunpack.c.l.b16 %v2132
      %v2428 = vunpack.c.l.b16 %v2133
      %v2429 = vunpack.c.l.b16 %v2134
      %v2430 = vunpack.c.l.b16 %v2135
      %v2431 = vunpack.c.l.b16 %v2136
      %v2432 = vunpack.c.l.b16 %v2137
      %v2433 = vunpack.c.l.b16 %v2138
      %v2434 = vunpack.c.l.b16 %v2139
      %v2435 = vunpack.c.l.b16 %v2140
      %v2436 = vunpack.c.l.b16 %v2141
      %v2437 = vunpack.c.l.b16 %v2142
      %v2438 = vunpack.c.l.b16 %v2143
      %v2439 = vunpack.c.l.b16 %v2144
      %v2440 = vunpack.c.l.b16 %v2145
      %v2441 = vunpack.c.l.b16 %v2146
      %v2442 = vunpack.c.l.b16 %v2147
      %v2443 = vunpack.c.l.b16 %v2148
      %v2444 = vunpack.c.l.b16 %v2149
      %v2445 = vunpack.c.l.b16 %v2150
      %v2446 = vunpack.c.l.b16 %v2151
      %v2447 = vunpack.c.l.b16 %v2152
      %v2448 = vunpack.c.l.b16 %v2153
      %v2449 = vunpack.c.l.b16 %v2154
      %v2450 = vunpack.c.l.b16 %v2155
      %v2451 = vunpack.c.l.b16 %v2156
      %v2452 = vunpack.c.l.b16 %v2157
      %v2453 = vunpack.c.l.b16 %v2158
      %v2454 = vunpack.c.l.b16 %v2159
      %v2455 = vunpack.c.l.b16 %v2160
      %v2456 = vunpack.c.l.b16 %v2161
      %v2457 = vunpack.c.l.b16 %v2162
      %v2458 = vunpack.c.l.b16 %v2163
      %v2459 = vunpack.c.l.b16 %v2164
      %v2460 = vunpack.c.l.b16 %v2165
      %v2461 = vunpack.c.l.b16 %v2166
      %v2462 = vunpack.c.l.b16 %v2167
      %v2463 = vunpack.c.l.b16 %v2168
      %v2464 = vunpack.c.l.b16 %v2169
      %v2465 = vunpack.c.l.b16 %v2170
      %v2466 = vunpack.c.l.b16 %v2171
      %v2467 = vunpack.c.l.b16 %v2172
      %v2468 = vunpack.c.l.b16 %v2173
      %v2469 = vunpack.c.l.b16 %v2174
      %v2470 = vunpack.c.l.b16 %v2175
      %v2471 = vunpack.c.l.b16 %v2176
      %v2472 = vunpack.c.l.b16 %v2177
      %v2473 = vunpack.c.l.b16 %v2178
      %v2474 = vunpack.c.l.b16 %v2179
      %v2475 = vunpack.c.l.b16 %v2180
      %v2476 = vunpack.c.l.b16 %v2181
      %v2477 = vunpack.c.l.b16 %v2182
      %v2478 = vunpack.c.l.b16 %v2183
      %v2479 = vunpack.c.l.b16 %v2184
      %v2480 = vunpack.c.l.b16 %v2185
      %v2481 = vunpack.c.l.b16 %v2186
      %v2482 = vunpack.c.l.b16 %v2187
      %v2483 = vunpack.c.l.b16 %v2188
      %v2484 = vunpack.c.l.b16 %v2189
      %v2485 = vunpack.c.l.b16 %v2190
      %v2486 = vunpack.c.l.b16 %v2191
      %v2487 = vunpack.c.l.b16 %v2192
      %v2488 = vunpack.c.l.b16 %v2193
      %v2489 = vunpack.c.l.b16 %v2194
      %v2490 = vunpack.c.l.b16 %v2195
      %v2491 = vunpack.c.l.b16 %v2196
      %v2492 = vunpack.c.l.b16 %v2197
      %v2493 = vunpack.c.l.b16 %v2198
      %v2494 = vunpack.c.l.b16 %v2199
      %v2495 = vunpack.c.l.b16 %v2200
      %v2496 = vunpack.c.l.b16 %v2201
      %v2497 = vunpack.c.l.b16 %v2202
      %v2498 = vunpack.c.l.b16 %v2203
      %v2499 = vunpack.c.l.b16 %v2204
      %v2500 = vunpack.c.l.b16 %v2205
      %v2501 = vunpack.c.l.b16 %v2206
      %v2502 = vunpack.c.l.b16 %v2207
      %v2503 = vunpack.c.l.b16 %v2208
      %v2504 = vunpack.c.l.b16 %v2209
      %v2505 = vunpack.c.l.b16 %v2210
      %v2506 = vunpack.c.l.b16 %v2211
      %v2507 = vunpack.c.l.b16 %v2212
      %v2508 = vunpack.c.l.b16 %v2213
      %v2509 = vunpack.c.l.b16 %v2214
      %v2510 = vunpack.c.l.b16 %v2215
      %v2511 = vunpack.c.l.b16 %v2216
      %v2512 = vunpack.c.l.b16 %v2217
      %v2513 = vunpack.c.l.b16 %v2218
      %v2514 = vunpack.c.l.b16 %v2219
      %v2515 = vunpack.c.l.b16 %v2220
      %v2516 = vunpack.c.l.b16 %v2221
      %v2517 = vunpack.c.l.b16 %v2222
      %v2518 = vunpack.c.l.b16 %v2223
      %v2519 = vunpack.c.l.b16 %v2224
      %v2520 = vunpack.c.l.b16 %v2225
      %v2521 = vunpack.c.l.b16 %v2226
      %v2522 = vunpack.c.l.b16 %v2227
      %v2523 = vunpack.c.l.b16 %v2228
      %v2524 = vunpack.c.l.b16 %v2229
      %v2525 = vunpack.c.l.b16 %v2230
      %v2526 = vunpack.c.l.b16 %v2231
      %v2527 = vunpack.c.l.b16 %v2232
      %v2528 = vunpack.c.l.b16 %v2233
      %v2529 = vpack.c.b16 %v2386, %v2385
      %v2530 = vpack.c.b16 %v2388, %v2387
      %v2531 = vpack.c.b16 %v2390, %v2389
      %v2532 = vpack.c.b16 %v2392, %v2391
      %v2533 = vpack.c.b16 %v2394, %v2393
      %v2534 = vpack.c.b16 %v2396, %v2395
      %v2535 = vpack.c.b16 %v2398, %v2397
      %v2536 = vpack.c.b16 %v2400, %v2399
      %v2537 = vpack.c.b16 %v2402, %v2401
      %v2538 = vpack.c.b16 %v2404, %v2403
      %v2539 = vpack.c.b16 %v2406, %v2405
      %v2540 = vpack.c.b16 %v2408, %v2407
      %v2541 = vpack.c.b16 %v2410, %v2409
      %v2542 = vpack.c.b16 %v2412, %v2411
      %v2543 = vpack.c.b16 %v2414, %v2413
      %v2544 = vpack.c.b16 %v2416, %v2415
      %v2545 = vpack.c.b16 %v2418, %v2417
      %v2546 = vpack.c.b16 %v2420, %v2419
      %v2547 = vpack.c.b16 %v2422, %v2421
      %v2548 = vpack.c.b16 %v2424, %v2423
      %v2549 = vpack.c.b16 %v2426, %v2425
      %v2550 = vpack.c.b16 %v2428, %v2427
      %v2551 = vpack.c.b16 %v2430, %v2429
      %v2552 = vpack.c.b16 %v2432, %v2431
      %v2553 = vpack.c.b16 %v2434, %v2433
      %v2554 = vpack.c.b16 %v2436, %v2435
      %v2555 = vpack.c.b16 %v2438, %v2437
      %v2556 = vpack.c.b16 %v2440, %v2439
      %v2557 = vpack.c.b16 %v2442, %v2441
      %v2558 = vpack.c.b16 %v2444, %v2443
      %v2559 = vpack.c.b16 %v2446, %v2445
      %v2560 = vpack.c.b16 %v2448, %v2447
      %v2561 = vpack.c.b16 %v2450, %v2449
      %v2562 = vpack.c.b16 %v2452, %v2451
      %v2563 = vpack.c.b16 %v2454, %v2453
      %v2564 = vpack.c.b16 %v2456, %v2455
      %v2565 = vpack.c.b16 %v2458, %v2457
      %v2566 = vpack.c.b16 %v2460, %v2459
      %v2567 = vpack.c.b16 %v2462, %v2461
      %v2568 = vpack.c.b16 %v2464, %v2463
      %v2569 = vpack.c.b16 %v2466, %v2465
      %v2570 = vpack.c.b16 %v2468, %v2467
      %v2571 = vpack.c.b16 %v2470, %v2469
      %v2572 = vpack.c.b16 %v2472, %v2471
      %v2573 = vpack.c.b16 %v2474, %v2473
      %v2574 = vpack.c.b16 %v2476, %v2475
      %v2575 = vpack.c.b16 %v2478, %v2477
      %v2576 = vpack.c.b16 %v2480, %v2479
      %v2577 = vpack.c.b16 %v2482, %v2481
      %v2578 = vpack.c.b16 %v2484, %v2483
      %v2579 = vpack.c.b16 %v2486, %v2485
      %v2580 = vpack.c.b16 %v2488, %v2487
      %v2581 = vpack.c.b16 %v2490, %v2489
      %v2582 = vpack.c.b16 %v2492, %v2491
      %v2583 = vpack.c.b16 %v2494, %v2493
      %v2584 = vpack.c.b16 %v2496, %v2495
      %v2585 = vpack.c.b16 %v2498, %v2497
      %v2586 = vpack.c.b16 %v2500, %v2499
      %v2587 = vpack.c.b16 %v2502, %v2501
      %v2588 = vpack.c.b16 %v2504, %v2503
      %v2589 = vpack.c.b16 %v2506, %v2505
      %v2590 = vpack.c.b16 %v2508, %v2507
      %v2591 = vpack.c.b16 %v2510, %v2509
      %v2592 = vpack.c.b16 %v2512, %v2511
      %v2593 = vpack.c.b16 %v2514, %v2513
      %v2594 = vpack.c.b16 %v2516, %v2515
      %v2595 = vpack.c.b16 %v2518, %v2517
      %v2596 = vpack.c.b16 %v2520, %v2519
      %v2597 = vpack.c.b16 %v2522, %v2521
      %v2598 = vpack.c.b16 %v2524, %v2523
      %v2599 = vpack.c.b16 %v2526, %v2525
      %v2600 = vpack.c.b16 %v2528, %v2527
      %2673 = vmatprep.subr.bf16.mxu0 0
      %2674 = vmatpush1.bf16.msra.mxu0 %v2529
      %2675 = vmatprep.subr.bf16.mxu0 0
      %2676 = vmatpush1.bf16.msra.mxu0 %v2530
      %2677 = vmatprep.subr.bf16.mxu0 0
      %2678 = vmatpush1.bf16.msra.mxu0 %v2531
      %2679 = vmatprep.subr.bf16.mxu0 0
      %2680 = vmatpush1.bf16.msra.mxu0 %v2532
      %2681 = vmatprep.subr.bf16.mxu0 0
      %2682 = vmatpush1.bf16.msra.mxu0 %v2533
      %2683 = vmatprep.subr.bf16.mxu0 0
      %2684 = vmatpush1.bf16.msra.mxu0 %v2534
      %2685 = vmatprep.subr.bf16.mxu0 0
      %2686 = vmatpush1.bf16.msra.mxu0 %v2535
      %2687 = vmatprep.subr.bf16.mxu0 0
      %2688 = vmatpush1.bf16.msra.mxu0 %v2536
      %2689 = vmatprep.subr.bf16.mxu0 0
      %2690 = vmatpush1.bf16.msra.mxu0 %v2537
      %2691 = vmatprep.subr.bf16.mxu0 0
      %2692 = vmatpush1.bf16.msra.mxu0 %v2538
      %2693 = vmatprep.subr.bf16.mxu0 0
      %2694 = vmatpush1.bf16.msra.mxu0 %v2539
      %2695 = vmatprep.subr.bf16.mxu0 0
      %2696 = vmatpush1.bf16.msra.mxu0 %v2540
      %2697 = vmatprep.subr.bf16.mxu0 0
      %2698 = vmatpush1.bf16.msra.mxu0 %v2541
      %2699 = vmatprep.subr.bf16.mxu0 0
      %2700 = vmatpush1.bf16.msra.mxu0 %v2542
      %2701 = vmatprep.subr.bf16.mxu0 0
      %2702 = vmatpush1.bf16.msra.mxu0 %v2543
      %2703 = vmatprep.subr.bf16.mxu0 0
      %2704 = vmatpush1.bf16.msra.mxu0 %v2544
      %2705 = vmatprep.mubr.bf16.mxu0 %v2001
      %2706 = vmatmul.mubr.bf16.gmra.mrb[0].mxu0 %v1989
      %v2707 = vpop.f32.mrb[0].mxu0
      %v2708 = vadd.f32 %v2239, %v2707
      %v2709 = vpop.f32.mrb[0].mxu0
      %v2710 = vpop.f32.mrb[0].mxu0
      %v2711 = vadd.f32 %v2239, %v2710
      %v2712 = vpop.f32.mrb[0].mxu0
      %2713 = vmatprep.mubr.bf16.mxu0 %v2002
      %2714 = vmatmul.mubr.bf16.gmra.mrb[0].mxu0 %v1990
      %v2715 = vpop.f32.mrb[0].mxu0
      %v2716 = vadd.f32 %v2239, %v2715
      %v2717 = vpop.f32.mrb[0].mxu0
      %v2718 = vpop.f32.mrb[0].mxu0
      %v2719 = vadd.f32 %v2239, %v2718
      %v2720 = vpop.f32.mrb[0].mxu0
      %2721 = vmatprep.mubr.bf16.mxu0 %v2003
      %2722 = vmatmul.mubr.bf16.gmra.mrb[0].mxu0 %v1991
      %v2723 = vpop.f32.mrb[0].mxu0
      %v2724 = vadd.f32 %v2239, %v2723
      %v2725 = vpop.f32.mrb[0].mxu0
      %v2726 = vpop.f32.mrb[0].mxu0
      %v2727 = vadd.f32 %v2239, %v2726
      %v2728 = vpop.f32.mrb[0].mxu0
      %2729 = vmatprep.mubr.bf16.mxu0 %v2004
      %2730 = vmatmul.mubr.bf16.gmra.mrb[0].mxu0 %v1992
      %v2731 = vpop.f32.mrb[0].mxu0
      %v2732 = vadd.f32 %v2239, %v2731
      %v2733 = vpop.f32.mrb[0].mxu0
      %v2734 = vpop.f32.mrb[0].mxu0
      %v2735 = vadd.f32 %v2239, %v2734
      %v2736 = vpop.f32.mrb[0].mxu0
      %2737 = vdwg.mxu0
      %2738 = vmatprep.subr.bf16.mxu0 0
      %2739 = vmatpush1.bf16.msra.mxu0 %v2545
      %2740 = vmatprep.subr.bf16.mxu0 0
      %2741 = vmatpush1.bf16.msra.mxu0 %v2546
      %2742 = vmatprep.subr.bf16.mxu0 0
      %2743 = vmatpush1.bf16.msra.mxu0 %v2547
      %2744 = vmatprep.subr.bf16.mxu0 0
      %2745 = vmatpush1.bf16.msra.mxu0 %v2548
      %2746 = vmatprep.subr.bf16.mxu0 0
      %2747 = vmatpush1.bf16.msra.mxu0 %v2549
      %2748 = vmatprep.subr.bf16.mxu0 0
      %2749 = vmatpush1.bf16.msra.mxu0 %v2550
      %2750 = vmatprep.subr.bf16.mxu0 0
      %2751 = vmatpush1.bf16.msra.mxu0 %v2551
      %2752 = vmatprep.subr.bf16.mxu0 0
      %2753 = vmatpush1.bf16.msra.mxu0 %v2552
      %2754 = vmatprep.subr.bf16.mxu0 0
      %2755 = vmatpush1.bf16.msra.mxu0 %v2553
      %2756 = vmatprep.subr.bf16.mxu0 0
      %2757 = vmatpush1.bf16.msra.mxu0 %v2554
      %2758 = vmatprep.subr.bf16.mxu0 0
      %2759 = vmatpush1.bf16.msra.mxu0 %v2555
      %2760 = vmatprep.subr.bf16.mxu0 0
      %2761 = vmatpush1.bf16.msra.mxu0 %v2556
      %2762 = vmatprep.subr.bf16.mxu0 0
      %2763 = vmatpush1.bf16.msra.mxu0 %v2557
      %2764 = vmatprep.subr.bf16.mxu0 0
      %2765 = vmatpush1.bf16.msra.mxu0 %v2558
      %2766 = vmatprep.subr.bf16.mxu0 0
      %2767 = vmatpush1.bf16.msra.mxu0 %v2559
      %2768 = vmatprep.subr.bf16.mxu0 0
      %2769 = vmatpush1.bf16.msra.mxu0 %v2560
      %2770 = vmatprep.mubr.bf16.mxu0 %v2025
      %2771 = vmatmul.mubr.bf16.gmra.mrb[0].mxu0 %v2013
      %v2772 = vpop.f32.mrb[0].mxu0
      %v2773 = vadd.f32 %v2708, %v2772
      %v2774 = vpop.f32.mrb[0].mxu0
      %v2775 = vpop.f32.mrb[0].mxu0
      %v2776 = vadd.f32 %v2711, %v2775
      %v2777 = vpop.f32.mrb[0].mxu0
      %2778 = vmatprep.mubr.bf16.mxu0 %v2026
      %2779 = vmatmul.mubr.bf16.gmra.mrb[0].mxu0 %v2014
      %v2780 = vpop.f32.mrb[0].mxu0
      %v2781 = vadd.f32 %v2716, %v2780
      %v2782 = vpop.f32.mrb[0].mxu0
      %v2783 = vpop.f32.mrb[0].mxu0
      %v2784 = vadd.f32 %v2719, %v2783
      %v2785 = vpop.f32.mrb[0].mxu0
      %2786 = vmatprep.mubr.bf16.mxu0 %v2027
      %2787 = vmatmul.mubr.bf16.gmra.mrb[0].mxu0 %v2015
      %v2788 = vpop.f32.mrb[0].mxu0
      %v2789 = vadd.f32 %v2724, %v2788
      %v2790 = vpop.f32.mrb[0].mxu0
      %v2791 = vpop.f32.mrb[0].mxu0
      %v2792 = vadd.f32 %v2727, %v2791
      %v2793 = vpop.f32.mrb[0].mxu0
      %2794 = vmatprep.mubr.bf16.mxu0 %v2028
      %2795 = vmatmul.mubr.bf16.gmra.mrb[0].mxu0 %v2016
      %v2796 = vpop.f32.mrb[0].mxu0
      %v2797 = vadd.f32 %v2732, %v2796
      %v2798 = vpop.f32.mrb[0].mxu0
      %v2799 = vpop.f32.mrb[0].mxu0
      %v2800 = vadd.f32 %v2735, %v2799
      %v2801 = vpop.f32.mrb[0].mxu0
      %2802 = vdwg.mxu0
      %2803 = vmatprep.subr.bf16.mxu0 0
      %2804 = vmatpush1.bf16.msra.mxu0 %v2561
      %2805 = vmatprep.subr.bf16.mxu0 0
      %2806 = vmatpush1.bf16.msra.mxu0 %v2562
      %2807 = vmatprep.subr.bf16.mxu0 0
      %2808 = vmatpush1.bf16.msra.mxu0 %v2563
      %2809 = vmatprep.subr.bf16.mxu0 0
      %2810 = vmatpush1.bf16.msra.mxu0 %v2564
      %2811 = vmatprep.subr.bf16.mxu0 0
      %2812 = vmatpush1.bf16.msra.mxu0 %v2565
      %2813 = vmatprep.subr.bf16.mxu0 0
      %2814 = vmatpush1.bf16.msra.mxu0 %v2566
      %2815 = vmatprep.subr.bf16.mxu0 0
      %2816 = vmatpush1.bf16.msra.mxu0 %v2567
      %2817 = vmatprep.subr.bf16.mxu0 0
      %2818 = vmatpush1.bf16.msra.mxu0 %v2568
      %2819 = vmatprep.subr.bf16.mxu0 0
      %2820 = vmatpush1.bf16.msra.mxu0 %v2569
      %2821 = vmatprep.subr.bf16.mxu0 0
      %2822 = vmatpush1.bf16.msra.mxu0 %v2570
      %2823 = vmatprep.subr.bf16.mxu0 0
      %2824 = vmatpush1.bf16.msra.mxu0 %v2571
      %2825 = vmatprep.subr.bf16.mxu0 0
      %2826 = vmatpush1.bf16.msra.mxu0 %v2572
      %2827 = vmatprep.subr.bf16.mxu0 0
      %2828 = vmatpush1.bf16.msra.mxu0 %v2573
      %2829 = vmatprep.subr.bf16.mxu0 0
      %2830 = vmatpush1.bf16.msra.mxu0 %v2574
      %2831 = vmatprep.subr.bf16.mxu0 0
      %2832 = vmatpush1.bf16.msra.mxu0 %v2575
      %2833 = vmatprep.subr.bf16.mxu0 0
      %2834 = vmatpush1.bf16.msra.mxu0 %v2576
      %2835 = vmatprep.mubr.bf16.mxu0 %v2049
      %2836 = vmatmul.mubr.bf16.gmra.mrb[0].mxu0 %v2037
      %v2837 = vpop.f32.mrb[0].mxu0
      %v2838 = vadd.f32 %v2773, %v2837
      %v2839 = vpop.f32.mrb[0].mxu0
      %v2840 = vpop.f32.mrb[0].mxu0
      %v2841 = vadd.f32 %v2776, %v2840
      %v2842 = vpop.f32.mrb[0].mxu0
      %2843 = vmatprep.mubr.bf16.mxu0 %v2050
      %2844 = vmatmul.mubr.bf16.gmra.mrb[0].mxu0 %v2038
      %v2845 = vpop.f32.mrb[0].mxu0
      %v2846 = vadd.f32 %v2781, %v2845
      %v2847 = vpop.f32.mrb[0].mxu0
      %v2848 = vpop.f32.mrb[0].mxu0
      %v2849 = vadd.f32 %v2784, %v2848
      %v2850 = vpop.f32.mrb[0].mxu0
      %2851 = vmatprep.mubr.bf16.mxu0 %v2051
      %2852 = vmatmul.mubr.bf16.gmra.mrb[0].mxu0 %v2039
      %v2853 = vpop.f32.mrb[0].mxu0
      %v2854 = vadd.f32 %v2789, %v2853
      %v2855 = vpop.f32.mrb[0].mxu0
      %v2856 = vpop.f32.mrb[0].mxu0
      %v2857 = vadd.f32 %v2792, %v2856
      %v2858 = vpop.f32.mrb[0].mxu0
      %2859 = vmatprep.mubr.bf16.mxu0 %v2052
      %2860 = vmatmul.mubr.bf16.gmra.mrb[0].mxu0 %v2040
      %v2861 = vpop.f32.mrb[0].mxu0
      %v2862 = vadd.f32 %v2797, %v2861
      %v2863 = vpop.f32.mrb[0].mxu0
      %v2864 = vpop.f32.mrb[0].mxu0
      %v2865 = vadd.f32 %v2800, %v2864
      %v2866 = vpop.f32.mrb[0].mxu0
      %2867 = vdwg.mxu0
      %2868 = vmatprep.subr.bf16.mxu0 0
      %2869 = vmatpush1.bf16.msra.mxu0 %v2577
      %2870 = vmatprep.subr.bf16.mxu0 0
      %2871 = vmatpush1.bf16.msra.mxu0 %v2578
      %2872 = vmatprep.subr.bf16.mxu0 0
      %2873 = vmatpush1.bf16.msra.mxu0 %v2579
      %2874 = vmatprep.subr.bf16.mxu0 0
      %2875 = vmatpush1.bf16.msra.mxu0 %v2580
      %2876 = vmatprep.subr.bf16.mxu0 0
      %2877 = vmatpush1.bf16.msra.mxu0 %v2581
      %2878 = vmatprep.subr.bf16.mxu0 0
      %2879 = vmatpush1.bf16.msra.mxu0 %v2582
      %2880 = vmatprep.subr.bf16.mxu0 0
      %2881 = vmatpush1.bf16.msra.mxu0 %v2583
      %2882 = vmatprep.subr.bf16.mxu0 0
      %2883 = vmatpush1.bf16.msra.mxu0 %v2584
      %2884 = vmatprep.subr.bf16.mxu0 0
      %2885 = vmatpush1.bf16.msra.mxu0 %v2585
      %2886 = vmatprep.subr.bf16.mxu0 0
      %2887 = vmatpush1.bf16.msra.mxu0 %v2586
      %2888 = vmatprep.subr.bf16.mxu0 0
      %2889 = vmatpush1.bf16.msra.mxu0 %v2587
      %2890 = vmatprep.subr.bf16.mxu0 0
      %2891 = vmatpush1.bf16.msra.mxu0 %v2588
      %2892 = vmatprep.subr.bf16.mxu0 0
      %2893 = vmatpush1.bf16.msra.mxu0 %v2589
      %2894 = vmatprep.subr.bf16.mxu0 0
      %2895 = vmatpush1.bf16.msra.mxu0 %v2590
      %2896 = vmatprep.subr.bf16.mxu0 0
      %2897 = vmatpush1.bf16.msra.mxu0 %v2591
      %2898 = vmatprep.subr.bf16.mxu0 0
      %2899 = vmatpush1.bf16.msra.mxu0 %v2592
      %2900 = vmatprep.mubr.bf16.mxu0 %v2074
      %2901 = vmatmul.mubr.bf16.gmra.mrb[0].mxu0 %v2062
      %v2902 = vpop.f32.mrb[0].mxu0
      %v2903 = vadd.f32 %v2838, %v2902
      %v2904 = vpop.f32.mrb[0].mxu0
      %v2905 = vpop.f32.mrb[0].mxu0
      %v2906 = vadd.f32 %v2841, %v2905
      %v2907 = vpop.f32.mrb[0].mxu0
      %2908 = vmatprep.mubr.bf16.mxu0 %v2075
      %2909 = vmatmul.mubr.bf16.gmra.mrb[0].mxu0 %v2063
      %v2910 = vpop.f32.mrb[0].mxu0
      %v2911 = vadd.f32 %v2846, %v2910
      %v2912 = vpop.f32.mrb[0].mxu0
      %v2913 = vpop.f32.mrb[0].mxu0
      %v2914 = vadd.f32 %v2849, %v2913
      %v2915 = vpop.f32.mrb[0].mxu0
      %2916 = vmatprep.mubr.bf16.mxu0 %v2076
      %2917 = vmatmul.mubr.bf16.gmra.mrb[0].mxu0 %v2064
      %v2918 = vpop.f32.mrb[0].mxu0
      %v2919 = vadd.f32 %v2854, %v2918
      %v2920 = vpop.f32.mrb[0].mxu0
      %v2921 = vpop.f32.mrb[0].mxu0
      %v2922 = vadd.f32 %v2857, %v2921
      %v2923 = vpop.f32.mrb[0].mxu0
      %2924 = vmatprep.mubr.bf16.mxu0 %v2077
      %2925 = vmatmul.mubr.bf16.gmra.mrb[0].mxu0 %v2065
      %v2926 = vpop.f32.mrb[0].mxu0
      %v2927 = vadd.f32 %v2862, %v2926
      %v2928 = vpop.f32.mrb[0].mxu0
      %v2929 = vpop.f32.mrb[0].mxu0
      %v2930 = vadd.f32 %v2865, %v2929
      %v2931 = vpop.f32.mrb[0].mxu0
      %2932 = vdwg.mxu0
      %2933 = vmatprep.subr.bf16.mxu0 0
      %2934 = vmatpush1.bf16.msra.mxu0 %v2593
      %2935 = vmatprep.subr.bf16.mxu0 0
      %2936 = vmatpush1.bf16.msra.mxu0 %v2594
      %2937 = vmatprep.subr.bf16.mxu0 0
      %2938 = vmatpush1.bf16.msra.mxu0 %v2595
      %2939 = vmatprep.subr.bf16.mxu0 0
      %2940 = vmatpush1.bf16.msra.mxu0 %v2596
      %2941 = vmatprep.subr.bf16.mxu0 0
      %2942 = vmatpush1.bf16.msra.mxu0 %v2597
      %2943 = vmatprep.subr.bf16.mxu0 0
      %2944 = vmatpush1.bf16.msra.mxu0 %v2598
      %2945 = vmatprep.subr.bf16.mxu0 0
      %2946 = vmatpush1.bf16.msra.mxu0 %v2599
      %2947 = vmatprep.subr.bf16.mxu0 0
      %2948 = vmatpush1.bf16.msra.mxu0 %v2600
      %2949 = vmatprep.subr.bf16.mxu0 0
      %2950 = vmatpush1.bf16.msra.mxu0 0
      %2951 = vmatprep.subr.bf16.mxu0 0
      %2952 = vmatpush1.bf16.msra.mxu0 0
      %2953 = vmatprep.subr.bf16.mxu0 0
      %2954 = vmatpush1.bf16.msra.mxu0 0
      %2955 = vmatprep.subr.bf16.mxu0 0
      %2956 = vmatpush1.bf16.msra.mxu0 0
      %2957 = vmatprep.subr.bf16.mxu0 0
      %2958 = vmatpush1.bf16.msra.mxu0 0
      %2959 = vmatprep.subr.bf16.mxu0 0
      %2960 = vmatpush1.bf16.msra.mxu0 0
      %2961 = vmatprep.subr.bf16.mxu0 0
      %2962 = vmatpush1.bf16.msra.mxu0 0
      %2963 = vmatprep.subr.bf16.mxu0 0
      %2964 = vmatpush1.bf16.msra.mxu0 0
      %2965 = vmatprep.mubr.bf16.mxu0 0
      %2966 = vmatmul.mubr.bf16.gmra.mrb[0].mxu0 %v2086
      %v2967 = vpop.f32.mrb[0].mxu0
      %v2968 = vadd.f32 %v2903, %v2967
      %v2969 = vpop.f32.mrb[0].mxu0
      %v2970 = vpop.f32.mrb[0].mxu0
      %v2971 = vadd.f32 %v2906, %v2970
      %v2972 = vpop.f32.mrb[0].mxu0
      %2973 = vmatprep.mubr.bf16.mxu0 0
      %2974 = vmatmul.mubr.bf16.gmra.mrb[0].mxu0 %v2087
      %v2975 = vpop.f32.mrb[0].mxu0
      %v2976 = vadd.f32 %v2911, %v2975
      %v2977 = vpop.f32.mrb[0].mxu0
      %v2978 = vpop.f32.mrb[0].mxu0
      %v2979 = vadd.f32 %v2914, %v2978
      %v2980 = vpop.f32.mrb[0].mxu0
      %2981 = vmatprep.mubr.bf16.mxu0 0
      %2982 = vmatmul.mubr.bf16.gmra.mrb[0].mxu0 %v2088
      %v2983 = vpop.f32.mrb[0].mxu0
      %v2984 = vadd.f32 %v2919, %v2983
      %v2985 = vpop.f32.mrb[0].mxu0
      %v2986 = vpop.f32.mrb[0].mxu0
      %v2987 = vadd.f32 %v2922, %v2986
      %v2988 = vpop.f32.mrb[0].mxu0
      %2989 = vmatprep.mubr.bf16.mxu0 0
      %2990 = vmatmul.mubr.bf16.gmra.mrb[0].mxu0 %v2089
      %v2991 = vpop.f32.mrb[0].mxu0
      %v2992 = vadd.f32 %v2927, %v2991
      %v2993 = vpop.f32.mrb[0].mxu0
      %v2994 = vpop.f32.mrb[0].mxu0
      %v2995 = vadd.f32 %v2930, %v2994
      %v2996 = vpop.f32.mrb[0].mxu0
      %2997 = vdwg.mxu0
      %v2998 = vld [vmem:[%s5] sm:$0xf]
      %v2999 = vld [vmem:[%s5 + $0x4] sm:$0xf]
      %v3000 = vld [vmem:[%s5 + $0x8] sm:$0xf]
      %v3001 = vld [vmem:[%s5 + $0xc] sm:$0xf]
      %v3002 = vld [vmem:[%s5 + $0x10] sm:$0xf]
      %v3003 = vld [vmem:[%s5 + $0x14] sm:$0xf]
      %v3004 = vld [vmem:[%s5 + $0x18] sm:$0xf]
      %v3005 = vld [vmem:[%s5 + $0x1c] sm:$0xf]
      %v3006 = vld [vmem:[%s5 + $0x20] sm:$0xf]
      %v3007 = vld [vmem:[%s5 + $0x24] sm:$0xf]
      %v3008 = vld [vmem:[%s5 + $0x28] sm:$0xf]
      %v3009 = vld [vmem:[%s5 + $0x2c] sm:$0xf]
      %v3010 = vld [vmem:[%s5 + $0x30] sm:$0xf]
      %v3011 = vld [vmem:[%s5 + $0x34] sm:$0xf]
      %v3012 = vld [vmem:[%s5 + $0x38] sm:$0xf]
      %v3013 = vld [vmem:[%s5 + $0x3c] sm:$0xf]
      %v3014 = vld [vmem:[%s6] sm:$0x1]
      %v3016 = vlaneseq
      %v3017 = vshrl.u32 %v3016, 7
      %v3018 = vsub.s32 0, %v3017
      %v3019 = vrot.slane %v3014, %v3018
      %v3037 = vunpack.c.l.b16 %v2998
      %v3038 = vunpack.c.l.b16 %v2999
      %v3039 = vunpack.c.l.b16 %v3000
      %v3040 = vunpack.c.l.b16 %v3001
      %v3041 = vunpack.c.l.b16 %v3002
      %v3042 = vunpack.c.l.b16 %v3003
      %v3043 = vunpack.c.l.b16 %v3004
      %v3044 = vunpack.c.l.b16 %v3005
      %v3045 = vunpack.c.l.b16 %v3006
      %v3046 = vunpack.c.l.b16 %v3007
      %v3047 = vunpack.c.l.b16 %v3008
      %v3048 = vunpack.c.l.b16 %v3009
      %v3049 = vunpack.c.l.b16 %v3010
      %v3050 = vunpack.c.l.b16 %v3011
      %v3051 = vunpack.c.l.b16 %v3012
      %v3052 = vunpack.c.l.b16 %v3013
      %v3053 = vpack.c.b16 %v3038, %v3037
      %v3054 = vpack.c.b16 %v3040, %v3039
      %v3055 = vpack.c.b16 %v3042, %v3041
      %v3056 = vpack.c.b16 %v3044, %v3043
      %v3057 = vpack.c.b16 %v3046, %v3045
      %v3058 = vpack.c.b16 %v3048, %v3047
      %v3059 = vpack.c.b16 %v3050, %v3049
      %v3060 = vpack.c.b16 %v3052, %v3051
      %3069 = vmatprep.subr.bf16.mxu0 0
      %3070 = vmatpush1.bf16.msra.mxu0 %v3053
      %3071 = vmatprep.subr.bf16.mxu0 0
      %3072 = vmatpush1.bf16.msra.mxu0 %v3054
      %3073 = vmatprep.subr.bf16.mxu0 0
      %3074 = vmatpush1.bf16.msra.mxu0 %v3055
      %3075 = vmatprep.subr.bf16.mxu0 0
      %3076 = vmatpush1.bf16.msra.mxu0 %v3056
      %3077 = vmatprep.subr.bf16.mxu0 0
      %3078 = vmatpush1.bf16.msra.mxu0 %v3057
      %3079 = vmatprep.subr.bf16.mxu0 0
      %3080 = vmatpush1.bf16.msra.mxu0 %v3058
      %3081 = vmatprep.subr.bf16.mxu0 0
      %3082 = vmatpush1.bf16.msra.mxu0 %v3059
      %3083 = vmatprep.subr.bf16.mxu0 0
      %3084 = vmatpush1.bf16.msra.mxu0 %v3060
      %3085 = vmatprep.subr.bf16.mxu0 0
      %3086 = vmatpush1.bf16.msra.mxu0 0
      %3087 = vmatprep.subr.bf16.mxu0 0
      %3088 = vmatpush1.bf16.msra.mxu0 0
      %3089 = vmatprep.subr.bf16.mxu0 0
      %3090 = vmatpush1.bf16.msra.mxu0 0
      %3091 = vmatprep.subr.bf16.mxu0 0
      %3092 = vmatpush1.bf16.msra.mxu0 0
      %3093 = vmatprep.subr.bf16.mxu0 0
      %3094 = vmatpush1.bf16.msra.mxu0 0
      %3095 = vmatprep.subr.bf16.mxu0 0
      %3096 = vmatpush1.bf16.msra.mxu0 0
      %3097 = vmatprep.subr.bf16.mxu0 0
      %3098 = vmatpush1.bf16.msra.mxu0 0
      %3099 = vmatprep.subr.bf16.mxu0 0
      %3100 = vmatpush1.bf16.msra.mxu0 0
      %3101 = vmatprep.mubr.bf16.mxu0 0
      %3102 = vmatmul.mubr.bf16.gmra.mrb[0].mxu0 %v968
      %v3103 = vpop.f32.mrb[0].mxu0
      %v3104 = vadd.f32 %v3019, %v3103
      %v3105 = vpop.f32.mrb[0].mxu0
      %v3106 = vpop.f32.mrb[0].mxu0
      %v3107 = vadd.f32 %v3019, %v3106
      %v3108 = vpop.f32.mrb[0].mxu0
      %3109 = vmatprep.mubr.bf16.mxu0 0
      %3110 = vmatmul.mubr.bf16.gmra.mrb[0].mxu0 %v969
      %v3111 = vpop.f32.mrb[0].mxu0
      %v3112 = vadd.f32 %v3019, %v3111
      %v3113 = vpop.f32.mrb[0].mxu0
      %v3114 = vpop.f32.mrb[0].mxu0
      %v3115 = vadd.f32 %v3019, %v3114
      %v3116 = vpop.f32.mrb[0].mxu0
      %3117 = vmatprep.mubr.bf16.mxu0 0
      %3118 = vmatmul.mubr.bf16.gmra.mrb[0].mxu0 %v970
      %v3119 = vpop.f32.mrb[0].mxu0
      %v3120 = vadd.f32 %v3019, %v3119
      %v3121 = vpop.f32.mrb[0].mxu0
      %v3122 = vpop.f32.mrb[0].mxu0
      %v3123 = vadd.f32 %v3019, %v3122
      %v3124 = vpop.f32.mrb[0].mxu0
      %3125 = vmatprep.mubr.bf16.mxu0 0
      %3126 = vmatmul.mubr.bf16.gmra.mrb[0].mxu0 %v971
      %v3127 = vpop.f32.mrb[0].mxu0
      %v3128 = vadd.f32 %v3019, %v3127
      %v3129 = vpop.f32.mrb[0].mxu0
      %v3130 = vpop.f32.mrb[0].mxu0
      %v3131 = vadd.f32 %v3019, %v3130
      %v3132 = vpop.f32.mrb[0].mxu0
      %3133 = vdwg.mxu0
      %v3134 = vadd.f32 %v2968, %v3104
      %v3135 = vadd.f32 %v2971, %v3107
      %v3136 = vadd.f32 %v2976, %v3112
      %v3137 = vadd.f32 %v2979, %v3115
      %v3138 = vadd.f32 %v2984, %v3120
      %v3139 = vadd.f32 %v2987, %v3123
      %v3140 = vadd.f32 %v2992, %v3128
      %v3141 = vadd.f32 %v2995, %v3131
      %v3142 = vmax.f32 %v3134, 0.0
      %v3143 = vmax.f32 %v3135, 0.0
      %v3144 = vmax.f32 %v3136, 0.0
      %v3145 = vmax.f32 %v3137, 0.0
      %v3146 = vmax.f32 %v3138, 0.0
      %v3147 = vmax.f32 %v3139, 0.0
      %v3148 = vmax.f32 %v3140, 0.0
      %v3149 = vmax.f32 %v3141, 0.0
      %s3150 = scalar_lea.vmem [#allocation3], 16
      %3151 = vst [vmem:[%s3150 + $0x1] sm:$0xff] %v3142
      %3152 = vst [vmem:[%s3150 + $0x11] sm:$0xff] %v3143
      %3153 = vst [vmem:[%s3150 + $0x21] sm:$0xff] %v3144
      %3154 = vst [vmem:[%s3150 + $0x31] sm:$0xff] %v3145
      %3155 = vst [vmem:[%s3150 + $0x41] sm:$0xff] %v3146
      %3156 = vst [vmem:[%s3150 + $0x51] sm:$0xff] %v3147
      %3157 = vst [vmem:[%s3150 + $0x61] sm:$0xff] %v3148
      %3158 = vst [vmem:[%s3150 + $0x71] sm:$0xff] %v3149
      %v3159 = vld [vmem:[#allocation3] sm:$0xff]
      %v3160 = vld [vmem:[#allocation3 + $0x10] sm:$0xff]
      %v3161 = vld [vmem:[#allocation3 + $0x20] sm:$0xff]
      %v3162 = vld [vmem:[#allocation3 + $0x30] sm:$0xff]
      %v3163 = vld [vmem:[#allocation3 + $0x40] sm:$0xff]
      %v3164 = vld [vmem:[#allocation3 + $0x50] sm:$0xff]
      %v3165 = vld [vmem:[#allocation3 + $0x60] sm:$0xff]
      %v3166 = vld [vmem:[#allocation3 + $0x70] sm:$0xff]
      %v3167 = vpack.c.bf16 %v3160, %v3159
      %v3168 = vpack.c.bf16 %v3162, %v3161
      %v3169 = vpack.c.bf16 %v3164, %v3163
      %v3170 = vpack.c.bf16 %v3166, %v3165
      %v3171 = vld [vmem:[#allocation3 + $0x1] sm:$0xff]
      %v3172 = vld [vmem:[#allocation3 + $0x11] sm:$0xff]
      %v3173 = vld [vmem:[#allocation3 + $0x21] sm:$0xff]
      %v3174 = vld [vmem:[#allocation3 + $0x31] sm:$0xff]
      %v3175 = vld [vmem:[#allocation3 + $0x41] sm:$0xff]
      %v3176 = vld [vmem:[#allocation3 + $0x51] sm:$0xff]
      %v3177 = vld [vmem:[#allocation3 + $0x61] sm:$0xff]
      %v3178 = vld [vmem:[#allocation3 + $0x71] sm:$0xff]
      %v3179 = vpack.c.bf16 %v3172, %v3171
      %v3180 = vpack.c.bf16 %v3174, %v3173
      %v3181 = vpack.c.bf16 %v3176, %v3175
      %v3182 = vpack.c.bf16 %v3178, %v3177
      %v3183 = vld [vmem:[#allocation3 + $0x2] sm:$0xff]
      %v3184 = vld [vmem:[#allocation3 + $0x12] sm:$0xff]
      %v3185 = vld [vmem:[#allocation3 + $0x22] sm:$0xff]
      %v3186 = vld [vmem:[#allocation3 + $0x32] sm:$0xff]
      %v3187 = vld [vmem:[#allocation3 + $0x42] sm:$0xff]
      %v3188 = vld [vmem:[#allocation3 + $0x52] sm:$0xff]
      %v3189 = vld [vmem:[#allocation3 + $0x62] sm:$0xff]
      %v3190 = vld [vmem:[#allocation3 + $0x72] sm:$0xff]
      %v3191 = vpack.c.bf16 %v3184, %v3183
      %v3192 = vpack.c.bf16 %v3186, %v3185
      %v3193 = vpack.c.bf16 %v3188, %v3187
      %v3194 = vpack.c.bf16 %v3190, %v3189
      %v3195 = vld [vmem:[%s3150] sm:$0xff]
      %v3196 = vld [vmem:[%s3150 + $0x10] sm:$0xff]
      %v3197 = vld [vmem:[%s3150 + $0x20] sm:$0xff]
      %v3198 = vld [vmem:[%s3150 + $0x30] sm:$0xff]
      %v3199 = vld [vmem:[%s3150 + $0x40] sm:$0xff]
      %v3200 = vld [vmem:[%s3150 + $0x50] sm:$0xff]
      %v3201 = vld [vmem:[%s3150 + $0x60] sm:$0xff]
      %v3202 = vld [vmem:[%s3150 + $0x70] sm:$0xff]
      %v3203 = vpack.c.bf16 %v3196, %v3195
      %v3204 = vpack.c.bf16 %v3198, %v3197
      %v3205 = vpack.c.bf16 %v3200, %v3199
      %v3206 = vpack.c.bf16 %v3202, %v3201
      %v3207 = vld [vmem:[%s3150 + $0x1] sm:$0xff]
      %v3208 = vld [vmem:[%s3150 + $0x11] sm:$0xff]
      %v3209 = vld [vmem:[%s3150 + $0x21] sm:$0xff]
      %v3210 = vld [vmem:[%s3150 + $0x31] sm:$0xff]
      %v3211 = vld [vmem:[%s3150 + $0x41] sm:$0xff]
      %v3212 = vld [vmem:[%s3150 + $0x51] sm:$0xff]
      %v3213 = vld [vmem:[%s3150 + $0x61] sm:$0xff]
      %v3214 = vld [vmem:[%s3150 + $0x71] sm:$0xff]
      %v3215 = vpack.c.bf16 %v3208, %v3207
      %v3216 = vpack.c.bf16 %v3210, %v3209
      %v3217 = vpack.c.bf16 %v3212, %v3211
      %v3218 = vpack.c.bf16 %v3214, %v3213
      %v3219 = vld [vmem:[%s3150 + $0x2] sm:$0xff]
      %v3220 = vld [vmem:[%s3150 + $0x12] sm:$0xff]
      %v3221 = vld [vmem:[%s3150 + $0x22] sm:$0xff]
      %v3222 = vld [vmem:[%s3150 + $0x32] sm:$0xff]
      %v3223 = vld [vmem:[%s3150 + $0x42] sm:$0xff]
      %v3224 = vld [vmem:[%s3150 + $0x52] sm:$0xff]
      %v3225 = vld [vmem:[%s3150 + $0x62] sm:$0xff]
      %v3226 = vld [vmem:[%s3150 + $0x72] sm:$0xff]
      %v3227 = vpack.c.bf16 %v3220, %v3219
      %v3228 = vpack.c.bf16 %v3222, %v3221
      %v3229 = vpack.c.bf16 %v3224, %v3223
      %v3230 = vpack.c.bf16 %v3226, %v3225
      %s3231 = scalar_lea.vmem [#allocation3], 32
      %v3232 = vld [vmem:[%s3231] sm:$0xff]
      %v3233 = vld [vmem:[%s3231 + $0x10] sm:$0xff]
      %v3234 = vld [vmem:[%s3231 + $0x20] sm:$0xff]
      %v3235 = vld [vmem:[%s3231 + $0x30] sm:$0xff]
      %v3236 = vld [vmem:[%s3231 + $0x40] sm:$0xff]
      %v3237 = vld [vmem:[%s3231 + $0x50] sm:$0xff]
      %v3238 = vld [vmem:[%s3231 + $0x60] sm:$0xff]
      %v3239 = vld [vmem:[%s3231 + $0x70] sm:$0xff]
      %v3240 = vpack.c.bf16 %v3233, %v3232
      %v3241 = vpack.c.bf16 %v3235, %v3234
      %v3242 = vpack.c.bf16 %v3237, %v3236
      %v3243 = vpack.c.bf16 %v3239, %v3238
      %v3244 = vld [vmem:[%s3231 + $0x1] sm:$0xff]
      %v3245 = vld [vmem:[%s3231 + $0x11] sm:$0xff]
      %v3246 = vld [vmem:[%s3231 + $0x21] sm:$0xff]
      %v3247 = vld [vmem:[%s3231 + $0x31] sm:$0xff]
      %v3248 = vld [vmem:[%s3231 + $0x41] sm:$0xff]
      %v3249 = vld [vmem:[%s3231 + $0x51] sm:$0xff]
      %v3250 = vld [vmem:[%s3231 + $0x61] sm:$0xff]
      %v3251 = vld [vmem:[%s3231 + $0x71] sm:$0xff]
      %v3252 = vpack.c.bf16 %v3245, %v3244
      %v3253 = vpack.c.bf16 %v3247, %v3246
      %v3254 = vpack.c.bf16 %v3249, %v3248
      %v3255 = vpack.c.bf16 %v3251, %v3250
      %v3256 = vld [vmem:[%s3231 + $0x2] sm:$0xff]
      %v3257 = vld [vmem:[%s3231 + $0x12] sm:$0xff]
      %v3258 = vld [vmem:[%s3231 + $0x22] sm:$0xff]
      %v3259 = vld [vmem:[%s3231 + $0x32] sm:$0xff]
      %v3260 = vld [vmem:[%s3231 + $0x42] sm:$0xff]
      %v3261 = vld [vmem:[%s3231 + $0x52] sm:$0xff]
      %v3262 = vld [vmem:[%s3231 + $0x62] sm:$0xff]
      %v3263 = vld [vmem:[%s3231 + $0x72] sm:$0xff]
      %v3264 = vpack.c.bf16 %v3257, %v3256
      %v3265 = vpack.c.bf16 %v3259, %v3258
      %v3266 = vpack.c.bf16 %v3261, %v3260
      %v3267 = vpack.c.bf16 %v3263, %v3262
      %v3268 = vld [vmem:[%s7] sm:$0xf]
      %v3269 = vld [vmem:[%s7 + $0x4] sm:$0xf]
      %v3270 = vld [vmem:[%s7 + $0x8] sm:$0xf]
      %v3271 = vld [vmem:[%s7 + $0xc] sm:$0xf]
      %v3272 = vld [vmem:[%s7 + $0x10] sm:$0xf]
      %v3273 = vld [vmem:[%s7 + $0x14] sm:$0xf]
      %v3274 = vld [vmem:[%s7 + $0x18] sm:$0xf]
      %v3275 = vld [vmem:[%s7 + $0x1c] sm:$0xf]
      %v3276 = vld [vmem:[%s7 + $0x20] sm:$0xf]
      %v3277 = vld [vmem:[%s7 + $0x24] sm:$0xf]
      %v3278 = vld [vmem:[%s7 + $0x28] sm:$0xf]
      %v3279 = vld [vmem:[%s7 + $0x2c] sm:$0xf]
      %v3280 = vld [vmem:[%s7 + $0x30] sm:$0xf]
      %v3281 = vld [vmem:[%s7 + $0x34] sm:$0xf]
      %v3282 = vld [vmem:[%s7 + $0x38] sm:$0xf]
      %v3283 = vld [vmem:[%s7 + $0x3c] sm:$0xf]
      %v3284 = vld [vmem:[%s7 + $0x40] sm:$0xf]
      %v3285 = vld [vmem:[%s7 + $0x44] sm:$0xf]
      %v3286 = vld [vmem:[%s7 + $0x48] sm:$0xf]
      %v3287 = vld [vmem:[%s7 + $0x4c] sm:$0xf]
      %v3288 = vld [vmem:[%s7 + $0x50] sm:$0xf]
      %v3289 = vld [vmem:[%s7 + $0x54] sm:$0xf]
      %v3290 = vld [vmem:[%s7 + $0x58] sm:$0xf]
      %v3291 = vld [vmem:[%s7 + $0x5c] sm:$0xf]
      %v3292 = vld [vmem:[%s7 + $0x60] sm:$0xf]
      %v3293 = vld [vmem:[%s7 + $0x64] sm:$0xf]
      %v3294 = vld [vmem:[%s7 + $0x68] sm:$0xf]
      %v3295 = vld [vmem:[%s7 + $0x6c] sm:$0xf]
      %v3296 = vld [vmem:[%s7 + $0x70] sm:$0xf]
      %v3297 = vld [vmem:[%s7 + $0x74] sm:$0xf]
      %v3298 = vld [vmem:[%s7 + $0x78] sm:$0xf]
      %v3299 = vld [vmem:[%s7 + $0x7c] sm:$0xf]
      %v3300 = vld [vmem:[%s7 + $0x80] sm:$0xf]
      %v3301 = vld [vmem:[%s7 + $0x84] sm:$0xf]
      %v3302 = vld [vmem:[%s7 + $0x88] sm:$0xf]
      %v3303 = vld [vmem:[%s7 + $0x8c] sm:$0xf]
      %v3304 = vld [vmem:[%s7 + $0x90] sm:$0xf]
      %v3305 = vld [vmem:[%s7 + $0x94] sm:$0xf]
      %v3306 = vld [vmem:[%s7 + $0x98] sm:$0xf]
      %v3307 = vld [vmem:[%s7 + $0x9c] sm:$0xf]
      %v3308 = vld [vmem:[%s7 + $0xa0] sm:$0xf]
      %v3309 = vld [vmem:[%s7 + $0xa4] sm:$0xf]
      %v3310 = vld [vmem:[%s7 + $0xa8] sm:$0xf]
      %v3311 = vld [vmem:[%s7 + $0xac] sm:$0xf]
      %v3312 = vld [vmem:[%s7 + $0xb0] sm:$0xf]
      %v3313 = vld [vmem:[%s7 + $0xb4] sm:$0xf]
      %v3314 = vld [vmem:[%s7 + $0xb8] sm:$0xf]
      %v3315 = vld [vmem:[%s7 + $0xbc] sm:$0xf]
      %v3316 = vld [vmem:[%s7 + $0xc0] sm:$0xf]
      %v3317 = vld [vmem:[%s7 + $0xc4] sm:$0xf]
      %v3318 = vld [vmem:[%s7 + $0xc8] sm:$0xf]
      %v3319 = vld [vmem:[%s7 + $0xcc] sm:$0xf]
      %v3320 = vld [vmem:[%s7 + $0xd0] sm:$0xf]
      %v3321 = vld [vmem:[%s7 + $0xd4] sm:$0xf]
      %v3322 = vld [vmem:[%s7 + $0xd8] sm:$0xf]
      %v3323 = vld [vmem:[%s7 + $0xdc] sm:$0xf]
      %v3324 = vld [vmem:[%s7 + $0xe0] sm:$0xf]
      %v3325 = vld [vmem:[%s7 + $0xe4] sm:$0xf]
      %v3326 = vld [vmem:[%s7 + $0xe8] sm:$0xf]
      %v3327 = vld [vmem:[%s7 + $0xec] sm:$0xf]
      %v3328 = vld [vmem:[%s7 + $0xf0] sm:$0xf]
      %v3329 = vld [vmem:[%s7 + $0xf4] sm:$0xf]
      %v3330 = vld [vmem:[%s7 + $0xf8] sm:$0xf]
      %v3331 = vld [vmem:[%s7 + $0xfc] sm:$0xf]
      %v3332 = vld [vmem:[%s7 + $0x100] sm:$0xf]
      %v3333 = vld [vmem:[%s7 + $0x104] sm:$0xf]
      %v3334 = vld [vmem:[%s7 + $0x108] sm:$0xf]
      %v3335 = vld [vmem:[%s7 + $0x10c] sm:$0xf]
      %v3336 = vld [vmem:[%s7 + $0x110] sm:$0xf]
      %v3337 = vld [vmem:[%s7 + $0x114] sm:$0xf]
      %v3338 = vld [vmem:[%s7 + $0x118] sm:$0xf]
      %v3339 = vld [vmem:[%s7 + $0x11c] sm:$0xf]
      %v3340 = vld [vmem:[%s7 + $0x120] sm:$0xf]
      %v3341 = vld [vmem:[%s7 + $0x124] sm:$0xf]
      %v3342 = vld [vmem:[%s7 + $0x128] sm:$0xf]
      %v3343 = vld [vmem:[%s7 + $0x12c] sm:$0xf]
      %v3344 = vld [vmem:[%s7 + $0x130] sm:$0xf]
      %v3345 = vld [vmem:[%s7 + $0x134] sm:$0xf]
      %v3346 = vld [vmem:[%s7 + $0x138] sm:$0xf]
      %v3347 = vld [vmem:[%s7 + $0x13c] sm:$0xf]
      %v3348 = vld [vmem:[%s7 + $0x140] sm:$0xf]
      %v3349 = vld [vmem:[%s7 + $0x144] sm:$0xf]
      %v3350 = vld [vmem:[%s7 + $0x148] sm:$0xf]
      %v3351 = vld [vmem:[%s7 + $0x14c] sm:$0xf]
      %v3352 = vld [vmem:[%s7 + $0x150] sm:$0xf]
      %v3353 = vld [vmem:[%s7 + $0x154] sm:$0xf]
      %v3354 = vld [vmem:[%s7 + $0x158] sm:$0xf]
      %v3355 = vld [vmem:[%s7 + $0x15c] sm:$0xf]
      %v3356 = vld [vmem:[%s7 + $0x160] sm:$0xf]
      %v3357 = vld [vmem:[%s7 + $0x164] sm:$0xf]
      %v3358 = vld [vmem:[%s7 + $0x168] sm:$0xf]
      %v3359 = vld [vmem:[%s7 + $0x16c] sm:$0xf]
      %v3360 = vld [vmem:[%s7 + $0x170] sm:$0xf]
      %v3361 = vld [vmem:[%s7 + $0x174] sm:$0xf]
      %v3362 = vld [vmem:[%s7 + $0x178] sm:$0xf]
      %v3363 = vld [vmem:[%s7 + $0x17c] sm:$0xf]
      %v3364 = vld [vmem:[%s7 + $0x180] sm:$0xf]
      %v3365 = vld [vmem:[%s7 + $0x184] sm:$0xf]
      %v3366 = vld [vmem:[%s7 + $0x188] sm:$0xf]
      %v3367 = vld [vmem:[%s7 + $0x18c] sm:$0xf]
      %v3368 = vld [vmem:[%s7 + $0x190] sm:$0xf]
      %v3369 = vld [vmem:[%s7 + $0x194] sm:$0xf]
      %v3370 = vld [vmem:[%s7 + $0x198] sm:$0xf]
      %v3371 = vld [vmem:[%s7 + $0x19c] sm:$0xf]
      %v3372 = vld [vmem:[%s7 + $0x1a0] sm:$0xf]
      %v3373 = vld [vmem:[%s7 + $0x1a4] sm:$0xf]
      %v3374 = vld [vmem:[%s7 + $0x1a8] sm:$0xf]
      %v3375 = vld [vmem:[%s7 + $0x1ac] sm:$0xf]
      %v3376 = vld [vmem:[%s7 + $0x1b0] sm:$0xf]
      %v3377 = vld [vmem:[%s7 + $0x1b4] sm:$0xf]
      %v3378 = vld [vmem:[%s7 + $0x1b8] sm:$0xf]
      %v3379 = vld [vmem:[%s7 + $0x1bc] sm:$0xf]
      %v3380 = vld [vmem:[%s7 + $0x1c0] sm:$0xf]
      %v3381 = vld [vmem:[%s7 + $0x1c4] sm:$0xf]
      %v3382 = vld [vmem:[%s7 + $0x1c8] sm:$0xf]
      %v3383 = vld [vmem:[%s7 + $0x1cc] sm:$0xf]
      %v3384 = vld [vmem:[%s7 + $0x1d0] sm:$0xf]
      %v3385 = vld [vmem:[%s7 + $0x1d4] sm:$0xf]
      %v3386 = vld [vmem:[%s7 + $0x1d8] sm:$0xf]
      %v3387 = vld [vmem:[%s7 + $0x1dc] sm:$0xf]
      %v3388 = vld [vmem:[%s7 + $0x1e0] sm:$0xf]
      %v3389 = vld [vmem:[%s7 + $0x1e4] sm:$0xf]
      %v3390 = vld [vmem:[%s7 + $0x1e8] sm:$0xf]
      %v3391 = vld [vmem:[%s7 + $0x1ec] sm:$0xf]
      %v3392 = vld [vmem:[%s7 + $0x1f0] sm:$0xf]
      %v3393 = vld [vmem:[%s7 + $0x1f4] sm:$0xf]
      %v3394 = vld [vmem:[%s7 + $0x1f8] sm:$0xf]
      %v3395 = vld [vmem:[%s7 + $0x1fc] sm:$0xf]
      %v3396 = vld [vmem:[%s7 + $0x200] sm:$0xf]
      %v3397 = vld [vmem:[%s7 + $0x204] sm:$0xf]
      %v3398 = vld [vmem:[%s7 + $0x208] sm:$0xf]
      %v3399 = vld [vmem:[%s7 + $0x20c] sm:$0xf]
      %v3400 = vld [vmem:[%s7 + $0x210] sm:$0xf]
      %v3401 = vld [vmem:[%s7 + $0x214] sm:$0xf]
      %v3402 = vld [vmem:[%s7 + $0x218] sm:$0xf]
      %v3403 = vld [vmem:[%s7 + $0x21c] sm:$0xf]
      %v3404 = vld [vmem:[%s7 + $0x220] sm:$0xf]
      %v3405 = vld [vmem:[%s7 + $0x224] sm:$0xf]
      %v3406 = vld [vmem:[%s7 + $0x228] sm:$0xf]
      %v3407 = vld [vmem:[%s7 + $0x22c] sm:$0xf]
      %v3408 = vld [vmem:[%s7 + $0x230] sm:$0xf]
      %v3409 = vld [vmem:[%s7 + $0x234] sm:$0xf]
      %v3410 = vld [vmem:[%s7 + $0x238] sm:$0xf]
      %v3411 = vld [vmem:[%s7 + $0x23c] sm:$0xf]
      %v3412 = vld [vmem:[%s8] sm:$0x1]
      %v3414 = vlaneseq
      %v3415 = vshrl.u32 %v3414, 7
      %v3416 = vsub.s32 0, %v3415
      %v3417 = vrot.slane %v3412, %v3416
      %v3563 = vunpack.c.l.b16 %v3268
      %v3564 = vunpack.c.l.b16 %v3269
      %v3565 = vunpack.c.l.b16 %v3270
      %v3566 = vunpack.c.l.b16 %v3271
      %v3567 = vunpack.c.l.b16 %v3272
      %v3568 = vunpack.c.l.b16 %v3273
      %v3569 = vunpack.c.l.b16 %v3274
      %v3570 = vunpack.c.l.b16 %v3275
      %v3571 = vunpack.c.l.b16 %v3276
      %v3572 = vunpack.c.l.b16 %v3277
      %v3573 = vunpack.c.l.b16 %v3278
      %v3574 = vunpack.c.l.b16 %v3279
      %v3575 = vunpack.c.l.b16 %v3280
      %v3576 = vunpack.c.l.b16 %v3281
      %v3577 = vunpack.c.l.b16 %v3282
      %v3578 = vunpack.c.l.b16 %v3283
      %v3579 = vunpack.c.l.b16 %v3284
      %v3580 = vunpack.c.l.b16 %v3285
      %v3581 = vunpack.c.l.b16 %v3286
      %v3582 = vunpack.c.l.b16 %v3287
      %v3583 = vunpack.c.l.b16 %v3288
      %v3584 = vunpack.c.l.b16 %v3289
      %v3585 = vunpack.c.l.b16 %v3290
      %v3586 = vunpack.c.l.b16 %v3291
      %v3587 = vunpack.c.l.b16 %v3292
      %v3588 = vunpack.c.l.b16 %v3293
      %v3589 = vunpack.c.l.b16 %v3294
      %v3590 = vunpack.c.l.b16 %v3295
      %v3591 = vunpack.c.l.b16 %v3296
      %v3592 = vunpack.c.l.b16 %v3297
      %v3593 = vunpack.c.l.b16 %v3298
      %v3594 = vunpack.c.l.b16 %v3299
      %v3595 = vunpack.c.l.b16 %v3300
      %v3596 = vunpack.c.l.b16 %v3301
      %v3597 = vunpack.c.l.b16 %v3302
      %v3598 = vunpack.c.l.b16 %v3303
      %v3599 = vunpack.c.l.b16 %v3304
      %v3600 = vunpack.c.l.b16 %v3305
      %v3601 = vunpack.c.l.b16 %v3306
      %v3602 = vunpack.c.l.b16 %v3307
      %v3603 = vunpack.c.l.b16 %v3308
      %v3604 = vunpack.c.l.b16 %v3309
      %v3605 = vunpack.c.l.b16 %v3310
      %v3606 = vunpack.c.l.b16 %v3311
      %v3607 = vunpack.c.l.b16 %v3312
      %v3608 = vunpack.c.l.b16 %v3313
      %v3609 = vunpack.c.l.b16 %v3314
      %v3610 = vunpack.c.l.b16 %v3315
      %v3611 = vunpack.c.l.b16 %v3316
      %v3612 = vunpack.c.l.b16 %v3317
      %v3613 = vunpack.c.l.b16 %v3318
      %v3614 = vunpack.c.l.b16 %v3319
      %v3615 = vunpack.c.l.b16 %v3320
      %v3616 = vunpack.c.l.b16 %v3321
      %v3617 = vunpack.c.l.b16 %v3322
      %v3618 = vunpack.c.l.b16 %v3323
      %v3619 = vunpack.c.l.b16 %v3324
      %v3620 = vunpack.c.l.b16 %v3325
      %v3621 = vunpack.c.l.b16 %v3326
      %v3622 = vunpack.c.l.b16 %v3327
      %v3623 = vunpack.c.l.b16 %v3328
      %v3624 = vunpack.c.l.b16 %v3329
      %v3625 = vunpack.c.l.b16 %v3330
      %v3626 = vunpack.c.l.b16 %v3331
      %v3627 = vunpack.c.l.b16 %v3332
      %v3628 = vunpack.c.l.b16 %v3333
      %v3629 = vunpack.c.l.b16 %v3334
      %v3630 = vunpack.c.l.b16 %v3335
      %v3631 = vunpack.c.l.b16 %v3336
      %v3632 = vunpack.c.l.b16 %v3337
      %v3633 = vunpack.c.l.b16 %v3338
      %v3634 = vunpack.c.l.b16 %v3339
      %v3635 = vunpack.c.l.b16 %v3340
      %v3636 = vunpack.c.l.b16 %v3341
      %v3637 = vunpack.c.l.b16 %v3342
      %v3638 = vunpack.c.l.b16 %v3343
      %v3639 = vunpack.c.l.b16 %v3344
      %v3640 = vunpack.c.l.b16 %v3345
      %v3641 = vunpack.c.l.b16 %v3346
      %v3642 = vunpack.c.l.b16 %v3347
      %v3643 = vunpack.c.l.b16 %v3348
      %v3644 = vunpack.c.l.b16 %v3349
      %v3645 = vunpack.c.l.b16 %v3350
      %v3646 = vunpack.c.l.b16 %v3351
      %v3647 = vunpack.c.l.b16 %v3352
      %v3648 = vunpack.c.l.b16 %v3353
      %v3649 = vunpack.c.l.b16 %v3354
      %v3650 = vunpack.c.l.b16 %v3355
      %v3651 = vunpack.c.l.b16 %v3356
      %v3652 = vunpack.c.l.b16 %v3357
      %v3653 = vunpack.c.l.b16 %v3358
      %v3654 = vunpack.c.l.b16 %v3359
      %v3655 = vunpack.c.l.b16 %v3360
      %v3656 = vunpack.c.l.b16 %v3361
      %v3657 = vunpack.c.l.b16 %v3362
      %v3658 = vunpack.c.l.b16 %v3363
      %v3659 = vunpack.c.l.b16 %v3364
      %v3660 = vunpack.c.l.b16 %v3365
      %v3661 = vunpack.c.l.b16 %v3366
      %v3662 = vunpack.c.l.b16 %v3367
      %v3663 = vunpack.c.l.b16 %v3368
      %v3664 = vunpack.c.l.b16 %v3369
      %v3665 = vunpack.c.l.b16 %v3370
      %v3666 = vunpack.c.l.b16 %v3371
      %v3667 = vunpack.c.l.b16 %v3372
      %v3668 = vunpack.c.l.b16 %v3373
      %v3669 = vunpack.c.l.b16 %v3374
      %v3670 = vunpack.c.l.b16 %v3375
      %v3671 = vunpack.c.l.b16 %v3376
      %v3672 = vunpack.c.l.b16 %v3377
      %v3673 = vunpack.c.l.b16 %v3378
      %v3674 = vunpack.c.l.b16 %v3379
      %v3675 = vunpack.c.l.b16 %v3380
      %v3676 = vunpack.c.l.b16 %v3381
      %v3677 = vunpack.c.l.b16 %v3382
      %v3678 = vunpack.c.l.b16 %v3383
      %v3679 = vunpack.c.l.b16 %v3384
      %v3680 = vunpack.c.l.b16 %v3385
      %v3681 = vunpack.c.l.b16 %v3386
      %v3682 = vunpack.c.l.b16 %v3387
      %v3683 = vunpack.c.l.b16 %v3388
      %v3684 = vunpack.c.l.b16 %v3389
      %v3685 = vunpack.c.l.b16 %v3390
      %v3686 = vunpack.c.l.b16 %v3391
      %v3687 = vunpack.c.l.b16 %v3392
      %v3688 = vunpack.c.l.b16 %v3393
      %v3689 = vunpack.c.l.b16 %v3394
      %v3690 = vunpack.c.l.b16 %v3395
      %v3691 = vunpack.c.l.b16 %v3396
      %v3692 = vunpack.c.l.b16 %v3397
      %v3693 = vunpack.c.l.b16 %v3398
      %v3694 = vunpack.c.l.b16 %v3399
      %v3695 = vunpack.c.l.b16 %v3400
      %v3696 = vunpack.c.l.b16 %v3401
      %v3697 = vunpack.c.l.b16 %v3402
      %v3698 = vunpack.c.l.b16 %v3403
      %v3699 = vunpack.c.l.b16 %v3404
      %v3700 = vunpack.c.l.b16 %v3405
      %v3701 = vunpack.c.l.b16 %v3406
      %v3702 = vunpack.c.l.b16 %v3407
      %v3703 = vunpack.c.l.b16 %v3408
      %v3704 = vunpack.c.l.b16 %v3409
      %v3705 = vunpack.c.l.b16 %v3410
      %v3706 = vunpack.c.l.b16 %v3411
      %v3707 = vpack.c.b16 %v3564, %v3563
      %v3708 = vpack.c.b16 %v3566, %v3565
      %v3709 = vpack.c.b16 %v3568, %v3567
      %v3710 = vpack.c.b16 %v3570, %v3569
      %v3711 = vpack.c.b16 %v3572, %v3571
      %v3712 = vpack.c.b16 %v3574, %v3573
      %v3713 = vpack.c.b16 %v3576, %v3575
      %v3714 = vpack.c.b16 %v3578, %v3577
      %v3715 = vpack.c.b16 %v3580, %v3579
      %v3716 = vpack.c.b16 %v3582, %v3581
      %v3717 = vpack.c.b16 %v3584, %v3583
      %v3718 = vpack.c.b16 %v3586, %v3585
      %v3719 = vpack.c.b16 %v3588, %v3587
      %v3720 = vpack.c.b16 %v3590, %v3589
      %v3721 = vpack.c.b16 %v3592, %v3591
      %v3722 = vpack.c.b16 %v3594, %v3593
      %v3723 = vpack.c.b16 %v3596, %v3595
      %v3724 = vpack.c.b16 %v3598, %v3597
      %v3725 = vpack.c.b16 %v3600, %v3599
      %v3726 = vpack.c.b16 %v3602, %v3601
      %v3727 = vpack.c.b16 %v3604, %v3603
      %v3728 = vpack.c.b16 %v3606, %v3605
      %v3729 = vpack.c.b16 %v3608, %v3607
      %v3730 = vpack.c.b16 %v3610, %v3609
      %v3731 = vpack.c.b16 %v3612, %v3611
      %v3732 = vpack.c.b16 %v3614, %v3613
      %v3733 = vpack.c.b16 %v3616, %v3615
      %v3734 = vpack.c.b16 %v3618, %v3617
      %v3735 = vpack.c.b16 %v3620, %v3619
      %v3736 = vpack.c.b16 %v3622, %v3621
      %v3737 = vpack.c.b16 %v3624, %v3623
      %v3738 = vpack.c.b16 %v3626, %v3625
      %v3739 = vpack.c.b16 %v3628, %v3627
      %v3740 = vpack.c.b16 %v3630, %v3629
      %v3741 = vpack.c.b16 %v3632, %v3631
      %v3742 = vpack.c.b16 %v3634, %v3633
      %v3743 = vpack.c.b16 %v3636, %v3635
      %v3744 = vpack.c.b16 %v3638, %v3637
      %v3745 = vpack.c.b16 %v3640, %v3639
      %v3746 = vpack.c.b16 %v3642, %v3641
      %v3747 = vpack.c.b16 %v3644, %v3643
      %v3748 = vpack.c.b16 %v3646, %v3645
      %v3749 = vpack.c.b16 %v3648, %v3647
      %v3750 = vpack.c.b16 %v3650, %v3649
      %v3751 = vpack.c.b16 %v3652, %v3651
      %v3752 = vpack.c.b16 %v3654, %v3653
      %v3753 = vpack.c.b16 %v3656, %v3655
      %v3754 = vpack.c.b16 %v3658, %v3657
      %v3755 = vpack.c.b16 %v3660, %v3659
      %v3756 = vpack.c.b16 %v3662, %v3661
      %v3757 = vpack.c.b16 %v3664, %v3663
      %v3758 = vpack.c.b16 %v3666, %v3665
      %v3759 = vpack.c.b16 %v3668, %v3667
      %v3760 = vpack.c.b16 %v3670, %v3669
      %v3761 = vpack.c.b16 %v3672, %v3671
      %v3762 = vpack.c.b16 %v3674, %v3673
      %v3763 = vpack.c.b16 %v3676, %v3675
      %v3764 = vpack.c.b16 %v3678, %v3677
      %v3765 = vpack.c.b16 %v3680, %v3679
      %v3766 = vpack.c.b16 %v3682, %v3681
      %v3767 = vpack.c.b16 %v3684, %v3683
      %v3768 = vpack.c.b16 %v3686, %v3685
      %v3769 = vpack.c.b16 %v3688, %v3687
      %v3770 = vpack.c.b16 %v3690, %v3689
      %v3771 = vpack.c.b16 %v3692, %v3691
      %v3772 = vpack.c.b16 %v3694, %v3693
      %v3773 = vpack.c.b16 %v3696, %v3695
      %v3774 = vpack.c.b16 %v3698, %v3697
      %v3775 = vpack.c.b16 %v3700, %v3699
      %v3776 = vpack.c.b16 %v3702, %v3701
      %v3777 = vpack.c.b16 %v3704, %v3703
      %v3778 = vpack.c.b16 %v3706, %v3705
      %3851 = vmatprep.subr.bf16.mxu0 0
      %3852 = vmatpush1.bf16.msra.mxu0 %v3707
      %3853 = vmatprep.subr.bf16.mxu0 0
      %3854 = vmatpush1.bf16.msra.mxu0 %v3708
      %3855 = vmatprep.subr.bf16.mxu0 0
      %3856 = vmatpush1.bf16.msra.mxu0 %v3709
      %3857 = vmatprep.subr.bf16.mxu0 0
      %3858 = vmatpush1.bf16.msra.mxu0 %v3710
      %3859 = vmatprep.subr.bf16.mxu0 0
      %3860 = vmatpush1.bf16.msra.mxu0 %v3711
      %3861 = vmatprep.subr.bf16.mxu0 0
      %3862 = vmatpush1.bf16.msra.mxu0 %v3712
      %3863 = vmatprep.subr.bf16.mxu0 0
      %3864 = vmatpush1.bf16.msra.mxu0 %v3713
      %3865 = vmatprep.subr.bf16.mxu0 0
      %3866 = vmatpush1.bf16.msra.mxu0 %v3714
      %3867 = vmatprep.subr.bf16.mxu0 0
      %3868 = vmatpush1.bf16.msra.mxu0 %v3715
      %3869 = vmatprep.subr.bf16.mxu0 0
      %3870 = vmatpush1.bf16.msra.mxu0 %v3716
      %3871 = vmatprep.subr.bf16.mxu0 0
      %3872 = vmatpush1.bf16.msra.mxu0 %v3717
      %3873 = vmatprep.subr.bf16.mxu0 0
      %3874 = vmatpush1.bf16.msra.mxu0 %v3718
      %3875 = vmatprep.subr.bf16.mxu0 0
      %3876 = vmatpush1.bf16.msra.mxu0 %v3719
      %3877 = vmatprep.subr.bf16.mxu0 0
      %3878 = vmatpush1.bf16.msra.mxu0 %v3720
      %3879 = vmatprep.subr.bf16.mxu0 0
      %3880 = vmatpush1.bf16.msra.mxu0 %v3721
      %3881 = vmatprep.subr.bf16.mxu0 0
      %3882 = vmatpush1.bf16.msra.mxu0 %v3722
      %3883 = vmatprep.mubr.bf16.mxu0 %v3179
      %3884 = vmatmul.mubr.bf16.gmra.mrb[0].mxu0 %v3167
      %v3885 = vpop.f32.mrb[0].mxu0
      %v3886 = vadd.f32 %v3417, %v3885
      %v3887 = vpop.f32.mrb[0].mxu0
      %v3888 = vpop.f32.mrb[0].mxu0
      %v3889 = vadd.f32 %v3417, %v3888
      %v3890 = vpop.f32.mrb[0].mxu0
      %3891 = vmatprep.mubr.bf16.mxu0 %v3180
      %3892 = vmatmul.mubr.bf16.gmra.mrb[0].mxu0 %v3168
      %v3893 = vpop.f32.mrb[0].mxu0
      %v3894 = vadd.f32 %v3417, %v3893
      %v3895 = vpop.f32.mrb[0].mxu0
      %v3896 = vpop.f32.mrb[0].mxu0
      %v3897 = vadd.f32 %v3417, %v3896
      %v3898 = vpop.f32.mrb[0].mxu0
      %3899 = vmatprep.mubr.bf16.mxu0 %v3181
      %3900 = vmatmul.mubr.bf16.gmra.mrb[0].mxu0 %v3169
      %v3901 = vpop.f32.mrb[0].mxu0
      %v3902 = vadd.f32 %v3417, %v3901
      %v3903 = vpop.f32.mrb[0].mxu0
      %v3904 = vpop.f32.mrb[0].mxu0
      %v3905 = vadd.f32 %v3417, %v3904
      %v3906 = vpop.f32.mrb[0].mxu0
      %3907 = vmatprep.mubr.bf16.mxu0 %v3182
      %3908 = vmatmul.mubr.bf16.gmra.mrb[0].mxu0 %v3170
      %v3909 = vpop.f32.mrb[0].mxu0
      %v3910 = vadd.f32 %v3417, %v3909
      %v3911 = vpop.f32.mrb[0].mxu0
      %v3912 = vpop.f32.mrb[0].mxu0
      %v3913 = vadd.f32 %v3417, %v3912
      %v3914 = vpop.f32.mrb[0].mxu0
      %3915 = vdwg.mxu0
      %3916 = vmatprep.subr.bf16.mxu0 0
      %3917 = vmatpush1.bf16.msra.mxu0 %v3723
      %3918 = vmatprep.subr.bf16.mxu0 0
      %3919 = vmatpush1.bf16.msra.mxu0 %v3724
      %3920 = vmatprep.subr.bf16.mxu0 0
      %3921 = vmatpush1.bf16.msra.mxu0 %v3725
      %3922 = vmatprep.subr.bf16.mxu0 0
      %3923 = vmatpush1.bf16.msra.mxu0 %v3726
      %3924 = vmatprep.subr.bf16.mxu0 0
      %3925 = vmatpush1.bf16.msra.mxu0 %v3727
      %3926 = vmatprep.subr.bf16.mxu0 0
      %3927 = vmatpush1.bf16.msra.mxu0 %v3728
      %3928 = vmatprep.subr.bf16.mxu0 0
      %3929 = vmatpush1.bf16.msra.mxu0 %v3729
      %3930 = vmatprep.subr.bf16.mxu0 0
      %3931 = vmatpush1.bf16.msra.mxu0 %v3730
      %3932 = vmatprep.subr.bf16.mxu0 0
      %3933 = vmatpush1.bf16.msra.mxu0 %v3731
      %3934 = vmatprep.subr.bf16.mxu0 0
      %3935 = vmatpush1.bf16.msra.mxu0 %v3732
      %3936 = vmatprep.subr.bf16.mxu0 0
      %3937 = vmatpush1.bf16.msra.mxu0 %v3733
      %3938 = vmatprep.subr.bf16.mxu0 0
      %3939 = vmatpush1.bf16.msra.mxu0 %v3734
      %3940 = vmatprep.subr.bf16.mxu0 0
      %3941 = vmatpush1.bf16.msra.mxu0 %v3735
      %3942 = vmatprep.subr.bf16.mxu0 0
      %3943 = vmatpush1.bf16.msra.mxu0 %v3736
      %3944 = vmatprep.subr.bf16.mxu0 0
      %3945 = vmatpush1.bf16.msra.mxu0 %v3737
      %3946 = vmatprep.subr.bf16.mxu0 0
      %3947 = vmatpush1.bf16.msra.mxu0 %v3738
      %3948 = vmatprep.mubr.bf16.mxu0 %v3203
      %3949 = vmatmul.mubr.bf16.gmra.mrb[0].mxu0 %v3191
      %v3950 = vpop.f32.mrb[0].mxu0
      %v3951 = vadd.f32 %v3886, %v3950
      %v3952 = vpop.f32.mrb[0].mxu0
      %v3953 = vpop.f32.mrb[0].mxu0
      %v3954 = vadd.f32 %v3889, %v3953
      %v3955 = vpop.f32.mrb[0].mxu0
      %3956 = vmatprep.mubr.bf16.mxu0 %v3204
      %3957 = vmatmul.mubr.bf16.gmra.mrb[0].mxu0 %v3192
      %v3958 = vpop.f32.mrb[0].mxu0
      %v3959 = vadd.f32 %v3894, %v3958
      %v3960 = vpop.f32.mrb[0].mxu0
      %v3961 = vpop.f32.mrb[0].mxu0
      %v3962 = vadd.f32 %v3897, %v3961
      %v3963 = vpop.f32.mrb[0].mxu0
      %3964 = vmatprep.mubr.bf16.mxu0 %v3205
      %3965 = vmatmul.mubr.bf16.gmra.mrb[0].mxu0 %v3193
      %v3966 = vpop.f32.mrb[0].mxu0
      %v3967 = vadd.f32 %v3902, %v3966
      %v3968 = vpop.f32.mrb[0].mxu0
      %v3969 = vpop.f32.mrb[0].mxu0
      %v3970 = vadd.f32 %v3905, %v3969
      %v3971 = vpop.f32.mrb[0].mxu0
      %3972 = vmatprep.mubr.bf16.mxu0 %v3206
      %3973 = vmatmul.mubr.bf16.gmra.mrb[0].mxu0 %v3194
      %v3974 = vpop.f32.mrb[0].mxu0
      %v3975 = vadd.f32 %v3910, %v3974
      %v3976 = vpop.f32.mrb[0].mxu0
      %v3977 = vpop.f32.mrb[0].mxu0
      %v3978 = vadd.f32 %v3913, %v3977
      %v3979 = vpop.f32.mrb[0].mxu0
      %3980 = vdwg.mxu0
      %3981 = vmatprep.subr.bf16.mxu0 0
      %3982 = vmatpush1.bf16.msra.mxu0 %v3739
      %3983 = vmatprep.subr.bf16.mxu0 0
      %3984 = vmatpush1.bf16.msra.mxu0 %v3740
      %3985 = vmatprep.subr.bf16.mxu0 0
      %3986 = vmatpush1.bf16.msra.mxu0 %v3741
      %3987 = vmatprep.subr.bf16.mxu0 0
      %3988 = vmatpush1.bf16.msra.mxu0 %v3742
      %3989 = vmatprep.subr.bf16.mxu0 0
      %3990 = vmatpush1.bf16.msra.mxu0 %v3743
      %3991 = vmatprep.subr.bf16.mxu0 0
      %3992 = vmatpush1.bf16.msra.mxu0 %v3744
      %3993 = vmatprep.subr.bf16.mxu0 0
      %3994 = vmatpush1.bf16.msra.mxu0 %v3745
      %3995 = vmatprep.subr.bf16.mxu0 0
      %3996 = vmatpush1.bf16.msra.mxu0 %v3746
      %3997 = vmatprep.subr.bf16.mxu0 0
      %3998 = vmatpush1.bf16.msra.mxu0 %v3747
      %3999 = vmatprep.subr.bf16.mxu0 0
      %4000 = vmatpush1.bf16.msra.mxu0 %v3748
      %4001 = vmatprep.subr.bf16.mxu0 0
      %4002 = vmatpush1.bf16.msra.mxu0 %v3749
      %4003 = vmatprep.subr.bf16.mxu0 0
      %4004 = vmatpush1.bf16.msra.mxu0 %v3750
      %4005 = vmatprep.subr.bf16.mxu0 0
      %4006 = vmatpush1.bf16.msra.mxu0 %v3751
      %4007 = vmatprep.subr.bf16.mxu0 0
      %4008 = vmatpush1.bf16.msra.mxu0 %v3752
      %4009 = vmatprep.subr.bf16.mxu0 0
      %4010 = vmatpush1.bf16.msra.mxu0 %v3753
      %4011 = vmatprep.subr.bf16.mxu0 0
      %4012 = vmatpush1.bf16.msra.mxu0 %v3754
      %4013 = vmatprep.mubr.bf16.mxu0 %v3227
      %4014 = vmatmul.mubr.bf16.gmra.mrb[0].mxu0 %v3215
      %v4015 = vpop.f32.mrb[0].mxu0
      %v4016 = vadd.f32 %v3951, %v4015
      %v4017 = vpop.f32.mrb[0].mxu0
      %v4018 = vpop.f32.mrb[0].mxu0
      %v4019 = vadd.f32 %v3954, %v4018
      %v4020 = vpop.f32.mrb[0].mxu0
      %4021 = vmatprep.mubr.bf16.mxu0 %v3228
      %4022 = vmatmul.mubr.bf16.gmra.mrb[0].mxu0 %v3216
      %v4023 = vpop.f32.mrb[0].mxu0
      %v4024 = vadd.f32 %v3959, %v4023
      %v4025 = vpop.f32.mrb[0].mxu0
      %v4026 = vpop.f32.mrb[0].mxu0
      %v4027 = vadd.f32 %v3962, %v4026
      %v4028 = vpop.f32.mrb[0].mxu0
      %4029 = vmatprep.mubr.bf16.mxu0 %v3229
      %4030 = vmatmul.mubr.bf16.gmra.mrb[0].mxu0 %v3217
      %v4031 = vpop.f32.mrb[0].mxu0
      %v4032 = vadd.f32 %v3967, %v4031
      %v4033 = vpop.f32.mrb[0].mxu0
      %v4034 = vpop.f32.mrb[0].mxu0
      %v4035 = vadd.f32 %v3970, %v4034
      %v4036 = vpop.f32.mrb[0].mxu0
      %4037 = vmatprep.mubr.bf16.mxu0 %v3230
      %4038 = vmatmul.mubr.bf16.gmra.mrb[0].mxu0 %v3218
      %v4039 = vpop.f32.mrb[0].mxu0
      %v4040 = vadd.f32 %v3975, %v4039
      %v4041 = vpop.f32.mrb[0].mxu0
      %v4042 = vpop.f32.mrb[0].mxu0
      %v4043 = vadd.f32 %v3978, %v4042
      %v4044 = vpop.f32.mrb[0].mxu0
      %4045 = vdwg.mxu0
      %4046 = vmatprep.subr.bf16.mxu0 0
      %4047 = vmatpush1.bf16.msra.mxu0 %v3755
      %4048 = vmatprep.subr.bf16.mxu0 0
      %4049 = vmatpush1.bf16.msra.mxu0 %v3756
      %4050 = vmatprep.subr.bf16.mxu0 0
      %4051 = vmatpush1.bf16.msra.mxu0 %v3757
      %4052 = vmatprep.subr.bf16.mxu0 0
      %4053 = vmatpush1.bf16.msra.mxu0 %v3758
      %4054 = vmatprep.subr.bf16.mxu0 0
      %4055 = vmatpush1.bf16.msra.mxu0 %v3759
      %4056 = vmatprep.subr.bf16.mxu0 0
      %4057 = vmatpush1.bf16.msra.mxu0 %v3760
      %4058 = vmatprep.subr.bf16.mxu0 0
      %4059 = vmatpush1.bf16.msra.mxu0 %v3761
      %4060 = vmatprep.subr.bf16.mxu0 0
      %4061 = vmatpush1.bf16.msra.mxu0 %v3762
      %4062 = vmatprep.subr.bf16.mxu0 0
      %4063 = vmatpush1.bf16.msra.mxu0 %v3763
      %4064 = vmatprep.subr.bf16.mxu0 0
      %4065 = vmatpush1.bf16.msra.mxu0 %v3764
      %4066 = vmatprep.subr.bf16.mxu0 0
      %4067 = vmatpush1.bf16.msra.mxu0 %v3765
      %4068 = vmatprep.subr.bf16.mxu0 0
      %4069 = vmatpush1.bf16.msra.mxu0 %v3766
      %4070 = vmatprep.subr.bf16.mxu0 0
      %4071 = vmatpush1.bf16.msra.mxu0 %v3767
      %4072 = vmatprep.subr.bf16.mxu0 0
      %4073 = vmatpush1.bf16.msra.mxu0 %v3768
      %4074 = vmatprep.subr.bf16.mxu0 0
      %4075 = vmatpush1.bf16.msra.mxu0 %v3769
      %4076 = vmatprep.subr.bf16.mxu0 0
      %4077 = vmatpush1.bf16.msra.mxu0 %v3770
      %4078 = vmatprep.mubr.bf16.mxu0 %v3252
      %4079 = vmatmul.mubr.bf16.gmra.mrb[0].mxu0 %v3240
      %v4080 = vpop.f32.mrb[0].mxu0
      %v4081 = vadd.f32 %v4016, %v4080
      %v4082 = vpop.f32.mrb[0].mxu0
      %v4083 = vpop.f32.mrb[0].mxu0
      %v4084 = vadd.f32 %v4019, %v4083
      %v4085 = vpop.f32.mrb[0].mxu0
      %4086 = vmatprep.mubr.bf16.mxu0 %v3253
      %4087 = vmatmul.mubr.bf16.gmra.mrb[0].mxu0 %v3241
      %v4088 = vpop.f32.mrb[0].mxu0
      %v4089 = vadd.f32 %v4024, %v4088
      %v4090 = vpop.f32.mrb[0].mxu0
      %v4091 = vpop.f32.mrb[0].mxu0
      %v4092 = vadd.f32 %v4027, %v4091
      %v4093 = vpop.f32.mrb[0].mxu0
      %4094 = vmatprep.mubr.bf16.mxu0 %v3254
      %4095 = vmatmul.mubr.bf16.gmra.mrb[0].mxu0 %v3242
      %v4096 = vpop.f32.mrb[0].mxu0
      %v4097 = vadd.f32 %v4032, %v4096
      %v4098 = vpop.f32.mrb[0].mxu0
      %v4099 = vpop.f32.mrb[0].mxu0
      %v4100 = vadd.f32 %v4035, %v4099
      %v4101 = vpop.f32.mrb[0].mxu0
      %4102 = vmatprep.mubr.bf16.mxu0 %v3255
      %4103 = vmatmul.mubr.bf16.gmra.mrb[0].mxu0 %v3243
      %v4104 = vpop.f32.mrb[0].mxu0
      %v4105 = vadd.f32 %v4040, %v4104
      %v4106 = vpop.f32.mrb[0].mxu0
      %v4107 = vpop.f32.mrb[0].mxu0
      %v4108 = vadd.f32 %v4043, %v4107
      %v4109 = vpop.f32.mrb[0].mxu0
      %4110 = vdwg.mxu0
      %4111 = vmatprep.subr.bf16.mxu0 0
      %4112 = vmatpush1.bf16.msra.mxu0 %v3771
      %4113 = vmatprep.subr.bf16.mxu0 0
      %4114 = vmatpush1.bf16.msra.mxu0 %v3772
      %4115 = vmatprep.subr.bf16.mxu0 0
      %4116 = vmatpush1.bf16.msra.mxu0 %v3773
      %4117 = vmatprep.subr.bf16.mxu0 0
      %4118 = vmatpush1.bf16.msra.mxu0 %v3774
      %4119 = vmatprep.subr.bf16.mxu0 0
      %4120 = vmatpush1.bf16.msra.mxu0 %v3775
      %4121 = vmatprep.subr.bf16.mxu0 0
      %4122 = vmatpush1.bf16.msra.mxu0 %v3776
      %4123 = vmatprep.subr.bf16.mxu0 0
      %4124 = vmatpush1.bf16.msra.mxu0 %v3777
      %4125 = vmatprep.subr.bf16.mxu0 0
      %4126 = vmatpush1.bf16.msra.mxu0 %v3778
      %4127 = vmatprep.subr.bf16.mxu0 0
      %4128 = vmatpush1.bf16.msra.mxu0 0
      %4129 = vmatprep.subr.bf16.mxu0 0
      %4130 = vmatpush1.bf16.msra.mxu0 0
      %4131 = vmatprep.subr.bf16.mxu0 0
      %4132 = vmatpush1.bf16.msra.mxu0 0
      %4133 = vmatprep.subr.bf16.mxu0 0
      %4134 = vmatpush1.bf16.msra.mxu0 0
      %4135 = vmatprep.subr.bf16.mxu0 0
      %4136 = vmatpush1.bf16.msra.mxu0 0
      %4137 = vmatprep.subr.bf16.mxu0 0
      %4138 = vmatpush1.bf16.msra.mxu0 0
      %4139 = vmatprep.subr.bf16.mxu0 0
      %4140 = vmatpush1.bf16.msra.mxu0 0
      %4141 = vmatprep.subr.bf16.mxu0 0
      %4142 = vmatpush1.bf16.msra.mxu0 0
      %4143 = vmatprep.mubr.bf16.mxu0 0
      %4144 = vmatmul.mubr.bf16.gmra.mrb[0].mxu0 %v3264
      %v4145 = vpop.f32.mrb[0].mxu0
      %v4146 = vadd.f32 %v4081, %v4145
      %v4147 = vpop.f32.mrb[0].mxu0
      %v4148 = vpop.f32.mrb[0].mxu0
      %v4149 = vadd.f32 %v4084, %v4148
      %v4150 = vpop.f32.mrb[0].mxu0
      %4151 = vmatprep.mubr.bf16.mxu0 0
      %4152 = vmatmul.mubr.bf16.gmra.mrb[0].mxu0 %v3265
      %v4153 = vpop.f32.mrb[0].mxu0
      %v4154 = vadd.f32 %v4089, %v4153
      %v4155 = vpop.f32.mrb[0].mxu0
      %v4156 = vpop.f32.mrb[0].mxu0
      %v4157 = vadd.f32 %v4092, %v4156
      %v4158 = vpop.f32.mrb[0].mxu0
      %4159 = vmatprep.mubr.bf16.mxu0 0
      %4160 = vmatmul.mubr.bf16.gmra.mrb[0].mxu0 %v3266
      %v4161 = vpop.f32.mrb[0].mxu0
      %v4162 = vadd.f32 %v4097, %v4161
      %v4163 = vpop.f32.mrb[0].mxu0
      %v4164 = vpop.f32.mrb[0].mxu0
      %v4165 = vadd.f32 %v4100, %v4164
      %v4166 = vpop.f32.mrb[0].mxu0
      %4167 = vmatprep.mubr.bf16.mxu0 0
      %4168 = vmatmul.mubr.bf16.gmra.mrb[0].mxu0 %v3267
      %v4169 = vpop.f32.mrb[0].mxu0
      %v4170 = vadd.f32 %v4105, %v4169
      %v4171 = vpop.f32.mrb[0].mxu0
      %v4172 = vpop.f32.mrb[0].mxu0
      %v4173 = vadd.f32 %v4108, %v4172
      %v4174 = vpop.f32.mrb[0].mxu0
      %4175 = vdwg.mxu0
      %v4176 = vmax.f32 %v4146, 0.0
      %v4177 = vmax.f32 %v4149, 0.0
      %v4178 = vmax.f32 %v4154, 0.0
      %v4179 = vmax.f32 %v4157, 0.0
      %v4180 = vmax.f32 %v4162, 0.0
      %v4181 = vmax.f32 %v4165, 0.0
      %v4182 = vmax.f32 %v4170, 0.0
      %v4183 = vmax.f32 %v4173, 0.0
      %s4184 = scalar_lea.vmem [#allocation4], 16
      %4185 = vst [vmem:[%s4184 + $0x1] sm:$0xff] %v4176
      %4186 = vst [vmem:[%s4184 + $0x11] sm:$0xff] %v4177
      %4187 = vst [vmem:[%s4184 + $0x21] sm:$0xff] %v4178
      %4188 = vst [vmem:[%s4184 + $0x31] sm:$0xff] %v4179
      %4189 = vst [vmem:[%s4184 + $0x41] sm:$0xff] %v4180
      %4190 = vst [vmem:[%s4184 + $0x51] sm:$0xff] %v4181
      %4191 = vst [vmem:[%s4184 + $0x61] sm:$0xff] %v4182
      %4192 = vst [vmem:[%s4184 + $0x71] sm:$0xff] %v4183
      %v4193 = vld [vmem:[#allocation4] sm:$0xff]
      %v4194 = vld [vmem:[#allocation4 + $0x10] sm:$0xff]
      %v4195 = vld [vmem:[#allocation4 + $0x20] sm:$0xff]
      %v4196 = vld [vmem:[#allocation4 + $0x30] sm:$0xff]
      %v4197 = vld [vmem:[#allocation4 + $0x40] sm:$0xff]
      %v4198 = vld [vmem:[#allocation4 + $0x50] sm:$0xff]
      %v4199 = vld [vmem:[#allocation4 + $0x60] sm:$0xff]
      %v4200 = vld [vmem:[#allocation4 + $0x70] sm:$0xff]
      %v4201 = vpack.c.bf16 %v4194, %v4193
      %v4202 = vpack.c.bf16 %v4196, %v4195
      %v4203 = vpack.c.bf16 %v4198, %v4197
      %v4204 = vpack.c.bf16 %v4200, %v4199
      %v4205 = vld [vmem:[#allocation4 + $0x1] sm:$0xff]
      %v4206 = vld [vmem:[#allocation4 + $0x11] sm:$0xff]
      %v4207 = vld [vmem:[#allocation4 + $0x21] sm:$0xff]
      %v4208 = vld [vmem:[#allocation4 + $0x31] sm:$0xff]
      %v4209 = vld [vmem:[#allocation4 + $0x41] sm:$0xff]
      %v4210 = vld [vmem:[#allocation4 + $0x51] sm:$0xff]
      %v4211 = vld [vmem:[#allocation4 + $0x61] sm:$0xff]
      %v4212 = vld [vmem:[#allocation4 + $0x71] sm:$0xff]
      %v4213 = vpack.c.bf16 %v4206, %v4205
      %v4214 = vpack.c.bf16 %v4208, %v4207
      %v4215 = vpack.c.bf16 %v4210, %v4209
      %v4216 = vpack.c.bf16 %v4212, %v4211
      %v4217 = vld [vmem:[#allocation4 + $0x2] sm:$0xff]
      %v4218 = vld [vmem:[#allocation4 + $0x12] sm:$0xff]
      %v4219 = vld [vmem:[#allocation4 + $0x22] sm:$0xff]
      %v4220 = vld [vmem:[#allocation4 + $0x32] sm:$0xff]
      %v4221 = vld [vmem:[#allocation4 + $0x42] sm:$0xff]
      %v4222 = vld [vmem:[#allocation4 + $0x52] sm:$0xff]
      %v4223 = vld [vmem:[#allocation4 + $0x62] sm:$0xff]
      %v4224 = vld [vmem:[#allocation4 + $0x72] sm:$0xff]
      %v4225 = vpack.c.bf16 %v4218, %v4217
      %v4226 = vpack.c.bf16 %v4220, %v4219
      %v4227 = vpack.c.bf16 %v4222, %v4221
      %v4228 = vpack.c.bf16 %v4224, %v4223
      %v4229 = vld [vmem:[%s4184] sm:$0xff]
      %v4230 = vld [vmem:[%s4184 + $0x10] sm:$0xff]
      %v4231 = vld [vmem:[%s4184 + $0x20] sm:$0xff]
      %v4232 = vld [vmem:[%s4184 + $0x30] sm:$0xff]
      %v4233 = vld [vmem:[%s4184 + $0x40] sm:$0xff]
      %v4234 = vld [vmem:[%s4184 + $0x50] sm:$0xff]
      %v4235 = vld [vmem:[%s4184 + $0x60] sm:$0xff]
      %v4236 = vld [vmem:[%s4184 + $0x70] sm:$0xff]
      %v4237 = vpack.c.bf16 %v4230, %v4229
      %v4238 = vpack.c.bf16 %v4232, %v4231
      %v4239 = vpack.c.bf16 %v4234, %v4233
      %v4240 = vpack.c.bf16 %v4236, %v4235
      %v4241 = vld [vmem:[%s4184 + $0x1] sm:$0xff]
      %v4242 = vld [vmem:[%s4184 + $0x11] sm:$0xff]
      %v4243 = vld [vmem:[%s4184 + $0x21] sm:$0xff]
      %v4244 = vld [vmem:[%s4184 + $0x31] sm:$0xff]
      %v4245 = vld [vmem:[%s4184 + $0x41] sm:$0xff]
      %v4246 = vld [vmem:[%s4184 + $0x51] sm:$0xff]
      %v4247 = vld [vmem:[%s4184 + $0x61] sm:$0xff]
      %v4248 = vld [vmem:[%s4184 + $0x71] sm:$0xff]
      %v4249 = vpack.c.bf16 %v4242, %v4241
      %v4250 = vpack.c.bf16 %v4244, %v4243
      %v4251 = vpack.c.bf16 %v4246, %v4245
      %v4252 = vpack.c.bf16 %v4248, %v4247
      %v4253 = vld [vmem:[%s4184 + $0x2] sm:$0xff]
      %v4254 = vld [vmem:[%s4184 + $0x12] sm:$0xff]
      %v4255 = vld [vmem:[%s4184 + $0x22] sm:$0xff]
      %v4256 = vld [vmem:[%s4184 + $0x32] sm:$0xff]
      %v4257 = vld [vmem:[%s4184 + $0x42] sm:$0xff]
      %v4258 = vld [vmem:[%s4184 + $0x52] sm:$0xff]
      %v4259 = vld [vmem:[%s4184 + $0x62] sm:$0xff]
      %v4260 = vld [vmem:[%s4184 + $0x72] sm:$0xff]
      %v4261 = vpack.c.bf16 %v4254, %v4253
      %v4262 = vpack.c.bf16 %v4256, %v4255
      %v4263 = vpack.c.bf16 %v4258, %v4257
      %v4264 = vpack.c.bf16 %v4260, %v4259
      %s4265 = scalar_lea.vmem [#allocation4], 32
      %v4266 = vld [vmem:[%s4265] sm:$0xff]
      %v4267 = vld [vmem:[%s4265 + $0x10] sm:$0xff]
      %v4268 = vld [vmem:[%s4265 + $0x20] sm:$0xff]
      %v4269 = vld [vmem:[%s4265 + $0x30] sm:$0xff]
      %v4270 = vld [vmem:[%s4265 + $0x40] sm:$0xff]
      %v4271 = vld [vmem:[%s4265 + $0x50] sm:$0xff]
      %v4272 = vld [vmem:[%s4265 + $0x60] sm:$0xff]
      %v4273 = vld [vmem:[%s4265 + $0x70] sm:$0xff]
      %v4274 = vpack.c.bf16 %v4267, %v4266
      %v4275 = vpack.c.bf16 %v4269, %v4268
      %v4276 = vpack.c.bf16 %v4271, %v4270
      %v4277 = vpack.c.bf16 %v4273, %v4272
      %v4278 = vld [vmem:[%s4265 + $0x1] sm:$0xff]
      %v4279 = vld [vmem:[%s4265 + $0x11] sm:$0xff]
      %v4280 = vld [vmem:[%s4265 + $0x21] sm:$0xff]
      %v4281 = vld [vmem:[%s4265 + $0x31] sm:$0xff]
      %v4282 = vld [vmem:[%s4265 + $0x41] sm:$0xff]
      %v4283 = vld [vmem:[%s4265 + $0x51] sm:$0xff]
      %v4284 = vld [vmem:[%s4265 + $0x61] sm:$0xff]
      %v4285 = vld [vmem:[%s4265 + $0x71] sm:$0xff]
      %v4286 = vpack.c.bf16 %v4279, %v4278
      %v4287 = vpack.c.bf16 %v4281, %v4280
      %v4288 = vpack.c.bf16 %v4283, %v4282
      %v4289 = vpack.c.bf16 %v4285, %v4284
      %v4290 = vld [vmem:[%s4265 + $0x2] sm:$0xff]
      %v4291 = vld [vmem:[%s4265 + $0x12] sm:$0xff]
      %v4292 = vld [vmem:[%s4265 + $0x22] sm:$0xff]
      %v4293 = vld [vmem:[%s4265 + $0x32] sm:$0xff]
      %v4294 = vld [vmem:[%s4265 + $0x42] sm:$0xff]
      %v4295 = vld [vmem:[%s4265 + $0x52] sm:$0xff]
      %v4296 = vld [vmem:[%s4265 + $0x62] sm:$0xff]
      %v4297 = vld [vmem:[%s4265 + $0x72] sm:$0xff]
      %v4298 = vpack.c.bf16 %v4291, %v4290
      %v4299 = vpack.c.bf16 %v4293, %v4292
      %v4300 = vpack.c.bf16 %v4295, %v4294
      %v4301 = vpack.c.bf16 %v4297, %v4296
      %v4302 = vld [vmem:[%s9] sm:$0xf]
      %v4303 = vld [vmem:[%s9 + $0x4] sm:$0xf]
      %v4304 = vld [vmem:[%s9 + $0x8] sm:$0xf]
      %v4305 = vld [vmem:[%s9 + $0xc] sm:$0xf]
      %v4306 = vld [vmem:[%s9 + $0x10] sm:$0xf]
      %v4307 = vld [vmem:[%s9 + $0x14] sm:$0xf]
      %v4308 = vld [vmem:[%s9 + $0x18] sm:$0xf]
      %v4309 = vld [vmem:[%s9 + $0x1c] sm:$0xf]
      %v4310 = vld [vmem:[%s9 + $0x20] sm:$0xf]
      %v4311 = vld [vmem:[%s9 + $0x24] sm:$0xf]
      %v4312 = vld [vmem:[%s9 + $0x28] sm:$0xf]
      %v4313 = vld [vmem:[%s9 + $0x2c] sm:$0xf]
      %v4314 = vld [vmem:[%s9 + $0x30] sm:$0xf]
      %v4315 = vld [vmem:[%s9 + $0x34] sm:$0xf]
      %v4316 = vld [vmem:[%s9 + $0x38] sm:$0xf]
      %v4317 = vld [vmem:[%s9 + $0x3c] sm:$0xf]
      %v4318 = vld [vmem:[%s9 + $0x40] sm:$0xf]
      %v4319 = vld [vmem:[%s9 + $0x44] sm:$0xf]
      %v4320 = vld [vmem:[%s9 + $0x48] sm:$0xf]
      %v4321 = vld [vmem:[%s9 + $0x4c] sm:$0xf]
      %v4322 = vld [vmem:[%s9 + $0x50] sm:$0xf]
      %v4323 = vld [vmem:[%s9 + $0x54] sm:$0xf]
      %v4324 = vld [vmem:[%s9 + $0x58] sm:$0xf]
      %v4325 = vld [vmem:[%s9 + $0x5c] sm:$0xf]
      %v4326 = vld [vmem:[%s9 + $0x60] sm:$0xf]
      %v4327 = vld [vmem:[%s9 + $0x64] sm:$0xf]
      %v4328 = vld [vmem:[%s9 + $0x68] sm:$0xf]
      %v4329 = vld [vmem:[%s9 + $0x6c] sm:$0xf]
      %v4330 = vld [vmem:[%s9 + $0x70] sm:$0xf]
      %v4331 = vld [vmem:[%s9 + $0x74] sm:$0xf]
      %v4332 = vld [vmem:[%s9 + $0x78] sm:$0xf]
      %v4333 = vld [vmem:[%s9 + $0x7c] sm:$0xf]
      %v4334 = vld [vmem:[%s9 + $0x80] sm:$0xf]
      %v4335 = vld [vmem:[%s9 + $0x84] sm:$0xf]
      %v4336 = vld [vmem:[%s9 + $0x88] sm:$0xf]
      %v4337 = vld [vmem:[%s9 + $0x8c] sm:$0xf]
      %v4338 = vld [vmem:[%s9 + $0x90] sm:$0xf]
      %v4339 = vld [vmem:[%s9 + $0x94] sm:$0xf]
      %v4340 = vld [vmem:[%s9 + $0x98] sm:$0xf]
      %v4341 = vld [vmem:[%s9 + $0x9c] sm:$0xf]
      %v4342 = vld [vmem:[%s9 + $0xa0] sm:$0xf]
      %v4343 = vld [vmem:[%s9 + $0xa4] sm:$0xf]
      %v4344 = vld [vmem:[%s9 + $0xa8] sm:$0xf]
      %v4345 = vld [vmem:[%s9 + $0xac] sm:$0xf]
      %v4346 = vld [vmem:[%s9 + $0xb0] sm:$0xf]
      %v4347 = vld [vmem:[%s9 + $0xb4] sm:$0xf]
      %v4348 = vld [vmem:[%s9 + $0xb8] sm:$0xf]
      %v4349 = vld [vmem:[%s9 + $0xbc] sm:$0xf]
      %v4350 = vld [vmem:[%s9 + $0xc0] sm:$0xf]
      %v4351 = vld [vmem:[%s9 + $0xc4] sm:$0xf]
      %v4352 = vld [vmem:[%s9 + $0xc8] sm:$0xf]
      %v4353 = vld [vmem:[%s9 + $0xcc] sm:$0xf]
      %v4354 = vld [vmem:[%s9 + $0xd0] sm:$0xf]
      %v4355 = vld [vmem:[%s9 + $0xd4] sm:$0xf]
      %v4356 = vld [vmem:[%s9 + $0xd8] sm:$0xf]
      %v4357 = vld [vmem:[%s9 + $0xdc] sm:$0xf]
      %v4358 = vld [vmem:[%s9 + $0xe0] sm:$0xf]
      %v4359 = vld [vmem:[%s9 + $0xe4] sm:$0xf]
      %v4360 = vld [vmem:[%s9 + $0xe8] sm:$0xf]
      %v4361 = vld [vmem:[%s9 + $0xec] sm:$0xf]
      %v4362 = vld [vmem:[%s9 + $0xf0] sm:$0xf]
      %v4363 = vld [vmem:[%s9 + $0xf4] sm:$0xf]
      %v4364 = vld [vmem:[%s9 + $0xf8] sm:$0xf]
      %v4365 = vld [vmem:[%s9 + $0xfc] sm:$0xf]
      %v4366 = vld [vmem:[%s9 + $0x100] sm:$0xf]
      %v4367 = vld [vmem:[%s9 + $0x104] sm:$0xf]
      %v4368 = vld [vmem:[%s9 + $0x108] sm:$0xf]
      %v4369 = vld [vmem:[%s9 + $0x10c] sm:$0xf]
      %v4370 = vld [vmem:[%s9 + $0x110] sm:$0xf]
      %v4371 = vld [vmem:[%s9 + $0x114] sm:$0xf]
      %v4372 = vld [vmem:[%s9 + $0x118] sm:$0xf]
      %v4373 = vld [vmem:[%s9 + $0x11c] sm:$0xf]
      %v4374 = vld [vmem:[%s9 + $0x120] sm:$0xf]
      %v4375 = vld [vmem:[%s9 + $0x124] sm:$0xf]
      %v4376 = vld [vmem:[%s9 + $0x128] sm:$0xf]
      %v4377 = vld [vmem:[%s9 + $0x12c] sm:$0xf]
      %v4378 = vld [vmem:[%s9 + $0x130] sm:$0xf]
      %v4379 = vld [vmem:[%s9 + $0x134] sm:$0xf]
      %v4380 = vld [vmem:[%s9 + $0x138] sm:$0xf]
      %v4381 = vld [vmem:[%s9 + $0x13c] sm:$0xf]
      %v4382 = vld [vmem:[%s9 + $0x140] sm:$0xf]
      %v4383 = vld [vmem:[%s9 + $0x144] sm:$0xf]
      %v4384 = vld [vmem:[%s9 + $0x148] sm:$0xf]
      %v4385 = vld [vmem:[%s9 + $0x14c] sm:$0xf]
      %v4386 = vld [vmem:[%s9 + $0x150] sm:$0xf]
      %v4387 = vld [vmem:[%s9 + $0x154] sm:$0xf]
      %v4388 = vld [vmem:[%s9 + $0x158] sm:$0xf]
      %v4389 = vld [vmem:[%s9 + $0x15c] sm:$0xf]
      %v4390 = vld [vmem:[%s9 + $0x160] sm:$0xf]
      %v4391 = vld [vmem:[%s9 + $0x164] sm:$0xf]
      %v4392 = vld [vmem:[%s9 + $0x168] sm:$0xf]
      %v4393 = vld [vmem:[%s9 + $0x16c] sm:$0xf]
      %v4394 = vld [vmem:[%s9 + $0x170] sm:$0xf]
      %v4395 = vld [vmem:[%s9 + $0x174] sm:$0xf]
      %v4396 = vld [vmem:[%s9 + $0x178] sm:$0xf]
      %v4397 = vld [vmem:[%s9 + $0x17c] sm:$0xf]
      %v4398 = vld [vmem:[%s9 + $0x180] sm:$0xf]
      %v4399 = vld [vmem:[%s9 + $0x184] sm:$0xf]
      %v4400 = vld [vmem:[%s9 + $0x188] sm:$0xf]
      %v4401 = vld [vmem:[%s9 + $0x18c] sm:$0xf]
      %v4402 = vld [vmem:[%s9 + $0x190] sm:$0xf]
      %v4403 = vld [vmem:[%s9 + $0x194] sm:$0xf]
      %v4404 = vld [vmem:[%s9 + $0x198] sm:$0xf]
      %v4405 = vld [vmem:[%s9 + $0x19c] sm:$0xf]
      %v4406 = vld [vmem:[%s9 + $0x1a0] sm:$0xf]
      %v4407 = vld [vmem:[%s9 + $0x1a4] sm:$0xf]
      %v4408 = vld [vmem:[%s9 + $0x1a8] sm:$0xf]
      %v4409 = vld [vmem:[%s9 + $0x1ac] sm:$0xf]
      %v4410 = vld [vmem:[%s9 + $0x1b0] sm:$0xf]
      %v4411 = vld [vmem:[%s9 + $0x1b4] sm:$0xf]
      %v4412 = vld [vmem:[%s9 + $0x1b8] sm:$0xf]
      %v4413 = vld [vmem:[%s9 + $0x1bc] sm:$0xf]
      %v4414 = vld [vmem:[%s9 + $0x1c0] sm:$0xf]
      %v4415 = vld [vmem:[%s9 + $0x1c4] sm:$0xf]
      %v4416 = vld [vmem:[%s9 + $0x1c8] sm:$0xf]
      %v4417 = vld [vmem:[%s9 + $0x1cc] sm:$0xf]
      %v4418 = vld [vmem:[%s9 + $0x1d0] sm:$0xf]
      %v4419 = vld [vmem:[%s9 + $0x1d4] sm:$0xf]
      %v4420 = vld [vmem:[%s9 + $0x1d8] sm:$0xf]
      %v4421 = vld [vmem:[%s9 + $0x1dc] sm:$0xf]
      %v4422 = vld [vmem:[%s9 + $0x1e0] sm:$0xf]
      %v4423 = vld [vmem:[%s9 + $0x1e4] sm:$0xf]
      %v4424 = vld [vmem:[%s9 + $0x1e8] sm:$0xf]
      %v4425 = vld [vmem:[%s9 + $0x1ec] sm:$0xf]
      %v4426 = vld [vmem:[%s9 + $0x1f0] sm:$0xf]
      %v4427 = vld [vmem:[%s9 + $0x1f4] sm:$0xf]
      %v4428 = vld [vmem:[%s9 + $0x1f8] sm:$0xf]
      %v4429 = vld [vmem:[%s9 + $0x1fc] sm:$0xf]
      %v4430 = vld [vmem:[%s9 + $0x200] sm:$0xf]
      %v4431 = vld [vmem:[%s9 + $0x204] sm:$0xf]
      %v4432 = vld [vmem:[%s9 + $0x208] sm:$0xf]
      %v4433 = vld [vmem:[%s9 + $0x20c] sm:$0xf]
      %v4434 = vld [vmem:[%s9 + $0x210] sm:$0xf]
      %v4435 = vld [vmem:[%s9 + $0x214] sm:$0xf]
      %v4436 = vld [vmem:[%s9 + $0x218] sm:$0xf]
      %v4437 = vld [vmem:[%s9 + $0x21c] sm:$0xf]
      %v4438 = vld [vmem:[%s9 + $0x220] sm:$0xf]
      %v4439 = vld [vmem:[%s9 + $0x224] sm:$0xf]
      %v4440 = vld [vmem:[%s9 + $0x228] sm:$0xf]
      %v4441 = vld [vmem:[%s9 + $0x22c] sm:$0xf]
      %v4442 = vld [vmem:[%s9 + $0x230] sm:$0xf]
      %v4443 = vld [vmem:[%s9 + $0x234] sm:$0xf]
      %v4444 = vld [vmem:[%s9 + $0x238] sm:$0xf]
      %v4445 = vld [vmem:[%s9 + $0x23c] sm:$0xf]
      %v4446 = vld [vmem:[%s10] sm:$0x1]
      %v4448 = vlaneseq
      %v4449 = vshrl.u32 %v4448, 7
      %v4450 = vsub.s32 0, %v4449
      %v4451 = vrot.slane %v4446, %v4450
      %v4597 = vunpack.c.l.b16 %v4302
      %v4598 = vunpack.c.l.b16 %v4303
      %v4599 = vunpack.c.l.b16 %v4304
      %v4600 = vunpack.c.l.b16 %v4305
      %v4601 = vunpack.c.l.b16 %v4306
      %v4602 = vunpack.c.l.b16 %v4307
      %v4603 = vunpack.c.l.b16 %v4308
      %v4604 = vunpack.c.l.b16 %v4309
      %v4605 = vunpack.c.l.b16 %v4310
      %v4606 = vunpack.c.l.b16 %v4311
      %v4607 = vunpack.c.l.b16 %v4312
      %v4608 = vunpack.c.l.b16 %v4313
      %v4609 = vunpack.c.l.b16 %v4314
      %v4610 = vunpack.c.l.b16 %v4315
      %v4611 = vunpack.c.l.b16 %v4316
      %v4612 = vunpack.c.l.b16 %v4317
      %v4613 = vunpack.c.l.b16 %v4318
      %v4614 = vunpack.c.l.b16 %v4319
      %v4615 = vunpack.c.l.b16 %v4320
      %v4616 = vunpack.c.l.b16 %v4321
      %v4617 = vunpack.c.l.b16 %v4322
      %v4618 = vunpack.c.l.b16 %v4323
      %v4619 = vunpack.c.l.b16 %v4324
      %v4620 = vunpack.c.l.b16 %v4325
      %v4621 = vunpack.c.l.b16 %v4326
      %v4622 = vunpack.c.l.b16 %v4327
      %v4623 = vunpack.c.l.b16 %v4328
      %v4624 = vunpack.c.l.b16 %v4329
      %v4625 = vunpack.c.l.b16 %v4330
      %v4626 = vunpack.c.l.b16 %v4331
      %v4627 = vunpack.c.l.b16 %v4332
      %v4628 = vunpack.c.l.b16 %v4333
      %v4629 = vunpack.c.l.b16 %v4334
      %v4630 = vunpack.c.l.b16 %v4335
      %v4631 = vunpack.c.l.b16 %v4336
      %v4632 = vunpack.c.l.b16 %v4337
      %v4633 = vunpack.c.l.b16 %v4338
      %v4634 = vunpack.c.l.b16 %v4339
      %v4635 = vunpack.c.l.b16 %v4340
      %v4636 = vunpack.c.l.b16 %v4341
      %v4637 = vunpack.c.l.b16 %v4342
      %v4638 = vunpack.c.l.b16 %v4343
      %v4639 = vunpack.c.l.b16 %v4344
      %v4640 = vunpack.c.l.b16 %v4345
      %v4641 = vunpack.c.l.b16 %v4346
      %v4642 = vunpack.c.l.b16 %v4347
      %v4643 = vunpack.c.l.b16 %v4348
      %v4644 = vunpack.c.l.b16 %v4349
      %v4645 = vunpack.c.l.b16 %v4350
      %v4646 = vunpack.c.l.b16 %v4351
      %v4647 = vunpack.c.l.b16 %v4352
      %v4648 = vunpack.c.l.b16 %v4353
      %v4649 = vunpack.c.l.b16 %v4354
      %v4650 = vunpack.c.l.b16 %v4355
      %v4651 = vunpack.c.l.b16 %v4356
      %v4652 = vunpack.c.l.b16 %v4357
      %v4653 = vunpack.c.l.b16 %v4358
      %v4654 = vunpack.c.l.b16 %v4359
      %v4655 = vunpack.c.l.b16 %v4360
      %v4656 = vunpack.c.l.b16 %v4361
      %v4657 = vunpack.c.l.b16 %v4362
      %v4658 = vunpack.c.l.b16 %v4363
      %v4659 = vunpack.c.l.b16 %v4364
      %v4660 = vunpack.c.l.b16 %v4365
      %v4661 = vunpack.c.l.b16 %v4366
      %v4662 = vunpack.c.l.b16 %v4367
      %v4663 = vunpack.c.l.b16 %v4368
      %v4664 = vunpack.c.l.b16 %v4369
      %v4665 = vunpack.c.l.b16 %v4370
      %v4666 = vunpack.c.l.b16 %v4371
      %v4667 = vunpack.c.l.b16 %v4372
      %v4668 = vunpack.c.l.b16 %v4373
      %v4669 = vunpack.c.l.b16 %v4374
      %v4670 = vunpack.c.l.b16 %v4375
      %v4671 = vunpack.c.l.b16 %v4376
      %v4672 = vunpack.c.l.b16 %v4377
      %v4673 = vunpack.c.l.b16 %v4378
      %v4674 = vunpack.c.l.b16 %v4379
      %v4675 = vunpack.c.l.b16 %v4380
      %v4676 = vunpack.c.l.b16 %v4381
      %v4677 = vunpack.c.l.b16 %v4382
      %v4678 = vunpack.c.l.b16 %v4383
      %v4679 = vunpack.c.l.b16 %v4384
      %v4680 = vunpack.c.l.b16 %v4385
      %v4681 = vunpack.c.l.b16 %v4386
      %v4682 = vunpack.c.l.b16 %v4387
      %v4683 = vunpack.c.l.b16 %v4388
      %v4684 = vunpack.c.l.b16 %v4389
      %v4685 = vunpack.c.l.b16 %v4390
      %v4686 = vunpack.c.l.b16 %v4391
      %v4687 = vunpack.c.l.b16 %v4392
      %v4688 = vunpack.c.l.b16 %v4393
      %v4689 = vunpack.c.l.b16 %v4394
      %v4690 = vunpack.c.l.b16 %v4395
      %v4691 = vunpack.c.l.b16 %v4396
      %v4692 = vunpack.c.l.b16 %v4397
      %v4693 = vunpack.c.l.b16 %v4398
      %v4694 = vunpack.c.l.b16 %v4399
      %v4695 = vunpack.c.l.b16 %v4400
      %v4696 = vunpack.c.l.b16 %v4401
      %v4697 = vunpack.c.l.b16 %v4402
      %v4698 = vunpack.c.l.b16 %v4403
      %v4699 = vunpack.c.l.b16 %v4404
      %v4700 = vunpack.c.l.b16 %v4405
      %v4701 = vunpack.c.l.b16 %v4406
      %v4702 = vunpack.c.l.b16 %v4407
      %v4703 = vunpack.c.l.b16 %v4408
      %v4704 = vunpack.c.l.b16 %v4409
      %v4705 = vunpack.c.l.b16 %v4410
      %v4706 = vunpack.c.l.b16 %v4411
      %v4707 = vunpack.c.l.b16 %v4412
      %v4708 = vunpack.c.l.b16 %v4413
      %v4709 = vunpack.c.l.b16 %v4414
      %v4710 = vunpack.c.l.b16 %v4415
      %v4711 = vunpack.c.l.b16 %v4416
      %v4712 = vunpack.c.l.b16 %v4417
      %v4713 = vunpack.c.l.b16 %v4418
      %v4714 = vunpack.c.l.b16 %v4419
      %v4715 = vunpack.c.l.b16 %v4420
      %v4716 = vunpack.c.l.b16 %v4421
      %v4717 = vunpack.c.l.b16 %v4422
      %v4718 = vunpack.c.l.b16 %v4423
      %v4719 = vunpack.c.l.b16 %v4424
      %v4720 = vunpack.c.l.b16 %v4425
      %v4721 = vunpack.c.l.b16 %v4426
      %v4722 = vunpack.c.l.b16 %v4427
      %v4723 = vunpack.c.l.b16 %v4428
      %v4724 = vunpack.c.l.b16 %v4429
      %v4725 = vunpack.c.l.b16 %v4430
      %v4726 = vunpack.c.l.b16 %v4431
      %v4727 = vunpack.c.l.b16 %v4432
      %v4728 = vunpack.c.l.b16 %v4433
      %v4729 = vunpack.c.l.b16 %v4434
      %v4730 = vunpack.c.l.b16 %v4435
      %v4731 = vunpack.c.l.b16 %v4436
      %v4732 = vunpack.c.l.b16 %v4437
      %v4733 = vunpack.c.l.b16 %v4438
      %v4734 = vunpack.c.l.b16 %v4439
      %v4735 = vunpack.c.l.b16 %v4440
      %v4736 = vunpack.c.l.b16 %v4441
      %v4737 = vunpack.c.l.b16 %v4442
      %v4738 = vunpack.c.l.b16 %v4443
      %v4739 = vunpack.c.l.b16 %v4444
      %v4740 = vunpack.c.l.b16 %v4445
      %v4741 = vpack.c.b16 %v4598, %v4597
      %v4742 = vpack.c.b16 %v4600, %v4599
      %v4743 = vpack.c.b16 %v4602, %v4601
      %v4744 = vpack.c.b16 %v4604, %v4603
      %v4745 = vpack.c.b16 %v4606, %v4605
      %v4746 = vpack.c.b16 %v4608, %v4607
      %v4747 = vpack.c.b16 %v4610, %v4609
      %v4748 = vpack.c.b16 %v4612, %v4611
      %v4749 = vpack.c.b16 %v4614, %v4613
      %v4750 = vpack.c.b16 %v4616, %v4615
      %v4751 = vpack.c.b16 %v4618, %v4617
      %v4752 = vpack.c.b16 %v4620, %v4619
      %v4753 = vpack.c.b16 %v4622, %v4621
      %v4754 = vpack.c.b16 %v4624, %v4623
      %v4755 = vpack.c.b16 %v4626, %v4625
      %v4756 = vpack.c.b16 %v4628, %v4627
      %v4757 = vpack.c.b16 %v4630, %v4629
      %v4758 = vpack.c.b16 %v4632, %v4631
      %v4759 = vpack.c.b16 %v4634, %v4633
      %v4760 = vpack.c.b16 %v4636, %v4635
      %v4761 = vpack.c.b16 %v4638, %v4637
      %v4762 = vpack.c.b16 %v4640, %v4639
      %v4763 = vpack.c.b16 %v4642, %v4641
      %v4764 = vpack.c.b16 %v4644, %v4643
      %v4765 = vpack.c.b16 %v4646, %v4645
      %v4766 = vpack.c.b16 %v4648, %v4647
      %v4767 = vpack.c.b16 %v4650, %v4649
      %v4768 = vpack.c.b16 %v4652, %v4651
      %v4769 = vpack.c.b16 %v4654, %v4653
      %v4770 = vpack.c.b16 %v4656, %v4655
      %v4771 = vpack.c.b16 %v4658, %v4657
      %v4772 = vpack.c.b16 %v4660, %v4659
      %v4773 = vpack.c.b16 %v4662, %v4661
      %v4774 = vpack.c.b16 %v4664, %v4663
      %v4775 = vpack.c.b16 %v4666, %v4665
      %v4776 = vpack.c.b16 %v4668, %v4667
      %v4777 = vpack.c.b16 %v4670, %v4669
      %v4778 = vpack.c.b16 %v4672, %v4671
      %v4779 = vpack.c.b16 %v4674, %v4673
      %v4780 = vpack.c.b16 %v4676, %v4675
      %v4781 = vpack.c.b16 %v4678, %v4677
      %v4782 = vpack.c.b16 %v4680, %v4679
      %v4783 = vpack.c.b16 %v4682, %v4681
      %v4784 = vpack.c.b16 %v4684, %v4683
      %v4785 = vpack.c.b16 %v4686, %v4685
      %v4786 = vpack.c.b16 %v4688, %v4687
      %v4787 = vpack.c.b16 %v4690, %v4689
      %v4788 = vpack.c.b16 %v4692, %v4691
      %v4789 = vpack.c.b16 %v4694, %v4693
      %v4790 = vpack.c.b16 %v4696, %v4695
      %v4791 = vpack.c.b16 %v4698, %v4697
      %v4792 = vpack.c.b16 %v4700, %v4699
      %v4793 = vpack.c.b16 %v4702, %v4701
      %v4794 = vpack.c.b16 %v4704, %v4703
      %v4795 = vpack.c.b16 %v4706, %v4705
      %v4796 = vpack.c.b16 %v4708, %v4707
      %v4797 = vpack.c.b16 %v4710, %v4709
      %v4798 = vpack.c.b16 %v4712, %v4711
      %v4799 = vpack.c.b16 %v4714, %v4713
      %v4800 = vpack.c.b16 %v4716, %v4715
      %v4801 = vpack.c.b16 %v4718, %v4717
      %v4802 = vpack.c.b16 %v4720, %v4719
      %v4803 = vpack.c.b16 %v4722, %v4721
      %v4804 = vpack.c.b16 %v4724, %v4723
      %v4805 = vpack.c.b16 %v4726, %v4725
      %v4806 = vpack.c.b16 %v4728, %v4727
      %v4807 = vpack.c.b16 %v4730, %v4729
      %v4808 = vpack.c.b16 %v4732, %v4731
      %v4809 = vpack.c.b16 %v4734, %v4733
      %v4810 = vpack.c.b16 %v4736, %v4735
      %v4811 = vpack.c.b16 %v4738, %v4737
      %v4812 = vpack.c.b16 %v4740, %v4739
      %4885 = vmatprep.subr.bf16.mxu0 0
      %4886 = vmatpush1.bf16.msra.mxu0 %v4741
      %4887 = vmatprep.subr.bf16.mxu0 0
      %4888 = vmatpush1.bf16.msra.mxu0 %v4742
      %4889 = vmatprep.subr.bf16.mxu0 0
      %4890 = vmatpush1.bf16.msra.mxu0 %v4743
      %4891 = vmatprep.subr.bf16.mxu0 0
      %4892 = vmatpush1.bf16.msra.mxu0 %v4744
      %4893 = vmatprep.subr.bf16.mxu0 0
      %4894 = vmatpush1.bf16.msra.mxu0 %v4745
      %4895 = vmatprep.subr.bf16.mxu0 0
      %4896 = vmatpush1.bf16.msra.mxu0 %v4746
      %4897 = vmatprep.subr.bf16.mxu0 0
      %4898 = vmatpush1.bf16.msra.mxu0 %v4747
      %4899 = vmatprep.subr.bf16.mxu0 0
      %4900 = vmatpush1.bf16.msra.mxu0 %v4748
      %4901 = vmatprep.subr.bf16.mxu0 0
      %4902 = vmatpush1.bf16.msra.mxu0 %v4749
      %4903 = vmatprep.subr.bf16.mxu0 0
      %4904 = vmatpush1.bf16.msra.mxu0 %v4750
      %4905 = vmatprep.subr.bf16.mxu0 0
      %4906 = vmatpush1.bf16.msra.mxu0 %v4751
      %4907 = vmatprep.subr.bf16.mxu0 0
      %4908 = vmatpush1.bf16.msra.mxu0 %v4752
      %4909 = vmatprep.subr.bf16.mxu0 0
      %4910 = vmatpush1.bf16.msra.mxu0 %v4753
      %4911 = vmatprep.subr.bf16.mxu0 0
      %4912 = vmatpush1.bf16.msra.mxu0 %v4754
      %4913 = vmatprep.subr.bf16.mxu0 0
      %4914 = vmatpush1.bf16.msra.mxu0 %v4755
      %4915 = vmatprep.subr.bf16.mxu0 0
      %4916 = vmatpush1.bf16.msra.mxu0 %v4756
      %4917 = vmatprep.mubr.bf16.mxu0 %v4213
      %4918 = vmatmul.mubr.bf16.gmra.mrb[0].mxu0 %v4201
      %v4919 = vpop.f32.mrb[0].mxu0
      %v4920 = vadd.f32 %v4451, %v4919
      %v4921 = vpop.f32.mrb[0].mxu0
      %v4922 = vpop.f32.mrb[0].mxu0
      %v4923 = vadd.f32 %v4451, %v4922
      %v4924 = vpop.f32.mrb[0].mxu0
      %4925 = vmatprep.mubr.bf16.mxu0 %v4214
      %4926 = vmatmul.mubr.bf16.gmra.mrb[0].mxu0 %v4202
      %v4927 = vpop.f32.mrb[0].mxu0
      %v4928 = vadd.f32 %v4451, %v4927
      %v4929 = vpop.f32.mrb[0].mxu0
      %v4930 = vpop.f32.mrb[0].mxu0
      %v4931 = vadd.f32 %v4451, %v4930
      %v4932 = vpop.f32.mrb[0].mxu0
      %4933 = vmatprep.mubr.bf16.mxu0 %v4215
      %4934 = vmatmul.mubr.bf16.gmra.mrb[0].mxu0 %v4203
      %v4935 = vpop.f32.mrb[0].mxu0
      %v4936 = vadd.f32 %v4451, %v4935
      %v4937 = vpop.f32.mrb[0].mxu0
      %v4938 = vpop.f32.mrb[0].mxu0
      %v4939 = vadd.f32 %v4451, %v4938
      %v4940 = vpop.f32.mrb[0].mxu0
      %4941 = vmatprep.mubr.bf16.mxu0 %v4216
      %4942 = vmatmul.mubr.bf16.gmra.mrb[0].mxu0 %v4204
      %v4943 = vpop.f32.mrb[0].mxu0
      %v4944 = vadd.f32 %v4451, %v4943
      %v4945 = vpop.f32.mrb[0].mxu0
      %v4946 = vpop.f32.mrb[0].mxu0
      %v4947 = vadd.f32 %v4451, %v4946
      %v4948 = vpop.f32.mrb[0].mxu0
      %4949 = vdwg.mxu0
      %4950 = vmatprep.subr.bf16.mxu0 0
      %4951 = vmatpush1.bf16.msra.mxu0 %v4757
      %4952 = vmatprep.subr.bf16.mxu0 0
      %4953 = vmatpush1.bf16.msra.mxu0 %v4758
      %4954 = vmatprep.subr.bf16.mxu0 0
      %4955 = vmatpush1.bf16.msra.mxu0 %v4759
      %4956 = vmatprep.subr.bf16.mxu0 0
      %4957 = vmatpush1.bf16.msra.mxu0 %v4760
      %4958 = vmatprep.subr.bf16.mxu0 0
      %4959 = vmatpush1.bf16.msra.mxu0 %v4761
      %4960 = vmatprep.subr.bf16.mxu0 0
      %4961 = vmatpush1.bf16.msra.mxu0 %v4762
      %4962 = vmatprep.subr.bf16.mxu0 0
      %4963 = vmatpush1.bf16.msra.mxu0 %v4763
      %4964 = vmatprep.subr.bf16.mxu0 0
      %4965 = vmatpush1.bf16.msra.mxu0 %v4764
      %4966 = vmatprep.subr.bf16.mxu0 0
      %4967 = vmatpush1.bf16.msra.mxu0 %v4765
      %4968 = vmatprep.subr.bf16.mxu0 0
      %4969 = vmatpush1.bf16.msra.mxu0 %v4766
      %4970 = vmatprep.subr.bf16.mxu0 0
      %4971 = vmatpush1.bf16.msra.mxu0 %v4767
      %4972 = vmatprep.subr.bf16.mxu0 0
      %4973 = vmatpush1.bf16.msra.mxu0 %v4768
      %4974 = vmatprep.subr.bf16.mxu0 0
      %4975 = vmatpush1.bf16.msra.mxu0 %v4769
      %4976 = vmatprep.subr.bf16.mxu0 0
      %4977 = vmatpush1.bf16.msra.mxu0 %v4770
      %4978 = vmatprep.subr.bf16.mxu0 0
      %4979 = vmatpush1.bf16.msra.mxu0 %v4771
      %4980 = vmatprep.subr.bf16.mxu0 0
      %4981 = vmatpush1.bf16.msra.mxu0 %v4772
      %4982 = vmatprep.mubr.bf16.mxu0 %v4237
      %4983 = vmatmul.mubr.bf16.gmra.mrb[0].mxu0 %v4225
      %v4984 = vpop.f32.mrb[0].mxu0
      %v4985 = vadd.f32 %v4920, %v4984
      %v4986 = vpop.f32.mrb[0].mxu0
      %v4987 = vpop.f32.mrb[0].mxu0
      %v4988 = vadd.f32 %v4923, %v4987
      %v4989 = vpop.f32.mrb[0].mxu0
      %4990 = vmatprep.mubr.bf16.mxu0 %v4238
      %4991 = vmatmul.mubr.bf16.gmra.mrb[0].mxu0 %v4226
      %v4992 = vpop.f32.mrb[0].mxu0
      %v4993 = vadd.f32 %v4928, %v4992
      %v4994 = vpop.f32.mrb[0].mxu0
      %v4995 = vpop.f32.mrb[0].mxu0
      %v4996 = vadd.f32 %v4931, %v4995
      %v4997 = vpop.f32.mrb[0].mxu0
      %4998 = vmatprep.mubr.bf16.mxu0 %v4239
      %4999 = vmatmul.mubr.bf16.gmra.mrb[0].mxu0 %v4227
      %v5000 = vpop.f32.mrb[0].mxu0
      %v5001 = vadd.f32 %v4936, %v5000
      %v5002 = vpop.f32.mrb[0].mxu0
      %v5003 = vpop.f32.mrb[0].mxu0
      %v5004 = vadd.f32 %v4939, %v5003
      %v5005 = vpop.f32.mrb[0].mxu0
      %5006 = vmatprep.mubr.bf16.mxu0 %v4240
      %5007 = vmatmul.mubr.bf16.gmra.mrb[0].mxu0 %v4228
      %v5008 = vpop.f32.mrb[0].mxu0
      %v5009 = vadd.f32 %v4944, %v5008
      %v5010 = vpop.f32.mrb[0].mxu0
      %v5011 = vpop.f32.mrb[0].mxu0
      %v5012 = vadd.f32 %v4947, %v5011
      %v5013 = vpop.f32.mrb[0].mxu0
      %5014 = vdwg.mxu0
      %5015 = vmatprep.subr.bf16.mxu0 0
      %5016 = vmatpush1.bf16.msra.mxu0 %v4773
      %5017 = vmatprep.subr.bf16.mxu0 0
      %5018 = vmatpush1.bf16.msra.mxu0 %v4774
      %5019 = vmatprep.subr.bf16.mxu0 0
      %5020 = vmatpush1.bf16.msra.mxu0 %v4775
      %5021 = vmatprep.subr.bf16.mxu0 0
      %5022 = vmatpush1.bf16.msra.mxu0 %v4776
      %5023 = vmatprep.subr.bf16.mxu0 0
      %5024 = vmatpush1.bf16.msra.mxu0 %v4777
      %5025 = vmatprep.subr.bf16.mxu0 0
      %5026 = vmatpush1.bf16.msra.mxu0 %v4778
      %5027 = vmatprep.subr.bf16.mxu0 0
      %5028 = vmatpush1.bf16.msra.mxu0 %v4779
      %5029 = vmatprep.subr.bf16.mxu0 0
      %5030 = vmatpush1.bf16.msra.mxu0 %v4780
      %5031 = vmatprep.subr.bf16.mxu0 0
      %5032 = vmatpush1.bf16.msra.mxu0 %v4781
      %5033 = vmatprep.subr.bf16.mxu0 0
      %5034 = vmatpush1.bf16.msra.mxu0 %v4782
      %5035 = vmatprep.subr.bf16.mxu0 0
      %5036 = vmatpush1.bf16.msra.mxu0 %v4783
      %5037 = vmatprep.subr.bf16.mxu0 0
      %5038 = vmatpush1.bf16.msra.mxu0 %v4784
      %5039 = vmatprep.subr.bf16.mxu0 0
      %5040 = vmatpush1.bf16.msra.mxu0 %v4785
      %5041 = vmatprep.subr.bf16.mxu0 0
      %5042 = vmatpush1.bf16.msra.mxu0 %v4786
      %5043 = vmatprep.subr.bf16.mxu0 0
      %5044 = vmatpush1.bf16.msra.mxu0 %v4787
      %5045 = vmatprep.subr.bf16.mxu0 0
      %5046 = vmatpush1.bf16.msra.mxu0 %v4788
      %5047 = vmatprep.mubr.bf16.mxu0 %v4261
      %5048 = vmatmul.mubr.bf16.gmra.mrb[0].mxu0 %v4249
      %v5049 = vpop.f32.mrb[0].mxu0
      %v5050 = vadd.f32 %v4985, %v5049
      %v5051 = vpop.f32.mrb[0].mxu0
      %v5052 = vpop.f32.mrb[0].mxu0
      %v5053 = vadd.f32 %v4988, %v5052
      %v5054 = vpop.f32.mrb[0].mxu0
      %5055 = vmatprep.mubr.bf16.mxu0 %v4262
      %5056 = vmatmul.mubr.bf16.gmra.mrb[0].mxu0 %v4250
      %v5057 = vpop.f32.mrb[0].mxu0
      %v5058 = vadd.f32 %v4993, %v5057
      %v5059 = vpop.f32.mrb[0].mxu0
      %v5060 = vpop.f32.mrb[0].mxu0
      %v5061 = vadd.f32 %v4996, %v5060
      %v5062 = vpop.f32.mrb[0].mxu0
      %5063 = vmatprep.mubr.bf16.mxu0 %v4263
      %5064 = vmatmul.mubr.bf16.gmra.mrb[0].mxu0 %v4251
      %v5065 = vpop.f32.mrb[0].mxu0
      %v5066 = vadd.f32 %v5001, %v5065
      %v5067 = vpop.f32.mrb[0].mxu0
      %v5068 = vpop.f32.mrb[0].mxu0
      %v5069 = vadd.f32 %v5004, %v5068
      %v5070 = vpop.f32.mrb[0].mxu0
      %5071 = vmatprep.mubr.bf16.mxu0 %v4264
      %5072 = vmatmul.mubr.bf16.gmra.mrb[0].mxu0 %v4252
      %v5073 = vpop.f32.mrb[0].mxu0
      %v5074 = vadd.f32 %v5009, %v5073
      %v5075 = vpop.f32.mrb[0].mxu0
      %v5076 = vpop.f32.mrb[0].mxu0
      %v5077 = vadd.f32 %v5012, %v5076
      %v5078 = vpop.f32.mrb[0].mxu0
      %5079 = vdwg.mxu0
      %5080 = vmatprep.subr.bf16.mxu0 0
      %5081 = vmatpush1.bf16.msra.mxu0 %v4789
      %5082 = vmatprep.subr.bf16.mxu0 0
      %5083 = vmatpush1.bf16.msra.mxu0 %v4790
      %5084 = vmatprep.subr.bf16.mxu0 0
      %5085 = vmatpush1.bf16.msra.mxu0 %v4791
      %5086 = vmatprep.subr.bf16.mxu0 0
      %5087 = vmatpush1.bf16.msra.mxu0 %v4792
      %5088 = vmatprep.subr.bf16.mxu0 0
      %5089 = vmatpush1.bf16.msra.mxu0 %v4793
      %5090 = vmatprep.subr.bf16.mxu0 0
      %5091 = vmatpush1.bf16.msra.mxu0 %v4794
      %5092 = vmatprep.subr.bf16.mxu0 0
      %5093 = vmatpush1.bf16.msra.mxu0 %v4795
      %5094 = vmatprep.subr.bf16.mxu0 0
      %5095 = vmatpush1.bf16.msra.mxu0 %v4796
      %5096 = vmatprep.subr.bf16.mxu0 0
      %5097 = vmatpush1.bf16.msra.mxu0 %v4797
      %5098 = vmatprep.subr.bf16.mxu0 0
      %5099 = vmatpush1.bf16.msra.mxu0 %v4798
      %5100 = vmatprep.subr.bf16.mxu0 0
      %5101 = vmatpush1.bf16.msra.mxu0 %v4799
      %5102 = vmatprep.subr.bf16.mxu0 0
      %5103 = vmatpush1.bf16.msra.mxu0 %v4800
      %5104 = vmatprep.subr.bf16.mxu0 0
      %5105 = vmatpush1.bf16.msra.mxu0 %v4801
      %5106 = vmatprep.subr.bf16.mxu0 0
      %5107 = vmatpush1.bf16.msra.mxu0 %v4802
      %5108 = vmatprep.subr.bf16.mxu0 0
      %5109 = vmatpush1.bf16.msra.mxu0 %v4803
      %5110 = vmatprep.subr.bf16.mxu0 0
      %5111 = vmatpush1.bf16.msra.mxu0 %v4804
      %5112 = vmatprep.mubr.bf16.mxu0 %v4286
      %5113 = vmatmul.mubr.bf16.gmra.mrb[0].mxu0 %v4274
      %v5114 = vpop.f32.mrb[0].mxu0
      %v5115 = vadd.f32 %v5050, %v5114
      %v5116 = vpop.f32.mrb[0].mxu0
      %v5117 = vpop.f32.mrb[0].mxu0
      %v5118 = vadd.f32 %v5053, %v5117
      %v5119 = vpop.f32.mrb[0].mxu0
      %5120 = vmatprep.mubr.bf16.mxu0 %v4287
      %5121 = vmatmul.mubr.bf16.gmra.mrb[0].mxu0 %v4275
      %v5122 = vpop.f32.mrb[0].mxu0
      %v5123 = vadd.f32 %v5058, %v5122
      %v5124 = vpop.f32.mrb[0].mxu0
      %v5125 = vpop.f32.mrb[0].mxu0
      %v5126 = vadd.f32 %v5061, %v5125
      %v5127 = vpop.f32.mrb[0].mxu0
      %5128 = vmatprep.mubr.bf16.mxu0 %v4288
      %5129 = vmatmul.mubr.bf16.gmra.mrb[0].mxu0 %v4276
      %v5130 = vpop.f32.mrb[0].mxu0
      %v5131 = vadd.f32 %v5066, %v5130
      %v5132 = vpop.f32.mrb[0].mxu0
      %v5133 = vpop.f32.mrb[0].mxu0
      %v5134 = vadd.f32 %v5069, %v5133
      %v5135 = vpop.f32.mrb[0].mxu0
      %5136 = vmatprep.mubr.bf16.mxu0 %v4289
      %5137 = vmatmul.mubr.bf16.gmra.mrb[0].mxu0 %v4277
      %v5138 = vpop.f32.mrb[0].mxu0
      %v5139 = vadd.f32 %v5074, %v5138
      %v5140 = vpop.f32.mrb[0].mxu0
      %v5141 = vpop.f32.mrb[0].mxu0
      %v5142 = vadd.f32 %v5077, %v5141
      %v5143 = vpop.f32.mrb[0].mxu0
      %5144 = vdwg.mxu0
      %5145 = vmatprep.subr.bf16.mxu0 0
      %5146 = vmatpush1.bf16.msra.mxu0 %v4805
      %5147 = vmatprep.subr.bf16.mxu0 0
      %5148 = vmatpush1.bf16.msra.mxu0 %v4806
      %5149 = vmatprep.subr.bf16.mxu0 0
      %5150 = vmatpush1.bf16.msra.mxu0 %v4807
      %5151 = vmatprep.subr.bf16.mxu0 0
      %5152 = vmatpush1.bf16.msra.mxu0 %v4808
      %5153 = vmatprep.subr.bf16.mxu0 0
      %5154 = vmatpush1.bf16.msra.mxu0 %v4809
      %5155 = vmatprep.subr.bf16.mxu0 0
      %5156 = vmatpush1.bf16.msra.mxu0 %v4810
      %5157 = vmatprep.subr.bf16.mxu0 0
      %5158 = vmatpush1.bf16.msra.mxu0 %v4811
      %5159 = vmatprep.subr.bf16.mxu0 0
      %5160 = vmatpush1.bf16.msra.mxu0 %v4812
      %5161 = vmatprep.subr.bf16.mxu0 0
      %5162 = vmatpush1.bf16.msra.mxu0 0
      %5163 = vmatprep.subr.bf16.mxu0 0
      %5164 = vmatpush1.bf16.msra.mxu0 0
      %5165 = vmatprep.subr.bf16.mxu0 0
      %5166 = vmatpush1.bf16.msra.mxu0 0
      %5167 = vmatprep.subr.bf16.mxu0 0
      %5168 = vmatpush1.bf16.msra.mxu0 0
      %5169 = vmatprep.subr.bf16.mxu0 0
      %5170 = vmatpush1.bf16.msra.mxu0 0
      %5171 = vmatprep.subr.bf16.mxu0 0
      %5172 = vmatpush1.bf16.msra.mxu0 0
      %5173 = vmatprep.subr.bf16.mxu0 0
      %5174 = vmatpush1.bf16.msra.mxu0 0
      %5175 = vmatprep.subr.bf16.mxu0 0
      %5176 = vmatpush1.bf16.msra.mxu0 0
      %5177 = vmatprep.mubr.bf16.mxu0 0
      %5178 = vmatmul.mubr.bf16.gmra.mrb[0].mxu0 %v4298
      %v5179 = vpop.f32.mrb[0].mxu0
      %v5180 = vadd.f32 %v5115, %v5179
      %v5181 = vpop.f32.mrb[0].mxu0
      %v5182 = vpop.f32.mrb[0].mxu0
      %v5183 = vadd.f32 %v5118, %v5182
      %v5184 = vpop.f32.mrb[0].mxu0
      %5185 = vmatprep.mubr.bf16.mxu0 0
      %5186 = vmatmul.mubr.bf16.gmra.mrb[0].mxu0 %v4299
      %v5187 = vpop.f32.mrb[0].mxu0
      %v5188 = vadd.f32 %v5123, %v5187
      %v5189 = vpop.f32.mrb[0].mxu0
      %v5190 = vpop.f32.mrb[0].mxu0
      %v5191 = vadd.f32 %v5126, %v5190
      %v5192 = vpop.f32.mrb[0].mxu0
      %5193 = vmatprep.mubr.bf16.mxu0 0
      %5194 = vmatmul.mubr.bf16.gmra.mrb[0].mxu0 %v4300
      %v5195 = vpop.f32.mrb[0].mxu0
      %v5196 = vadd.f32 %v5131, %v5195
      %v5197 = vpop.f32.mrb[0].mxu0
      %v5198 = vpop.f32.mrb[0].mxu0
      %v5199 = vadd.f32 %v5134, %v5198
      %v5200 = vpop.f32.mrb[0].mxu0
      %5201 = vmatprep.mubr.bf16.mxu0 0
      %5202 = vmatmul.mubr.bf16.gmra.mrb[0].mxu0 %v4301
      %v5203 = vpop.f32.mrb[0].mxu0
      %v5204 = vadd.f32 %v5139, %v5203
      %v5205 = vpop.f32.mrb[0].mxu0
      %v5206 = vpop.f32.mrb[0].mxu0
      %v5207 = vadd.f32 %v5142, %v5206
      %v5208 = vpop.f32.mrb[0].mxu0
      %5209 = vdwg.mxu0
      %v5210 = vadd.f32 %v5180, %v3142
      %v5211 = vadd.f32 %v5183, %v3143
      %v5212 = vadd.f32 %v5188, %v3144
      %v5213 = vadd.f32 %v5191, %v3145
      %v5214 = vadd.f32 %v5196, %v3146
      %v5215 = vadd.f32 %v5199, %v3147
      %v5216 = vadd.f32 %v5204, %v3148
      %v5217 = vadd.f32 %v5207, %v3149
      %v5218 = vmax.f32 %v5210, 0.0
      %v5219 = vmax.f32 %v5211, 0.0
      %v5220 = vmax.f32 %v5212, 0.0
      %v5221 = vmax.f32 %v5213, 0.0
      %v5222 = vmax.f32 %v5214, 0.0
      %v5223 = vmax.f32 %v5215, 0.0
      %v5224 = vmax.f32 %v5216, 0.0
      %v5225 = vmax.f32 %v5217, 0.0
      %5226 = vst [vmem:[%s386] sm:$0xff] %v5218
      %5227 = vst [vmem:[%s386 + $0x8] sm:$0xff] %v5219
      %5228 = vst [vmem:[%s386 + $0x10] sm:$0xff] %v5220
      %5229 = vst [vmem:[%s386 + $0x18] sm:$0xff] %v5221
      %5230 = vst [vmem:[%s386 + $0x20] sm:$0xff] %v5222
      %5231 = vst [vmem:[%s386 + $0x28] sm:$0xff] %v5223
      %5232 = vst [vmem:[%s386 + $0x30] sm:$0xff] %v5224
      %5233 = vst [vmem:[%s386 + $0x38] sm:$0xff] %v5225
      %p5234 = scmp.lt.s32.totalorder %s22, 1
      %s5235 = scalar_select %p5234, %s22, 1
      %s5236 = smul.addr %s5235, 8
      %s5237 = smul.addr %s5236, 8
      %s5238 = scalar_lea.vmem %s11, %s5237
      // Predicated region
      $region65: #{double_res_forward.1} parent=63 // pred_check
        %p5239 = pneg %p276
      $region66: #{double_res_forward.1} parent=63 // pred_check_branch
        %5241 = sbr.rel (%p5239) target = $region68
      $region67: #{double_res_forward.1} parent=63 // pred_region
        _
      $region68: #{double_res_forward.1} parent=63 // pred_fallthru
        _
    $region64: #{double_res_forward.1} parent=5 // pred_fallthru
      _
    %p5242 = scmp.le.s32.totalorder 2, %s17
    // Predicated region
    $region69: #{double_res_forward.1} parent=5 // pred_check
      %p5243 = pneg %p5242
    $region70: #{double_res_forward.1} parent=5 // pred_check_branch
      %5245 = sbr.rel (%p5243) target = $region72
    $region71: #{double_res_forward.1} parent=5 // pred_region
      %s5246 = ssub.s32 %s17, 2
      // Predicated region
      $region73: #{double_res_forward.1} parent=71 // pred_check
        %p5247 = pneg %p282
      $region74: #{double_res_forward.1} parent=71 // pred_check_branch
        %5249 = sbr.rel (%p5247) target = $region76
      $region75: #{double_res_forward.1} parent=71 // pred_region
        %p5250 = scmp.lt.s32.totalorder %s23, 1
        %s5251 = scalar_select %p5250, %s23, 1
        %s5252 = smul.addr %s5251, 8
        %s5253 = smul.addr %s5252, 8
        %s5254 = scalar_lea.vmem %s11, %s5253
      $region76: #{double_res_forward.1} parent=71 // pred_fallthru
        _
    $region72: #{double_res_forward.1} parent=5 // pred_fallthru
      _
  $region6: #{double_res_forward.1} parent=0 // loop_footer
    %s21 = sadd.s32 1, %s17
  $region7: #{double_res_forward.1} parent=0 // loop_footer_branch
    %16 = sbr.rel target = $region3
  $region8: #{double_res_forward.1} parent=0 // loop_exit
    _

</llo_original>
